<compile_context>
chip_gen: v7x
topology: tpu7x:2x2x1
jax: 0.10.0
libtpu: 0.0.40
codegen_flags: <defaults>
</compile_context>

<pallas_src>
import functools

import jax
import jax.numpy as jnp
from jax.experimental import pallas as pl
from jax.experimental.pallas import tpu as pltpu


def _block_kernel(*refs, H, W, Cin, Cout, groups, cpg, gn_eps,
                  has_scale_shift, use_im2col, out_transposed):
    if has_scale_shift:
        (x_ref, w_ref, b_ref, gamma_ref, beta_ref, scale_ref, shift_ref,
         out_ref, xpad_ref) = refs
    else:
        (x_ref, w_ref, b_ref, gamma_ref, beta_ref, out_ref, xpad_ref) = refs
        scale_ref = shift_ref = None

    f32 = jnp.float32
    hw = float(H * W)
    zdt = xpad_ref.dtype

    # ---- zero-padded input tile in VMEM: zero only the 4 border strips ----
    # (interior is fully rewritten every grid step; strips are cheap and this stays correct
    #  when the "parallel" grid axis is sharded across TensorCores).
    xpad_ref[0:1, :, :] = jnp.zeros((1, W + 2, Cin), zdt)
    xpad_ref[H + 1:H + 2, :, :] = jnp.zeros((1, W + 2, Cin), zdt)
    xpad_ref[1:H + 1, 0:1, :] = jnp.zeros((H, 1, Cin), zdt)
    xpad_ref[1:H + 1, W + 1:W + 2, :] = jnp.zeros((H, 1, Cin), zdt)
    xpad_ref[1:H + 1, 1:W + 1, :] = x_ref[0].astype(zdt)

    def tap(kh, kw):  # (H*W, Cin) shifted-input view, straight from the scratch ref
        return xpad_ref[kh:kh + H, kw:kw + W, :].reshape(H * W, Cin)

    # ---- 3x3 conv on the MXU with f32 accumulation ----
    if use_im2col:
        # tiny-channel regime: one (H*W, 9*Cin) patch -> a single matmul
        patch = jnp.concatenate(
            [xpad_ref[kh:kh + H, kw:kw + W, :] for kh in range(3) for kw in range(3)],
            axis=-1).reshape(H * W, 9 * Cin)
        acc = jnp.dot(patch, w_ref[...], preferred_element_type=f32)
    else:
        # large-channel regime: 9 tap-accumulated matmuls (K = Cin), no 9x im2col buffer
        acc = None
        for kh in range(3):
            for kw in range(3):
                t = kh * 3 + kw
                part = jnp.dot(tap(kh, kw), w_ref[t * Cin:(t + 1) * Cin, :],
                               preferred_element_type=f32)
                acc = part if acc is None else acc + part
    # acc: (H*W, Cout) f32, conv bias not yet added.

    # ---- GroupNorm, two-pass (mean, then centered variance) on the resident f32 acc ----
    def group_avg(v):  # (1, Cout) -> per-channel group average, (1, Cout)
        parts = []
        for g in range(groups):
            s = jnp.sum(v[:, g * cpg:(g + 1) * cpg], axis=1, keepdims=True)
            parts.append(jnp.broadcast_to(s, (1, cpg)))
        return jnp.concatenate(parts, axis=1) * (1.0 / (hw * float(cpg)))

    b = b_ref[...]                                        # (1, Cout) conv bias (f32)
    s1 = jnp.sum(acc, axis=0, keepdims=True)              # (1, Cout)
    mean_c = group_avg(s1 + hw * b)                       # group mean of z = acc + bias
    d = acc + (b - mean_c)                                # z - mean   (f32)
    var_c = group_avg(jnp.sum(d * d, axis=0, keepdims=True))
    g_inv = gamma_ref[...] * jax.lax.rsqrt(var_c + gn_eps)

    # fold GN affine + optional (scale+1, shift) into one per-channel multiply-add
    a_c = g_inv
    c_c = beta_ref[...]
    if has_scale_shift:
        sp1 = scale_ref[0]                                # (1, Cout), already (scale + 1)
        a_c = a_c * sp1
        c_c = c_c * sp1 + shift_ref[0]

    y = d * a_c + c_c
    y = y * jax.nn.sigmoid(y)                             # SiLU (f32 epilogue)

    if out_transposed:
        # lane-dense store: minor dim H*W (multiple of 128 in practice) instead of Cout < 128
        out_ref[...] = jnp.transpose(y).reshape(1, Cout, H * W).astype(out_ref.dtype)
    else:
        out_ref[...] = y.reshape(1, H, W, Cout).astype(out_ref.dtype)


def block_forward(x, weight, bias, gamma, beta, scale_shift=None, groups=8):
    """x: (N, Cin, H, W) NCHW; weight: (Cout, Cin, 3, 3) OIHW; returns (N, Cout, H, W)."""
    N, Cin, H, W = x.shape
    Cout = weight.shape[0]
    assert Cout % groups == 0
    cpg = Cout // groups
    f32 = jnp.float32
    has_ss = scale_shift is not None

    # MXU operands stay bf16 when the model runs in bf16 (bf16-native MXU on v6e/v7x);
    # statistics / epilogue are always f32.
    compute_dtype = jnp.bfloat16 if x.dtype == jnp.bfloat16 else jnp.float32
    out_dtype = x.dtype
    cd_size = jnp.dtype(compute_dtype).itemsize
    out_size = jnp.dtype(out_dtype).itemsize

    # --- weight standardization (parameter prep, plain JAX, f32) ---
    eps_ws = 1e-5 if x.dtype == jnp.float32 else 1e-3
    w = weight.astype(f32)
    w_mean = jnp.mean(w, axis=(1, 2, 3), keepdims=True)
    w_var = jnp.mean((w - w_mean) ** 2, axis=(1, 2, 3), keepdims=True)
    w_std = (w - w_mean) * jax.lax.rsqrt(w_var + eps_ws)
    # OIHW -> HWIO -> (9*Cin, Cout); row index = (kh*3 + kw)*Cin + cin (matches tap order)
    w2d = jnp.transpose(w_std, (2, 3, 1, 0)).reshape(9 * Cin, Cout).astype(compute_dtype)

    x_nhwc = jnp.transpose(x, (0, 2, 3, 1)).astype(compute_dtype)
    bias2 = bias.reshape(1, Cout).astype(f32)
    gamma2 = gamma.reshape(1, Cout).astype(f32)
    beta2 = beta.reshape(1, Cout).astype(f32)
    if has_ss:
        s, sh = scale_shift                                   # each (N, Cout, 1, 1)
        sp1_arr = s.reshape(N, 1, Cout).astype(f32) + 1.0     # precompute (scale + 1)
        shift_arr = sh.reshape(N, 1, Cout).astype(f32)

    use_im2col = Cin < 64          # single im2col matmul only in the tiny-channel regime

    # --- scoped-VMEM budget (generation aware; v7x has 64 MiB per TensorCore) ---
    def _rup(a, m):
        return -(-a // m) * m

    cin_p, cout_p = _rup(Cin, 128), _rup(Cout, 128)
    in_blk = H * _rup(W, 8) * cin_p * cd_size
    out_blk = _rup(H * W, 8) * cout_p * out_size
    w_bytes = _rup(9 * Cin, 8) * cout_p * cd_size
    par_bytes = 5 * 8 * cout_p * 4
    xpad_bytes = (H + 2) * _rup(W + 2, 8) * cin_p * cd_size
    tmp_bytes = 4 * H * W * cout_p * 4                        # acc / d / y / y^T (f32)
    if use_im2col:
        tmp_bytes += H * W * _rup(9 * Cin, 128) * cd_size     # materialized patch
    est_bytes = 2 * (in_blk + out_blk) + w_bytes + par_bytes + xpad_bytes + tmp_bytes

    try:
        vmem_cap = int(pltpu.get_tpu_info().vmem_capacity_bytes)
    except Exception:
        vmem_cap = 64 * 1024 * 1024                           # conservative (v7x)
    vmem_ceiling = max(vmem_cap - (8 << 20), 16 << 20)
    cp_kwargs = dict(dimension_semantics=("parallel",))
    if est_bytes > 32 * 1024 * 1024:
        cp_kwargs["vmem_limit_bytes"] = int(min(est_bytes + (4 << 20), vmem_ceiling))
    # TODO(synk): if est_bytes exceeds vmem_ceiling (e.g. 64x64x256 images on v7x's 64 MiB
    # VMEM), switch to H row-tiling with carried per-group statistics (two-pass normalize)
    # instead of whole-image blocks; that also gives v7x's 2nd TensorCore work when N == 1.

    flops = 2 * N * H * W * 9 * Cin * Cout + 10 * N * H * W * Cout
    cost = pl.CostEstimate(
        flops=int(flops),
        transcendentals=int(N * H * W * Cout),
        bytes_accessed=int(N * H * W * Cin * cd_size + 9 * Cin * Cout * cd_size
                           + N * H * W * Cout * out_size))

    def _run(optimized):
        kernel = functools.partial(
            _block_kernel, H=H, W=W, Cin=Cin, Cout=Cout, groups=groups, cpg=cpg,
            gn_eps=1e-5, has_scale_shift=has_ss, use_im2col=use_im2col,
            out_transposed=optimized)

        if optimized:
            # lane-dense output block (minor dim = H*W) -> unmasked stores; also lands
            # directly in NCHW so no XLA transpose is needed on the output.
            out_sds = jax.ShapeDtypeStruct((N, Cout, H * W), out_dtype)
            out_spec = pl.BlockSpec((1, Cout, H * W), lambda n: (n, 0, 0))

            def pspec(shape):  # grid-invariant params: one pipeline buffer is enough
                return pl.BlockSpec(shape, lambda n: (0, 0),
                                    pipeline_mode=pl.Buffered(1))
        else:
            out_sds = jax.ShapeDtypeStruct((N, H, W, Cout), out_dtype)
            out_spec = pl.BlockSpec((1, H, W, Cout), lambda n: (n, 0, 0, 0))

            def pspec(shape):
                return pl.BlockSpec(shape, lambda n: (0, 0))

        in_specs = [pl.BlockSpec((1, H, W, Cin), lambda n: (n, 0, 0, 0)),  # one image
                    pspec((9 * Cin, Cout)),      # standardized conv weights
                    pspec((1, Cout)),            # conv bias
                    pspec((1, Cout)),            # gn gamma
                    pspec((1, Cout))]            # gn beta
        args = [x_nhwc, w2d, bias2, gamma2, beta2]
        if has_ss:
            in_specs += [pl.BlockSpec((1, 1, Cout), lambda n: (n, 0, 0)),
                         pl.BlockSpec((1, 1, Cout), lambda n: (n, 0, 0))]
            args += [sp1_arr, shift_arr]

        out_k = pl.pallas_call(
            kernel,
            out_shape=out_sds,
            grid=(N,),
            in_specs=in_specs,
            out_specs=out_spec,
            scratch_shapes=[pltpu.VMEM((H + 2, W + 2, Cin), compute_dtype)],
            compiler_params=pltpu.CompilerParams(**cp_kwargs),
            cost_estimate=cost,
        )(*args)

        if optimized:
            return out_k.reshape(N, Cout, H, W)               # free reshape, already NCHW
        return jnp.transpose(out_k, (0, 3, 1, 2))             # NHWC -> NCHW

    try:
        return _run(True)
    except Exception:
        # Fallback layout (NHWC output block, default double-buffered params) in case the
        # installed JAX / Mosaic rejects the transposed store or pl.Buffered(1).
        return _run(False)


def block_reference(x, weight, bias, gamma, beta, scale_shift=None, groups=8):
    """Pure-JAX reference matching the PyTorch module semantics (NCHW)."""
    eps_ws = 1e-5 if x.dtype == jnp.float32 else 1e-3
    w = weight
    m = jnp.mean(w, axis=(1, 2, 3), keepdims=True)
    v = jnp.mean((w - m) ** 2, axis=(1, 2, 3), keepdims=True)
    w_std = (w - m) * jax.lax.rsqrt(v + eps_ws)
    y = jax.lax.conv_general_dilated(
        x, w_std, window_strides=(1, 1), padding="SAME",
        dimension_numbers=("NCHW", "OIHW", "NCHW"))
    y = y + bias[None, :, None, None]
    N, C, H, W = y.shape
    cpg = C // groups
    yg = y.reshape(N, groups, cpg, H, W)
    gm = jnp.mean(yg, axis=(2, 3, 4), keepdims=True)
    gv = jnp.mean((yg - gm) ** 2, axis=(2, 3, 4), keepdims=True)
    yn = ((yg - gm) * jax.lax.rsqrt(gv + 1e-5)).reshape(N, C, H, W)
    yn = yn * gamma[None, :, None, None] + beta[None, :, None, None]
    if scale_shift is not None:
        s, sh = scale_shift
        yn = yn * (s + 1.0) + sh
    return yn * jax.nn.sigmoid(yn)


if __name__ == "__main__":
    # Small shapes consistent with Block(dim=4, dim_out=16, groups=8)
    N, Cin, Cout, H, W, groups = 2, 4, 16, 16, 16, 8

    key = jax.random.PRNGKey(0)
    kx, kw_, kb, kg, kbt, ks, ksh = jax.random.split(key, 7)
    x = jax.random.normal(kx, (N, Cin, H, W), jnp.float32)
    weight = 0.5 * jax.random.normal(kw_, (Cout, Cin, 3, 3), jnp.float32)
    bias = 0.1 * jax.random.normal(kb, (Cout,), jnp.float32)
    gamma = 1.0 + 0.1 * jax.random.normal(kg, (Cout,), jnp.float32)
    beta = 0.1 * jax.random.normal(kbt, (Cout,), jnp.float32)
    scale = 0.1 * jax.random.normal(ks, (N, Cout, 1, 1), jnp.float32)
    shift = 0.1 * jax.random.normal(ksh, (N, Cout, 1, 1), jnp.float32)
    scale_shift = (scale, shift)

    # With conditioning (scale_shift provided).
    out = jax.block_until_ready(
        block_forward(x, weight, bias, gamma, beta, scale_shift, groups=groups))
    ref = block_reference(x, weight, bias, gamma, beta, scale_shift, groups=groups)
    assert out.shape == (N, Cout, H, W)
    assert jnp.allclose(out, ref, rtol=1e-4, atol=1e-4), float(jnp.max(jnp.abs(out - ref)))

    # Without conditioning (trace-time specialized kernel, no scale/shift operands).
    out0 = jax.block_until_ready(
        block_forward(x, weight, bias, gamma, beta, None, groups=groups))
    ref0 = block_reference(x, weight, bias, gamma, beta, None, groups=groups)
    assert jnp.allclose(out0, ref0, rtol=1e-4, atol=1e-4), float(jnp.max(jnp.abs(out0 - ref0)))

    print("KERNEL_OK")
</pallas_src>

<mosaic_0001>
module attributes {stable_mosaic.version = 11 : i64} {
  func.func @_block_kernel(%arg0: i32, %arg1: memref<1x16x16x4xf32, #tpu.memory_space<vmem>>, %arg2: memref<36x16xf32, #tpu.memory_space<vmem>>, %arg3: memref<1x16xf32, #tpu.memory_space<vmem>>, %arg4: memref<1x16xf32, #tpu.memory_space<vmem>>, %arg5: memref<1x16xf32, #tpu.memory_space<vmem>>, %arg6: memref<1x1x16xf32, #tpu.memory_space<vmem>>, %arg7: memref<1x1x16xf32, #tpu.memory_space<vmem>>, %arg8: memref<1x16x256xf32, #tpu.memory_space<vmem>>, %arg9: memref<18x18x4xf32, #tpu.memory_space<vmem>>) attributes {dimension_semantics = [#tpu.dimension_semantics<parallel>], iteration_bounds = array<i64: 2>, scalar_prefetch = 0 : i64, scratch_operands = 1 : i64, tpu.core_type = #tpu.core_type<tc>, window_params = [{transform_indices = @transform_0, window_bounds = array<i64: 1, 16, 16, 4>}, {pipeline_mode = #tpu.pipeline_mode<synchronous>, transform_indices = @transform_1, window_bounds = array<i64: 36, 16>}, {pipeline_mode = #tpu.pipeline_mode<synchronous>, transform_indices = @transform_2, window_bounds = array<i64: 1, 16>}, {pipeline_mode = #tpu.pipeline_mode<synchronous>, transform_indices = @transform_3, window_bounds = array<i64: 1, 16>}, {pipeline_mode = #tpu.pipeline_mode<synchronous>, transform_indices = @transform_4, window_bounds = array<i64: 1, 16>}, {transform_indices = @transform_5, window_bounds = array<i64: 1, 1, 16>}, {transform_indices = @transform_6, window_bounds = array<i64: 1, 1, 16>}, {transform_indices = @transform_7, window_bounds = array<i64: 1, 16, 256>}]} {
    %cst = arith.constant 0.000000e+00 : f32
    %0 = vector.broadcast %cst : f32 to vector<1x18x4xf32>
    %c0 = arith.constant 0 : index
    %c0_0 = arith.constant 0 : index
    %c0_1 = arith.constant 0 : index
    %1 = vector.load %arg9[%c0, %c0_0, %c0_1] : memref<18x18x4xf32, #tpu.memory_space<vmem>>, vector<1x18x4xf32>
    tpu.vector_store %arg9[%c0, %c0_0, %c0_1], %0 {strides = array<i32>} : memref<18x18x4xf32, #tpu.memory_space<vmem>>, vector<1x18x4xf32>,
    %cst_2 = arith.constant 0.000000e+00 : f32
    %2 = vector.broadcast %cst_2 : f32 to vector<1x18x4xf32>
    %c17 = arith.constant 17 : index
    %c0_3 = arith.constant 0 : index
    %c0_4 = arith.constant 0 : index
    %3 = vector.load %arg9[%c17, %c0_3, %c0_4] : memref<18x18x4xf32, #tpu.memory_space<vmem>>, vector<1x18x4xf32>
    tpu.vector_store %arg9[%c17, %c0_3, %c0_4], %2 {strides = array<i32>} : memref<18x18x4xf32, #tpu.memory_space<vmem>>, vector<1x18x4xf32>,
    %cst_5 = arith.constant 0.000000e+00 : f32
    %4 = vector.broadcast %cst_5 : f32 to vector<16x1x4xf32>
    %c1 = arith.constant 1 : index
    %c0_6 = arith.constant 0 : index
    %c0_7 = arith.constant 0 : index
    %5 = vector.load %arg9[%c1, %c0_6, %c0_7] : memref<18x18x4xf32, #tpu.memory_space<vmem>>, vector<16x1x4xf32>
    tpu.vector_store %arg9[%c1, %c0_6, %c0_7], %4 {strides = array<i32>} : memref<18x18x4xf32, #tpu.memory_space<vmem>>, vector<16x1x4xf32>,
    %cst_8 = arith.constant 0.000000e+00 : f32
    %6 = vector.broadcast %cst_8 : f32 to vector<16x1x4xf32>
    %c1_9 = arith.constant 1 : index
    %c17_10 = arith.constant 17 : index
    %c0_11 = arith.constant 0 : index
    %7 = vector.load %arg9[%c1_9, %c17_10, %c0_11] : memref<18x18x4xf32, #tpu.memory_space<vmem>>, vector<16x1x4xf32>
    tpu.vector_store %arg9[%c1_9, %c17_10, %c0_11], %6 {strides = array<i32>} : memref<18x18x4xf32, #tpu.memory_space<vmem>>, vector<16x1x4xf32>,
    %c0_12 = arith.constant 0 : index
    %c0_13 = arith.constant 0 : index
    %c0_14 = arith.constant 0 : index
    %c0_15 = arith.constant 0 : index
    %8 = vector.load %arg1[%c0_12, %c0_13, %c0_14, %c0_15] : memref<1x16x16x4xf32, #tpu.memory_space<vmem>>, vector<1x16x16x4xf32>
    %9 = vector.shape_cast %8 : vector<1x16x16x4xf32> to vector<16x16x4xf32>
    %c1_16 = arith.constant 1 : index
    %c1_17 = arith.constant 1 : index
    %c0_18 = arith.constant 0 : index
    %10 = vector.load %arg9[%c1_16, %c1_17, %c0_18] : memref<18x18x4xf32, #tpu.memory_space<vmem>>, vector<16x16x4xf32>
    tpu.vector_store %arg9[%c1_16, %c1_17, %c0_18], %9 {strides = array<i32>} : memref<18x18x4xf32, #tpu.memory_space<vmem>>, vector<16x16x4xf32>,
    %c0_19 = arith.constant 0 : index
    %c0_20 = arith.constant 0 : index
    %c0_21 = arith.constant 0 : index
    %11 = vector.load %arg9[%c0_19, %c0_20, %c0_21] : memref<18x18x4xf32, #tpu.memory_space<vmem>>, vector<16x16x4xf32>
    %c0_22 = arith.constant 0 : index
    %c1_23 = arith.constant 1 : index
    %c0_24 = arith.constant 0 : index
    %12 = vector.load %arg9[%c0_22, %c1_23, %c0_24] : memref<18x18x4xf32, #tpu.memory_space<vmem>>, vector<16x16x4xf32>
    %c0_25 = arith.constant 0 : index
    %c2 = arith.constant 2 : index
    %c0_26 = arith.constant 0 : index
    %13 = vector.load %arg9[%c0_25, %c2, %c0_26] : memref<18x18x4xf32, #tpu.memory_space<vmem>>, vector<16x16x4xf32>
    %c1_27 = arith.constant 1 : index
    %c0_28 = arith.constant 0 : index
    %c0_29 = arith.constant 0 : index
    %14 = vector.load %arg9[%c1_27, %c0_28, %c0_29] : memref<18x18x4xf32, #tpu.memory_space<vmem>>, vector<16x16x4xf32>
    %c1_30 = arith.constant 1 : index
    %c1_31 = arith.constant 1 : index
    %c0_32 = arith.constant 0 : index
    %15 = vector.load %arg9[%c1_30, %c1_31, %c0_32] : memref<18x18x4xf32, #tpu.memory_space<vmem>>, vector<16x16x4xf32>
    %c1_33 = arith.constant 1 : index
    %c2_34 = arith.constant 2 : index
    %c0_35 = arith.constant 0 : index
    %16 = vector.load %arg9[%c1_33, %c2_34, %c0_35] : memref<18x18x4xf32, #tpu.memory_space<vmem>>, vector<16x16x4xf32>
    %c2_36 = arith.constant 2 : index
    %c0_37 = arith.constant 0 : index
    %c0_38 = arith.constant 0 : index
    %17 = vector.load %arg9[%c2_36, %c0_37, %c0_38] : memref<18x18x4xf32, #tpu.memory_space<vmem>>, vector<16x16x4xf32>
    %c2_39 = arith.constant 2 : index
    %c1_40 = arith.constant 1 : index
    %c0_41 = arith.constant 0 : index
    %18 = vector.load %arg9[%c2_39, %c1_40, %c0_41] : memref<18x18x4xf32, #tpu.memory_space<vmem>>, vector<16x16x4xf32>
    %c2_42 = arith.constant 2 : index
    %c2_43 = arith.constant 2 : index
    %c0_44 = arith.constant 0 : index
    %19 = vector.load %arg9[%c2_42, %c2_43, %c0_44] : memref<18x18x4xf32, #tpu.memory_space<vmem>>, vector<16x16x4xf32>
    %20 = tpu.concatenate %11, %12, %13, %14, %15, %16, %17, %18, %19 in 2 : vector<16x16x4xf32>, vector<16x16x4xf32>, vector<16x16x4xf32>, vector<16x16x4xf32>, vector<16x16x4xf32>, vector<16x16x4xf32>, vector<16x16x4xf32>, vector<16x16x4xf32>, vector<16x16x4xf32> -> vector<16x16x36xf32>
    %21 = vector.shape_cast %20 : vector<16x16x36xf32> to vector<256x36xf32>
    %c0_45 = arith.constant 0 : index
    %c0_46 = arith.constant 0 : index
    %22 = vector.load %arg2[%c0_45, %c0_46] : memref<36x16xf32, #tpu.memory_space<vmem>>, vector<36x16xf32>
    %cst_47 = arith.constant dense<0.000000e+00> : vector<256x16xf32>
    %23 = tpu.matmul %21, %22, %cst_47 {dimension_numbers = #tpu.dot_dimension_numbers<[1], [0], [0], [1], [0, 0, 1, 1], [], []>} : vector<256x36xf32>, vector<36x16xf32>, vector<256x16xf32> -> vector<256x16xf32>
    %c0_48 = arith.constant 0 : index
    %c0_49 = arith.constant 0 : index
    %24 = vector.load %arg3[%c0_48, %c0_49] : memref<1x16xf32, #tpu.memory_space<vmem>>, vector<1x16xf32>
    %cst_50 = arith.constant dense<0.000000e+00> : vector<16xf32>
    %25 = vector.multi_reduction <add>, %23, %cst_50 [0] : vector<256x16xf32> to vector<16xf32>
    %26 = vector.shape_cast %25 : vector<16xf32> to vector<1x16xf32>
    %cst_51 = arith.constant 2.560000e+02 : f32
    %27 = vector.broadcast %cst_51 : f32 to vector<1x16xf32>
    %28 = arith.mulf %27, %24 : vector<1x16xf32>
    %29 = arith.addf %26, %28 : vector<1x16xf32>
    %30 = vector.extract_strided_slice %29 {offsets = [0, 0], sizes = [1, 2], strides = [1, 1]} : vector<1x16xf32> to vector<1x2xf32>
    %cst_52 = arith.constant dense<0.000000e+00> : vector<1xf32>
    %31 = vector.multi_reduction <add>, %30, %cst_52 [1] : vector<1x2xf32> to vector<1xf32>
    %32 = vector.shape_cast %31 : vector<1xf32> to vector<1x1xf32>
    %33 = vector.shape_cast %32 : vector<1x1xf32> to vector<1x1xf32>
    %34 = vector.broadcast %33 : vector<1x1xf32> to vector<1x2xf32>
    %35 = vector.extract_strided_slice %29 {offsets = [0, 2], sizes = [1, 2], strides = [1, 1]} : vector<1x16xf32> to vector<1x2xf32>
    %cst_53 = arith.constant dense<0.000000e+00> : vector<1xf32>
    %36 = vector.multi_reduction <add>, %35, %cst_53 [1] : vector<1x2xf32> to vector<1xf32>
    %37 = vector.shape_cast %36 : vector<1xf32> to vector<1x1xf32>
    %38 = vector.shape_cast %37 : vector<1x1xf32> to vector<1x1xf32>
    %39 = vector.broadcast %38 : vector<1x1xf32> to vector<1x2xf32>
    %40 = vector.extract_strided_slice %29 {offsets = [0, 4], sizes = [1, 2], strides = [1, 1]} : vector<1x16xf32> to vector<1x2xf32>
    %cst_54 = arith.constant dense<0.000000e+00> : vector<1xf32>
    %41 = vector.multi_reduction <add>, %40, %cst_54 [1] : vector<1x2xf32> to vector<1xf32>
    %42 = vector.shape_cast %41 : vector<1xf32> to vector<1x1xf32>
    %43 = vector.shape_cast %42 : vector<1x1xf32> to vector<1x1xf32>
    %44 = vector.broadcast %43 : vector<1x1xf32> to vector<1x2xf32>
    %45 = vector.extract_strided_slice %29 {offsets = [0, 6], sizes = [1, 2], strides = [1, 1]} : vector<1x16xf32> to vector<1x2xf32>
    %cst_55 = arith.constant dense<0.000000e+00> : vector<1xf32>
    %46 = vector.multi_reduction <add>, %45, %cst_55 [1] : vector<1x2xf32> to vector<1xf32>
    %47 = vector.shape_cast %46 : vector<1xf32> to vector<1x1xf32>
    %48 = vector.shape_cast %47 : vector<1x1xf32> to vector<1x1xf32>
    %49 = vector.broadcast %48 : vector<1x1xf32> to vector<1x2xf32>
    %50 = vector.extract_strided_slice %29 {offsets = [0, 8], sizes = [1, 2], strides = [1, 1]} : vector<1x16xf32> to vector<1x2xf32>
    %cst_56 = arith.constant dense<0.000000e+00> : vector<1xf32>
    %51 = vector.multi_reduction <add>, %50, %cst_56 [1] : vector<1x2xf32> to vector<1xf32>
    %52 = vector.shape_cast %51 : vector<1xf32> to vector<1x1xf32>
    %53 = vector.shape_cast %52 : vector<1x1xf32> to vector<1x1xf32>
    %54 = vector.broadcast %53 : vector<1x1xf32> to vector<1x2xf32>
    %55 = vector.extract_strided_slice %29 {offsets = [0, 10], sizes = [1, 2], strides = [1, 1]} : vector<1x16xf32> to vector<1x2xf32>
    %cst_57 = arith.constant dense<0.000000e+00> : vector<1xf32>
    %56 = vector.multi_reduction <add>, %55, %cst_57 [1] : vector<1x2xf32> to vector<1xf32>
    %57 = vector.shape_cast %56 : vector<1xf32> to vector<1x1xf32>
    %58 = vector.shape_cast %57 : vector<1x1xf32> to vector<1x1xf32>
    %59 = vector.broadcast %58 : vector<1x1xf32> to vector<1x2xf32>
    %60 = vector.extract_strided_slice %29 {offsets = [0, 12], sizes = [1, 2], strides = [1, 1]} : vector<1x16xf32> to vector<1x2xf32>
    %cst_58 = arith.constant dense<0.000000e+00> : vector<1xf32>
    %61 = vector.multi_reduction <add>, %60, %cst_58 [1] : vector<1x2xf32> to vector<1xf32>
    %62 = vector.shape_cast %61 : vector<1xf32> to vector<1x1xf32>
    %63 = vector.shape_cast %62 : vector<1x1xf32> to vector<1x1xf32>
    %64 = vector.broadcast %63 : vector<1x1xf32> to vector<1x2xf32>
    %65 = vector.extract_strided_slice %29 {offsets = [0, 14], sizes = [1, 2], strides = [1, 1]} : vector<1x16xf32> to vector<1x2xf32>
    %cst_59 = arith.constant dense<0.000000e+00> : vector<1xf32>
    %66 = vector.multi_reduction <add>, %65, %cst_59 [1] : vector<1x2xf32> to vector<1xf32>
    %67 = vector.shape_cast %66 : vector<1xf32> to vector<1x1xf32>
    %68 = vector.shape_cast %67 : vector<1x1xf32> to vector<1x1xf32>
    %69 = vector.broadcast %68 : vector<1x1xf32> to vector<1x2xf32>
    %70 = tpu.concatenate %34, %39, %44, %49, %54, %59, %64, %69 in 1 : vector<1x2xf32>, vector<1x2xf32>, vector<1x2xf32>, vector<1x2xf32>, vector<1x2xf32>, vector<1x2xf32>, vector<1x2xf32>, vector<1x2xf32> -> vector<1x16xf32>
    %cst_60 = arith.constant 0.001953125 : f32
    %71 = vector.broadcast %cst_60 : f32 to vector<1x16xf32>
    %72 = arith.mulf %70, %71 : vector<1x16xf32>
    %73 = arith.subf %24, %72 : vector<1x16xf32>
    %74 = vector.broadcast %73 : vector<1x16xf32> to vector<256x16xf32>
    %75 = arith.addf %23, %74 : vector<256x16xf32>
    %76 = arith.mulf %75, %75 : vector<256x16xf32>
    %cst_61 = arith.constant dense<0.000000e+00> : vector<16xf32>
    %77 = vector.multi_reduction <add>, %76, %cst_61 [0] : vector<256x16xf32> to vector<16xf32>
    %78 = vector.shape_cast %77 : vector<16xf32> to vector<1x16xf32>
    %79 = vector.extract_strided_slice %78 {offsets = [0, 0], sizes = [1, 2], strides = [1, 1]} : vector<1x16xf32> to vector<1x2xf32>
    %cst_62 = arith.constant dense<0.000000e+00> : vector<1xf32>
    %80 = vector.multi_reduction <add>, %79, %cst_62 [1] : vector<1x2xf32> to vector<1xf32>
    %81 = vector.shape_cast %80 : vector<1xf32> to vector<1x1xf32>
    %82 = vector.shape_cast %81 : vector<1x1xf32> to vector<1x1xf32>
    %83 = vector.broadcast %82 : vector<1x1xf32> to vector<1x2xf32>
    %84 = vector.extract_strided_slice %78 {offsets = [0, 2], sizes = [1, 2], strides = [1, 1]} : vector<1x16xf32> to vector<1x2xf32>
    %cst_63 = arith.constant dense<0.000000e+00> : vector<1xf32>
    %85 = vector.multi_reduction <add>, %84, %cst_63 [1] : vector<1x2xf32> to vector<1xf32>
    %86 = vector.shape_cast %85 : vector<1xf32> to vector<1x1xf32>
    %87 = vector.shape_cast %86 : vector<1x1xf32> to vector<1x1xf32>
    %88 = vector.broadcast %87 : vector<1x1xf32> to vector<1x2xf32>
    %89 = vector.extract_strided_slice %78 {offsets = [0, 4], sizes = [1, 2], strides = [1, 1]} : vector<1x16xf32> to vector<1x2xf32>
    %cst_64 = arith.constant dense<0.000000e+00> : vector<1xf32>
    %90 = vector.multi_reduction <add>, %89, %cst_64 [1] : vector<1x2xf32> to vector<1xf32>
    %91 = vector.shape_cast %90 : vector<1xf32> to vector<1x1xf32>
    %92 = vector.shape_cast %91 : vector<1x1xf32> to vector<1x1xf32>
    %93 = vector.broadcast %92 : vector<1x1xf32> to vector<1x2xf32>
    %94 = vector.extract_strided_slice %78 {offsets = [0, 6], sizes = [1, 2], strides = [1, 1]} : vector<1x16xf32> to vector<1x2xf32>
    %cst_65 = arith.constant dense<0.000000e+00> : vector<1xf32>
    %95 = vector.multi_reduction <add>, %94, %cst_65 [1] : vector<1x2xf32> to vector<1xf32>
    %96 = vector.shape_cast %95 : vector<1xf32> to vector<1x1xf32>
    %97 = vector.shape_cast %96 : vector<1x1xf32> to vector<1x1xf32>
    %98 = vector.broadcast %97 : vector<1x1xf32> to vector<1x2xf32>
    %99 = vector.extract_strided_slice %78 {offsets = [0, 8], sizes = [1, 2], strides = [1, 1]} : vector<1x16xf32> to vector<1x2xf32>
    %cst_66 = arith.constant dense<0.000000e+00> : vector<1xf32>
    %100 = vector.multi_reduction <add>, %99, %cst_66 [1] : vector<1x2xf32> to vector<1xf32>
    %101 = vector.shape_cast %100 : vector<1xf32> to vector<1x1xf32>
    %102 = vector.shape_cast %101 : vector<1x1xf32> to vector<1x1xf32>
    %103 = vector.broadcast %102 : vector<1x1xf32> to vector<1x2xf32>
    %104 = vector.extract_strided_slice %78 {offsets = [0, 10], sizes = [1, 2], strides = [1, 1]} : vector<1x16xf32> to vector<1x2xf32>
    %cst_67 = arith.constant dense<0.000000e+00> : vector<1xf32>
    %105 = vector.multi_reduction <add>, %104, %cst_67 [1] : vector<1x2xf32> to vector<1xf32>
    %106 = vector.shape_cast %105 : vector<1xf32> to vector<1x1xf32>
    %107 = vector.shape_cast %106 : vector<1x1xf32> to vector<1x1xf32>
    %108 = vector.broadcast %107 : vector<1x1xf32> to vector<1x2xf32>
    %109 = vector.extract_strided_slice %78 {offsets = [0, 12], sizes = [1, 2], strides = [1, 1]} : vector<1x16xf32> to vector<1x2xf32>
    %cst_68 = arith.constant dense<0.000000e+00> : vector<1xf32>
    %110 = vector.multi_reduction <add>, %109, %cst_68 [1] : vector<1x2xf32> to vector<1xf32>
    %111 = vector.shape_cast %110 : vector<1xf32> to vector<1x1xf32>
    %112 = vector.shape_cast %111 : vector<1x1xf32> to vector<1x1xf32>
    %113 = vector.broadcast %112 : vector<1x1xf32> to vector<1x2xf32>
    %114 = vector.extract_strided_slice %78 {offsets = [0, 14], sizes = [1, 2], strides = [1, 1]} : vector<1x16xf32> to vector<1x2xf32>
    %cst_69 = arith.constant dense<0.000000e+00> : vector<1xf32>
    %115 = vector.multi_reduction <add>, %114, %cst_69 [1] : vector<1x2xf32> to vector<1xf32>
    %116 = vector.shape_cast %115 : vector<1xf32> to vector<1x1xf32>
    %117 = vector.shape_cast %116 : vector<1x1xf32> to vector<1x1xf32>
    %118 = vector.broadcast %117 : vector<1x1xf32> to vector<1x2xf32>
    %119 = tpu.concatenate %83, %88, %93, %98, %103, %108, %113, %118 in 1 : vector<1x2xf32>, vector<1x2xf32>, vector<1x2xf32>, vector<1x2xf32>, vector<1x2xf32>, vector<1x2xf32>, vector<1x2xf32>, vector<1x2xf32> -> vector<1x16xf32>
    %cst_70 = arith.constant 0.001953125 : f32
    %120 = vector.broadcast %cst_70 : f32 to vector<1x16xf32>
    %121 = arith.mulf %119, %120 : vector<1x16xf32>
    %c0_71 = arith.constant 0 : index
    %c0_72 = arith.constant 0 : index
    %122 = vector.load %arg4[%c0_71, %c0_72] : memref<1x16xf32, #tpu.memory_space<vmem>>, vector<1x16xf32>
    %cst_73 = arith.constant 9.99999974E-6 : f32
    %123 = vector.broadcast %cst_73 : f32 to vector<1x16xf32>
    %124 = arith.addf %121, %123 : vector<1x16xf32>
    %125 = math.rsqrt %124 : vector<1x16xf32>
    %126 = arith.mulf %122, %125 : vector<1x16xf32>
    %c0_74 = arith.constant 0 : index
    %c0_75 = arith.constant 0 : index
    %127 = vector.load %arg5[%c0_74, %c0_75] : memref<1x16xf32, #tpu.memory_space<vmem>>, vector<1x16xf32>
    %c0_76 = arith.constant 0 : index
    %c0_77 = arith.constant 0 : index
    %c0_78 = arith.constant 0 : index
    %128 = vector.load %arg6[%c0_76, %c0_77, %c0_78] : memref<1x1x16xf32, #tpu.memory_space<vmem>>, vector<1x1x16xf32>
    %129 = vector.shape_cast %128 : vector<1x1x16xf32> to vector<1x16xf32>
    %130 = arith.mulf %126, %129 : vector<1x16xf32>
    %131 = arith.mulf %127, %129 : vector<1x16xf32>
    %c0_79 = arith.constant 0 : index
    %c0_80 = arith.constant 0 : index
    %c0_81 = arith.constant 0 : index
    %132 = vector.load %arg7[%c0_79, %c0_80, %c0_81] : memref<1x1x16xf32, #tpu.memory_space<vmem>>, vector<1x1x16xf32>
    %133 = vector.shape_cast %132 : vector<1x1x16xf32> to vector<1x16xf32>
    %134 = arith.addf %131, %133 : vector<1x16xf32>
    %135 = vector.broadcast %130 : vector<1x16xf32> to vector<256x16xf32>
    %136 = arith.mulf %75, %135 : vector<256x16xf32>
    %137 = vector.broadcast %134 : vector<1x16xf32> to vector<256x16xf32>
    %138 = arith.addf %136, %137 : vector<256x16xf32>
    %139 = arith.negf %138 : vector<256x16xf32>
    %140 = math.exp %139 : vector<256x16xf32>
    %cst_82 = arith.constant 1.000000e+00 : f32
    %141 = vector.broadcast %cst_82 : f32 to vector<256x16xf32>
    %142 = arith.addf %141, %140 : vector<256x16xf32>
    %143 = arith.divf %141, %142 : vector<256x16xf32>
    %144 = arith.mulf %138, %143 : vector<256x16xf32>
    %145 = tpu.transpose %144, [1, 0] : vector<256x16xf32> -> vector<16x256xf32>
    %146 = vector.shape_cast %145 : vector<16x256xf32> to vector<1x16x256xf32>
    %c0_83 = arith.constant 0 : index
    %c0_84 = arith.constant 0 : index
    %c0_85 = arith.constant 0 : index
    %147 = vector.load %arg8[%c0_83, %c0_84, %c0_85] : memref<1x16x256xf32, #tpu.memory_space<vmem>>, vector<1x16x256xf32>
    tpu.vector_store %arg8[%c0_83, %c0_84, %c0_85], %146 {strides = array<i32>} : memref<1x16x256xf32, #tpu.memory_space<vmem>>, vector<1x16x256xf32>,
    return
  }
  func.func @transform_0(%arg0: i32) -> (i32, i32, i32, i32) {
    %c0_i32 = arith.constant 0 : i32
    %c0_i32_0 = arith.constant 0 : i32
    %c0_i32_1 = arith.constant 0 : i32
    %c0_i32_2 = arith.constant 0 : i32
    return %arg0, %c0_i32, %c0_i32_0, %c0_i32_1 : i32, i32, i32, i32
  }
  func.func @transform_1(%arg0: i32) -> (i32, i32) {
    %c0_i32 = arith.constant 0 : i32
    %c0_i32_0 = arith.constant 0 : i32
    %c0_i32_1 = arith.constant 0 : i32
    return %c0_i32, %c0_i32_0 : i32, i32
  }
  func.func @transform_2(%arg0: i32) -> (i32, i32) {
    %c0_i32 = arith.constant 0 : i32
    %c0_i32_0 = arith.constant 0 : i32
    %c0_i32_1 = arith.constant 0 : i32
    return %c0_i32, %c0_i32_0 : i32, i32
  }
  func.func @transform_3(%arg0: i32) -> (i32, i32) {
    %c0_i32 = arith.constant 0 : i32
    %c0_i32_0 = arith.constant 0 : i32
    %c0_i32_1 = arith.constant 0 : i32
    return %c0_i32, %c0_i32_0 : i32, i32
  }
  func.func @transform_4(%arg0: i32) -> (i32, i32) {
    %c0_i32 = arith.constant 0 : i32
    %c0_i32_0 = arith.constant 0 : i32
    %c0_i32_1 = arith.constant 0 : i32
    return %c0_i32, %c0_i32_0 : i32, i32
  }
  func.func @transform_5(%arg0: i32) -> (i32, i32, i32) {
    %c0_i32 = arith.constant 0 : i32
    %c0_i32_0 = arith.constant 0 : i32
    %c0_i32_1 = arith.constant 0 : i32
    return %arg0, %c0_i32, %c0_i32_0 : i32, i32, i32
  }
  func.func @transform_6(%arg0: i32) -> (i32, i32, i32) {
    %c0_i32 = arith.constant 0 : i32
    %c0_i32_0 = arith.constant 0 : i32
    %c0_i32_1 = arith.constant 0 : i32
    return %arg0, %c0_i32, %c0_i32_0 : i32, i32, i32
  }
  func.func @transform_7(%arg0: i32) -> (i32, i32, i32) {
    %c0_i32 = arith.constant 0 : i32
    %c0_i32_0 = arith.constant 0 : i32
    %c0_i32_1 = arith.constant 0 : i32
    return %arg0, %c0_i32, %c0_i32_0 : i32, i32, i32
  }
}

module attributes {stable_mosaic.version = 11 : i64} {
  func.func @_block_kernel(%arg0: i32, %arg1: memref<1x16x16x4xf32, #tpu.memory_space<vmem>>, %arg2: memref<36x16xf32, #tpu.memory_space<vmem>>, %arg3: memref<1x16xf32, #tpu.memory_space<vmem>>, %arg4: memref<1x16xf32, #tpu.memory_space<vmem>>, %arg5: memref<1x16xf32, #tpu.memory_space<vmem>>, %arg6: memref<1x1x16xf32, #tpu.memory_space<vmem>>, %arg7: memref<1x1x16xf32, #tpu.memory_space<vmem>>, %arg8: memref<1x16x16x16xf32, #tpu.memory_space<vmem>>, %arg9: memref<18x18x4xf32, #tpu.memory_space<vmem>>) attributes {dimension_semantics = [#tpu.dimension_semantics<parallel>], iteration_bounds = array<i64: 2>, scalar_prefetch = 0 : i64, scratch_operands = 1 : i64, tpu.core_type = #tpu.core_type<tc>, window_params = [{transform_indices = @transform_0, window_bounds = array<i64: 1, 16, 16, 4>}, {pipeline_mode = #tpu.pipeline_mode<synchronous>, transform_indices = @transform_1, window_bounds = array<i64: 36, 16>}, {pipeline_mode = #tpu.pipeline_mode<synchronous>, transform_indices = @transform_2, window_bounds = array<i64: 1, 16>}, {pipeline_mode = #tpu.pipeline_mode<synchronous>, transform_indices = @transform_3, window_bounds = array<i64: 1, 16>}, {pipeline_mode = #tpu.pipeline_mode<synchronous>, transform_indices = @transform_4, window_bounds = array<i64: 1, 16>}, {transform_indices = @transform_5, window_bounds = array<i64: 1, 1, 16>}, {transform_indices = @transform_6, window_bounds = array<i64: 1, 1, 16>}, {transform_indices = @transform_7, window_bounds = array<i64: 1, 16, 16, 16>}]} {
    %cst = arith.constant 0.000000e+00 : f32
    %0 = vector.broadcast %cst : f32 to vector<1x18x4xf32>
    %c0 = arith.constant 0 : index
    %c0_0 = arith.constant 0 : index
    %c0_1 = arith.constant 0 : index
    %1 = vector.load %arg9[%c0, %c0_0, %c0_1] : memref<18x18x4xf32, #tpu.memory_space<vmem>>, vector<1x18x4xf32>
    tpu.vector_store %arg9[%c0, %c0_0, %c0_1], %0 {strides = array<i32>} : memref<18x18x4xf32, #tpu.memory_space<vmem>>, vector<1x18x4xf32>,
    %cst_2 = arith.constant 0.000000e+00 : f32
    %2 = vector.broadcast %cst_2 : f32 to vector<1x18x4xf32>
    %c17 = arith.constant 17 : index
    %c0_3 = arith.constant 0 : index
    %c0_4 = arith.constant 0 : index
    %3 = vector.load %arg9[%c17, %c0_3, %c0_4] : memref<18x18x4xf32, #tpu.memory_space<vmem>>, vector<1x18x4xf32>
    tpu.vector_store %arg9[%c17, %c0_3, %c0_4], %2 {strides = array<i32>} : memref<18x18x4xf32, #tpu.memory_space<vmem>>, vector<1x18x4xf32>,
    %cst_5 = arith.constant 0.000000e+00 : f32
    %4 = vector.broadcast %cst_5 : f32 to vector<16x1x4xf32>
    %c1 = arith.constant 1 : index
    %c0_6 = arith.constant 0 : index
    %c0_7 = arith.constant 0 : index
    %5 = vector.load %arg9[%c1, %c0_6, %c0_7] : memref<18x18x4xf32, #tpu.memory_space<vmem>>, vector<16x1x4xf32>
    tpu.vector_store %arg9[%c1, %c0_6, %c0_7], %4 {strides = array<i32>} : memref<18x18x4xf32, #tpu.memory_space<vmem>>, vector<16x1x4xf32>,
    %cst_8 = arith.constant 0.000000e+00 : f32
    %6 = vector.broadcast %cst_8 : f32 to vector<16x1x4xf32>
    %c1_9 = arith.constant 1 : index
    %c17_10 = arith.constant 17 : index
    %c0_11 = arith.constant 0 : index
    %7 = vector.load %arg9[%c1_9, %c17_10, %c0_11] : memref<18x18x4xf32, #tpu.memory_space<vmem>>, vector<16x1x4xf32>
    tpu.vector_store %arg9[%c1_9, %c17_10, %c0_11], %6 {strides = array<i32>} : memref<18x18x4xf32, #tpu.memory_space<vmem>>, vector<16x1x4xf32>,
    %c0_12 = arith.constant 0 : index
    %c0_13 = arith.constant 0 : index
    %c0_14 = arith.constant 0 : index
    %c0_15 = arith.constant 0 : index
    %8 = vector.load %arg1[%c0_12, %c0_13, %c0_14, %c0_15] : memref<1x16x16x4xf32, #tpu.memory_space<vmem>>, vector<1x16x16x4xf32>
    %9 = vector.shape_cast %8 : vector<1x16x16x4xf32> to vector<16x16x4xf32>
    %c1_16 = arith.constant 1 : index
    %c1_17 = arith.constant 1 : index
    %c0_18 = arith.constant 0 : index
    %10 = vector.load %arg9[%c1_16, %c1_17, %c0_18] : memref<18x18x4xf32, #tpu.memory_space<vmem>>, vector<16x16x4xf32>
    tpu.vector_store %arg9[%c1_16, %c1_17, %c0_18], %9 {strides = array<i32>} : memref<18x18x4xf32, #tpu.memory_space<vmem>>, vector<16x16x4xf32>,
    %c0_19 = arith.constant 0 : index
    %c0_20 = arith.constant 0 : index
    %c0_21 = arith.constant 0 : index
    %11 = vector.load %arg9[%c0_19, %c0_20, %c0_21] : memref<18x18x4xf32, #tpu.memory_space<vmem>>, vector<16x16x4xf32>
    %c0_22 = arith.constant 0 : index
    %c1_23 = arith.constant 1 : index
    %c0_24 = arith.constant 0 : index
    %12 = vector.load %arg9[%c0_22, %c1_23, %c0_24] : memref<18x18x4xf32, #tpu.memory_space<vmem>>, vector<16x16x4xf32>
    %c0_25 = arith.constant 0 : index
    %c2 = arith.constant 2 : index
    %c0_26 = arith.constant 0 : index
    %13 = vector.load %arg9[%c0_25, %c2, %c0_26] : memref<18x18x4xf32, #tpu.memory_space<vmem>>, vector<16x16x4xf32>
    %c1_27 = arith.constant 1 : index
    %c0_28 = arith.constant 0 : index
    %c0_29 = arith.constant 0 : index
    %14 = vector.load %arg9[%c1_27, %c0_28, %c0_29] : memref<18x18x4xf32, #tpu.memory_space<vmem>>, vector<16x16x4xf32>
    %c1_30 = arith.constant 1 : index
    %c1_31 = arith.constant 1 : index
    %c0_32 = arith.constant 0 : index
    %15 = vector.load %arg9[%c1_30, %c1_31, %c0_32] : memref<18x18x4xf32, #tpu.memory_space<vmem>>, vector<16x16x4xf32>
    %c1_33 = arith.constant 1 : index
    %c2_34 = arith.constant 2 : index
    %c0_35 = arith.constant 0 : index
    %16 = vector.load %arg9[%c1_33, %c2_34, %c0_35] : memref<18x18x4xf32, #tpu.memory_space<vmem>>, vector<16x16x4xf32>
    %c2_36 = arith.constant 2 : index
    %c0_37 = arith.constant 0 : index
    %c0_38 = arith.constant 0 : index
    %17 = vector.load %arg9[%c2_36, %c0_37, %c0_38] : memref<18x18x4xf32, #tpu.memory_space<vmem>>, vector<16x16x4xf32>
    %c2_39 = arith.constant 2 : index
    %c1_40 = arith.constant 1 : index
    %c0_41 = arith.constant 0 : index
    %18 = vector.load %arg9[%c2_39, %c1_40, %c0_41] : memref<18x18x4xf32, #tpu.memory_space<vmem>>, vector<16x16x4xf32>
    %c2_42 = arith.constant 2 : index
    %c2_43 = arith.constant 2 : index
    %c0_44 = arith.constant 0 : index
    %19 = vector.load %arg9[%c2_42, %c2_43, %c0_44] : memref<18x18x4xf32, #tpu.memory_space<vmem>>, vector<16x16x4xf32>
    %20 = tpu.concatenate %11, %12, %13, %14, %15, %16, %17, %18, %19 in 2 : vector<16x16x4xf32>, vector<16x16x4xf32>, vector<16x16x4xf32>, vector<16x16x4xf32>, vector<16x16x4xf32>, vector<16x16x4xf32>, vector<16x16x4xf32>, vector<16x16x4xf32>, vector<16x16x4xf32> -> vector<16x16x36xf32>
    %21 = vector.shape_cast %20 : vector<16x16x36xf32> to vector<256x36xf32>
    %c0_45 = arith.constant 0 : index
    %c0_46 = arith.constant 0 : index
    %22 = vector.load %arg2[%c0_45, %c0_46] : memref<36x16xf32, #tpu.memory_space<vmem>>, vector<36x16xf32>
    %cst_47 = arith.constant dense<0.000000e+00> : vector<256x16xf32>
    %23 = tpu.matmul %21, %22, %cst_47 {dimension_numbers = #tpu.dot_dimension_numbers<[1], [0], [0], [1], [0, 0, 1, 1], [], []>} : vector<256x36xf32>, vector<36x16xf32>, vector<256x16xf32> -> vector<256x16xf32>
    %c0_48 = arith.constant 0 : index
    %c0_49 = arith.constant 0 : index
    %24 = vector.load %arg3[%c0_48, %c0_49] : memref<1x16xf32, #tpu.memory_space<vmem>>, vector<1x16xf32>
    %cst_50 = arith.constant dense<0.000000e+00> : vector<16xf32>
    %25 = vector.multi_reduction <add>, %23, %cst_50 [0] : vector<256x16xf32> to vector<16xf32>
    %26 = vector.shape_cast %25 : vector<16xf32> to vector<1x16xf32>
    %cst_51 = arith.constant 2.560000e+02 : f32
    %27 = vector.broadcast %cst_51 : f32 to vector<1x16xf32>
    %28 = arith.mulf %27, %24 : vector<1x16xf32>
    %29 = arith.addf %26, %28 : vector<1x16xf32>
    %30 = vector.extract_strided_slice %29 {offsets = [0, 0], sizes = [1, 2], strides = [1, 1]} : vector<1x16xf32> to vector<1x2xf32>
    %cst_52 = arith.constant dense<0.000000e+00> : vector<1xf32>
    %31 = vector.multi_reduction <add>, %30, %cst_52 [1] : vector<1x2xf32> to vector<1xf32>
    %32 = vector.shape_cast %31 : vector<1xf32> to vector<1x1xf32>
    %33 = vector.shape_cast %32 : vector<1x1xf32> to vector<1x1xf32>
    %34 = vector.broadcast %33 : vector<1x1xf32> to vector<1x2xf32>
    %35 = vector.extract_strided_slice %29 {offsets = [0, 2], sizes = [1, 2], strides = [1, 1]} : vector<1x16xf32> to vector<1x2xf32>
    %cst_53 = arith.constant dense<0.000000e+00> : vector<1xf32>
    %36 = vector.multi_reduction <add>, %35, %cst_53 [1] : vector<1x2xf32> to vector<1xf32>
    %37 = vector.shape_cast %36 : vector<1xf32> to vector<1x1xf32>
    %38 = vector.shape_cast %37 : vector<1x1xf32> to vector<1x1xf32>
    %39 = vector.broadcast %38 : vector<1x1xf32> to vector<1x2xf32>
    %40 = vector.extract_strided_slice %29 {offsets = [0, 4], sizes = [1, 2], strides = [1, 1]} : vector<1x16xf32> to vector<1x2xf32>
    %cst_54 = arith.constant dense<0.000000e+00> : vector<1xf32>
    %41 = vector.multi_reduction <add>, %40, %cst_54 [1] : vector<1x2xf32> to vector<1xf32>
    %42 = vector.shape_cast %41 : vector<1xf32> to vector<1x1xf32>
    %43 = vector.shape_cast %42 : vector<1x1xf32> to vector<1x1xf32>
    %44 = vector.broadcast %43 : vector<1x1xf32> to vector<1x2xf32>
    %45 = vector.extract_strided_slice %29 {offsets = [0, 6], sizes = [1, 2], strides = [1, 1]} : vector<1x16xf32> to vector<1x2xf32>
    %cst_55 = arith.constant dense<0.000000e+00> : vector<1xf32>
    %46 = vector.multi_reduction <add>, %45, %cst_55 [1] : vector<1x2xf32> to vector<1xf32>
    %47 = vector.shape_cast %46 : vector<1xf32> to vector<1x1xf32>
    %48 = vector.shape_cast %47 : vector<1x1xf32> to vector<1x1xf32>
    %49 = vector.broadcast %48 : vector<1x1xf32> to vector<1x2xf32>
    %50 = vector.extract_strided_slice %29 {offsets = [0, 8], sizes = [1, 2], strides = [1, 1]} : vector<1x16xf32> to vector<1x2xf32>
    %cst_56 = arith.constant dense<0.000000e+00> : vector<1xf32>
    %51 = vector.multi_reduction <add>, %50, %cst_56 [1] : vector<1x2xf32> to vector<1xf32>
    %52 = vector.shape_cast %51 : vector<1xf32> to vector<1x1xf32>
    %53 = vector.shape_cast %52 : vector<1x1xf32> to vector<1x1xf32>
    %54 = vector.broadcast %53 : vector<1x1xf32> to vector<1x2xf32>
    %55 = vector.extract_strided_slice %29 {offsets = [0, 10], sizes = [1, 2], strides = [1, 1]} : vector<1x16xf32> to vector<1x2xf32>
    %cst_57 = arith.constant dense<0.000000e+00> : vector<1xf32>
    %56 = vector.multi_reduction <add>, %55, %cst_57 [1] : vector<1x2xf32> to vector<1xf32>
    %57 = vector.shape_cast %56 : vector<1xf32> to vector<1x1xf32>
    %58 = vector.shape_cast %57 : vector<1x1xf32> to vector<1x1xf32>
    %59 = vector.broadcast %58 : vector<1x1xf32> to vector<1x2xf32>
    %60 = vector.extract_strided_slice %29 {offsets = [0, 12], sizes = [1, 2], strides = [1, 1]} : vector<1x16xf32> to vector<1x2xf32>
    %cst_58 = arith.constant dense<0.000000e+00> : vector<1xf32>
    %61 = vector.multi_reduction <add>, %60, %cst_58 [1] : vector<1x2xf32> to vector<1xf32>
    %62 = vector.shape_cast %61 : vector<1xf32> to vector<1x1xf32>
    %63 = vector.shape_cast %62 : vector<1x1xf32> to vector<1x1xf32>
    %64 = vector.broadcast %63 : vector<1x1xf32> to vector<1x2xf32>
    %65 = vector.extract_strided_slice %29 {offsets = [0, 14], sizes = [1, 2], strides = [1, 1]} : vector<1x16xf32> to vector<1x2xf32>
    %cst_59 = arith.constant dense<0.000000e+00> : vector<1xf32>
    %66 = vector.multi_reduction <add>, %65, %cst_59 [1] : vector<1x2xf32> to vector<1xf32>
    %67 = vector.shape_cast %66 : vector<1xf32> to vector<1x1xf32>
    %68 = vector.shape_cast %67 : vector<1x1xf32> to vector<1x1xf32>
    %69 = vector.broadcast %68 : vector<1x1xf32> to vector<1x2xf32>
    %70 = tpu.concatenate %34, %39, %44, %49, %54, %59, %64, %69 in 1 : vector<1x2xf32>, vector<1x2xf32>, vector<1x2xf32>, vector<1x2xf32>, vector<1x2xf32>, vector<1x2xf32>, vector<1x2xf32>, vector<1x2xf32> -> vector<1x16xf32>
    %cst_60 = arith.constant 0.001953125 : f32
    %71 = vector.broadcast %cst_60 : f32 to vector<1x16xf32>
    %72 = arith.mulf %70, %71 : vector<1x16xf32>
    %73 = arith.subf %24, %72 : vector<1x16xf32>
    %74 = vector.broadcast %73 : vector<1x16xf32> to vector<256x16xf32>
    %75 = arith.addf %23, %74 : vector<256x16xf32>
    %76 = arith.mulf %75, %75 : vector<256x16xf32>
    %cst_61 = arith.constant dense<0.000000e+00> : vector<16xf32>
    %77 = vector.multi_reduction <add>, %76, %cst_61 [0] : vector<256x16xf32> to vector<16xf32>
    %78 = vector.shape_cast %77 : vector<16xf32> to vector<1x16xf32>
    %79 = vector.extract_strided_slice %78 {offsets = [0, 0], sizes = [1, 2], strides = [1, 1]} : vector<1x16xf32> to vector<1x2xf32>
    %cst_62 = arith.constant dense<0.000000e+00> : vector<1xf32>
    %80 = vector.multi_reduction <add>, %79, %cst_62 [1] : vector<1x2xf32> to vector<1xf32>
    %81 = vector.shape_cast %80 : vector<1xf32> to vector<1x1xf32>
    %82 = vector.shape_cast %81 : vector<1x1xf32> to vector<1x1xf32>
    %83 = vector.broadcast %82 : vector<1x1xf32> to vector<1x2xf32>
    %84 = vector.extract_strided_slice %78 {offsets = [0, 2], sizes = [1, 2], strides = [1, 1]} : vector<1x16xf32> to vector<1x2xf32>
    %cst_63 = arith.constant dense<0.000000e+00> : vector<1xf32>
    %85 = vector.multi_reduction <add>, %84, %cst_63 [1] : vector<1x2xf32> to vector<1xf32>
    %86 = vector.shape_cast %85 : vector<1xf32> to vector<1x1xf32>
    %87 = vector.shape_cast %86 : vector<1x1xf32> to vector<1x1xf32>
    %88 = vector.broadcast %87 : vector<1x1xf32> to vector<1x2xf32>
    %89 = vector.extract_strided_slice %78 {offsets = [0, 4], sizes = [1, 2], strides = [1, 1]} : vector<1x16xf32> to vector<1x2xf32>
    %cst_64 = arith.constant dense<0.000000e+00> : vector<1xf32>
    %90 = vector.multi_reduction <add>, %89, %cst_64 [1] : vector<1x2xf32> to vector<1xf32>
    %91 = vector.shape_cast %90 : vector<1xf32> to vector<1x1xf32>
    %92 = vector.shape_cast %91 : vector<1x1xf32> to vector<1x1xf32>
    %93 = vector.broadcast %92 : vector<1x1xf32> to vector<1x2xf32>
    %94 = vector.extract_strided_slice %78 {offsets = [0, 6], sizes = [1, 2], strides = [1, 1]} : vector<1x16xf32> to vector<1x2xf32>
    %cst_65 = arith.constant dense<0.000000e+00> : vector<1xf32>
    %95 = vector.multi_reduction <add>, %94, %cst_65 [1] : vector<1x2xf32> to vector<1xf32>
    %96 = vector.shape_cast %95 : vector<1xf32> to vector<1x1xf32>
    %97 = vector.shape_cast %96 : vector<1x1xf32> to vector<1x1xf32>
    %98 = vector.broadcast %97 : vector<1x1xf32> to vector<1x2xf32>
    %99 = vector.extract_strided_slice %78 {offsets = [0, 8], sizes = [1, 2], strides = [1, 1]} : vector<1x16xf32> to vector<1x2xf32>
    %cst_66 = arith.constant dense<0.000000e+00> : vector<1xf32>
    %100 = vector.multi_reduction <add>, %99, %cst_66 [1] : vector<1x2xf32> to vector<1xf32>
    %101 = vector.shape_cast %100 : vector<1xf32> to vector<1x1xf32>
    %102 = vector.shape_cast %101 : vector<1x1xf32> to vector<1x1xf32>
    %103 = vector.broadcast %102 : vector<1x1xf32> to vector<1x2xf32>
    %104 = vector.extract_strided_slice %78 {offsets = [0, 10], sizes = [1, 2], strides = [1, 1]} : vector<1x16xf32> to vector<1x2xf32>
    %cst_67 = arith.constant dense<0.000000e+00> : vector<1xf32>
    %105 = vector.multi_reduction <add>, %104, %cst_67 [1] : vector<1x2xf32> to vector<1xf32>
    %106 = vector.shape_cast %105 : vector<1xf32> to vector<1x1xf32>
    %107 = vector.shape_cast %106 : vector<1x1xf32> to vector<1x1xf32>
    %108 = vector.broadcast %107 : vector<1x1xf32> to vector<1x2xf32>
    %109 = vector.extract_strided_slice %78 {offsets = [0, 12], sizes = [1, 2], strides = [1, 1]} : vector<1x16xf32> to vector<1x2xf32>
    %cst_68 = arith.constant dense<0.000000e+00> : vector<1xf32>
    %110 = vector.multi_reduction <add>, %109, %cst_68 [1] : vector<1x2xf32> to vector<1xf32>
    %111 = vector.shape_cast %110 : vector<1xf32> to vector<1x1xf32>
    %112 = vector.shape_cast %111 : vector<1x1xf32> to vector<1x1xf32>
    %113 = vector.broadcast %112 : vector<1x1xf32> to vector<1x2xf32>
    %114 = vector.extract_strided_slice %78 {offsets = [0, 14], sizes = [1, 2], strides = [1, 1]} : vector<1x16xf32> to vector<1x2xf32>
    %cst_69 = arith.constant dense<0.000000e+00> : vector<1xf32>
    %115 = vector.multi_reduction <add>, %114, %cst_69 [1] : vector<1x2xf32> to vector<1xf32>
    %116 = vector.shape_cast %115 : vector<1xf32> to vector<1x1xf32>
    %117 = vector.shape_cast %116 : vector<1x1xf32> to vector<1x1xf32>
    %118 = vector.broadcast %117 : vector<1x1xf32> to vector<1x2xf32>
    %119 = tpu.concatenate %83, %88, %93, %98, %103, %108, %113, %118 in 1 : vector<1x2xf32>, vector<1x2xf32>, vector<1x2xf32>, vector<1x2xf32>, vector<1x2xf32>, vector<1x2xf32>, vector<1x2xf32>, vector<1x2xf32> -> vector<1x16xf32>
    %cst_70 = arith.constant 0.001953125 : f32
    %120 = vector.broadcast %cst_70 : f32 to vector<1x16xf32>
    %121 = arith.mulf %119, %120 : vector<1x16xf32>
    %c0_71 = arith.constant 0 : index
    %c0_72 = arith.constant 0 : index
    %122 = vector.load %arg4[%c0_71, %c0_72] : memref<1x16xf32, #tpu.memory_space<vmem>>, vector<1x16xf32>
    %cst_73 = arith.constant 9.99999974E-6 : f32
    %123 = vector.broadcast %cst_73 : f32 to vector<1x16xf32>
    %124 = arith.addf %121, %123 : vector<1x16xf32>
    %125 = math.rsqrt %124 : vector<1x16xf32>
    %126 = arith.mulf %122, %125 : vector<1x16xf32>
    %c0_74 = arith.constant 0 : index
    %c0_75 = arith.constant 0 : index
    %127 = vector.load %arg5[%c0_74, %c0_75] : memref<1x16xf32, #tpu.memory_space<vmem>>, vector<1x16xf32>
    %c0_76 = arith.constant 0 : index
    %c0_77 = arith.constant 0 : index
    %c0_78 = arith.constant 0 : index
    %128 = vector.load %arg6[%c0_76, %c0_77, %c0_78] : memref<1x1x16xf32, #tpu.memory_space<vmem>>, vector<1x1x16xf32>
    %129 = vector.shape_cast %128 : vector<1x1x16xf32> to vector<1x16xf32>
    %130 = arith.mulf %126, %129 : vector<1x16xf32>
    %131 = arith.mulf %127, %129 : vector<1x16xf32>
    %c0_79 = arith.constant 0 : index
    %c0_80 = arith.constant 0 : index
    %c0_81 = arith.constant 0 : index
    %132 = vector.load %arg7[%c0_79, %c0_80, %c0_81] : memref<1x1x16xf32, #tpu.memory_space<vmem>>, vector<1x1x16xf32>
    %133 = vector.shape_cast %132 : vector<1x1x16xf32> to vector<1x16xf32>
    %134 = arith.addf %131, %133 : vector<1x16xf32>
    %135 = vector.broadcast %130 : vector<1x16xf32> to vector<256x16xf32>
    %136 = arith.mulf %75, %135 : vector<256x16xf32>
    %137 = vector.broadcast %134 : vector<1x16xf32> to vector<256x16xf32>
    %138 = arith.addf %136, %137 : vector<256x16xf32>
    %139 = arith.negf %138 : vector<256x16xf32>
    %140 = math.exp %139 : vector<256x16xf32>
    %cst_82 = arith.constant 1.000000e+00 : f32
    %141 = vector.broadcast %cst_82 : f32 to vector<256x16xf32>
    %142 = arith.addf %141, %140 : vector<256x16xf32>
    %143 = arith.divf %141, %142 : vector<256x16xf32>
    %144 = arith.mulf %138, %143 : vector<256x16xf32>
    %145 = vector.shape_cast %144 : vector<256x16xf32> to vector<1x16x16x16xf32>
    %c0_83 = arith.constant 0 : index
    %c0_84 = arith.constant 0 : index
    %c0_85 = arith.constant 0 : index
    %c0_86 = arith.constant 0 : index
    %146 = vector.load %arg8[%c0_83, %c0_84, %c0_85, %c0_86] : memref<1x16x16x16xf32, #tpu.memory_space<vmem>>, vector<1x16x16x16xf32>
    tpu.vector_store %arg8[%c0_83, %c0_84, %c0_85, %c0_86], %145 {strides = array<i32>} : memref<1x16x16x16xf32, #tpu.memory_space<vmem>>, vector<1x16x16x16xf32>,
    return
  }
  func.func @transform_0(%arg0: i32) -> (i32, i32, i32, i32) {
    %c0_i32 = arith.constant 0 : i32
    %c0_i32_0 = arith.constant 0 : i32
    %c0_i32_1 = arith.constant 0 : i32
    %c0_i32_2 = arith.constant 0 : i32
    return %arg0, %c0_i32, %c0_i32_0, %c0_i32_1 : i32, i32, i32, i32
  }
  func.func @transform_1(%arg0: i32) -> (i32, i32) {
    %c0_i32 = arith.constant 0 : i32
    %c0_i32_0 = arith.constant 0 : i32
    %c0_i32_1 = arith.constant 0 : i32
    return %c0_i32, %c0_i32_0 : i32, i32
  }
  func.func @transform_2(%arg0: i32) -> (i32, i32) {
    %c0_i32 = arith.constant 0 : i32
    %c0_i32_0 = arith.constant 0 : i32
    %c0_i32_1 = arith.constant 0 : i32
    return %c0_i32, %c0_i32_0 : i32, i32
  }
  func.func @transform_3(%arg0: i32) -> (i32, i32) {
    %c0_i32 = arith.constant 0 : i32
    %c0_i32_0 = arith.constant 0 : i32
    %c0_i32_1 = arith.constant 0 : i32
    return %c0_i32, %c0_i32_0 : i32, i32
  }
  func.func @transform_4(%arg0: i32) -> (i32, i32) {
    %c0_i32 = arith.constant 0 : i32
    %c0_i32_0 = arith.constant 0 : i32
    %c0_i32_1 = arith.constant 0 : i32
    return %c0_i32, %c0_i32_0 : i32, i32
  }
  func.func @transform_5(%arg0: i32) -> (i32, i32, i32) {
    %c0_i32 = arith.constant 0 : i32
    %c0_i32_0 = arith.constant 0 : i32
    %c0_i32_1 = arith.constant 0 : i32
    return %arg0, %c0_i32, %c0_i32_0 : i32, i32, i32
  }
  func.func @transform_6(%arg0: i32) -> (i32, i32, i32) {
    %c0_i32 = arith.constant 0 : i32
    %c0_i32_0 = arith.constant 0 : i32
    %c0_i32_1 = arith.constant 0 : i32
    return %arg0, %c0_i32, %c0_i32_0 : i32, i32, i32
  }
  func.func @transform_7(%arg0: i32) -> (i32, i32, i32, i32) {
    %c0_i32 = arith.constant 0 : i32
    %c0_i32_0 = arith.constant 0 : i32
    %c0_i32_1 = arith.constant 0 : i32
    %c0_i32_2 = arith.constant 0 : i32
    return %arg0, %c0_i32, %c0_i32_0, %c0_i32_1 : i32, i32, i32, i32
  }
}

</mosaic_0001>

<llo_original>
// kernel: tpu_custom_call.1
$region0: #{tpu_custom_call.1}
  #allocation0 [shape = 'u32[]', space=smem, size = 0x4, offset = 0x4, fixed_abs, tag = 'smem constant byte address 0x4 - core index']
  #allocation1 [shape = 'u32[144,128]{1,0:T(1,128)}', space=vmem, size = 0x12000, scoped, tag = 'internal scratch']
  #allocation2 [shape = 'f32[18,18,4]{2,1,0:T(8,128)}', space=vmem, size = 0x36000, scoped, tag = 'scratch operand']
  %s0 = inlined_call_operand.vmem [shape: f32[2,16,16,4], index: 0, kind: input, shape index: {}]
  %s1 = inlined_call_operand.vmem [shape: f32[36,16], index: 1, kind: input, shape index: {}]
  %s2 = inlined_call_operand.vmem [shape: f32[1,16], index: 2, kind: input, shape index: {}]
  %s3 = inlined_call_operand.vmem [shape: f32[1,16], index: 3, kind: input, shape index: {}]
  %s4 = inlined_call_operand.vmem [shape: f32[1,16], index: 4, kind: input, shape index: {}]
  %s5 = inlined_call_operand.vmem [shape: f32[2,1,16], index: 5, kind: input, shape index: {}]
  %s6 = inlined_call_operand.vmem [shape: f32[2,1,16], index: 6, kind: input, shape index: {}]
  %s7 = inlined_call_operand.hbm [shape: f32[2,16,256], index: 7, kind: output, shape index: {}]
  %s8 = sld [smem:[#allocation0]]
  $region61: #{tpu_custom_call.1} parent=0
    _
  %s10 = ssub.s32 1, %s8
  %s11 = scalar_select 0, %s10, %s8
  $region1: #{tpu_custom_call.1} parent=0
    #allocation3 [shape = 'u8[32768]{0}', space=vmem, size = 0x8000, scoped, tag = 'output window, operand 0']
    #allocation4 [shape = 's32[2]{0}', space=sflag, size = 0x8, scoped, tag = 'scoped memory for tpu_custom_call.1']
    %12 = vsyncpa [#allocation4], 0
    %s13 = scalar_lea.sflag [#allocation4], 1
    %14 = vsyncpa %s13, 0
    loop: start=0, step=1, limit=4
    $region2: #{tpu_custom_call.1} parent=1 // loop_pre_header
      _
    $region3: #{tpu_custom_call.1} parent=1 // loop_header
      %s16 = sphi 0, %s20
      %p17 = scmp.ge.s32.totalorder %s16, 4
      %s26 = sphi 0, %s28
      %s29 = sphi 0, %s26
      %s30 = sphi 0, %s29
      %s46 = sphi 0, %s30
      %s50 = sphi 0, %s50
      %s52 = sphi 0, %s50
      %s53 = sphi 0, %s52
      %s67 = sphi 0, %s53
      %s71 = sphi 0, %s71
      %s73 = sphi 0, %s71
      %s74 = sphi 0, %s73
      %s88 = sphi 0, %s74
      %s92 = sphi 0, %s92
      %s94 = sphi 0, %s92
      %s95 = sphi 0, %s94
      %s109 = sphi 0, %s95
      %s113 = sphi 0, %s113
      %s115 = sphi 0, %s113
      %s116 = sphi 0, %s115
      %s130 = sphi 0, %s116
      %s136 = sphi 0, %s138
      %s139 = sphi 0, %s136
      %s140 = sphi 0, %s139
      %s156 = sphi 0, %s140
      %s162 = sphi 0, %s164
      %s165 = sphi 0, %s162
      %s166 = sphi 0, %s165
      %s182 = sphi 0, %s166
      %s188 = sphi 0, %s190
      %s191 = sphi 0, %s188
      %s192 = sphi 0, %s191
      %s208 = sphi 0, %s192
    $region4: #{tpu_custom_call.1} parent=1 // loop_header_branch
      %19 = sbr.rel (%p17) target = $region8
    $region5: #{tpu_custom_call.1} parent=1 // loop_body
      %s21 = ssub.s32 %s16, 1
      %s22 = ssub.s32 %s16, 2
      %s23 = sadd.s32 %s16, 1
      %s24 = ssub.s32 %s16, %s23
      %p25 = scmp.eq.s32.totalorder %s24, 0
      %s27 = sadd.s32 %s26, 1
      %s28 = scalar_select %p25, %s26, %s27
      %p31 = pneg %p25
      %p32 = scmp.eq.s32.totalorder %s16, 1
      %p33 = por %p31, %p32
      %p34 = scmp.ne.s32.totalorder %s26, %s29
      %p35 = scmp.eq.s32.totalorder %s16, 0
      %p36 = por %p34, %p35
      %p37 = scmp.ne.s32.totalorder %s26, %s29
      %p38 = scmp.eq.s32.totalorder %s21, 1
      %p39 = por %p37, %p38
      %p40 = scmp.ne.s32.totalorder %s29, %s30
      %p41 = scmp.eq.s32.totalorder %s21, 0
      %p42 = por %p40, %p41
      %p43 = scmp.ne.s32.totalorder %s29, %s30
      %p44 = scmp.eq.s32.totalorder %s22, 1
      %p45 = por %p43, %p44
      %p47 = scmp.ne.s32.totalorder %s30, %s46
      %p48 = scmp.eq.s32.totalorder %s22, 0
      %p49 = por %p47, %p48
      %s51 = sadd.s32 %s50, 1
      %p54 = scmp.eq.s32.totalorder %s16, 1
      %p55 = scmp.ne.s32.totalorder %s50, %s52
      %p56 = scmp.eq.s32.totalorder %s16, 0
      %p57 = por %p55, %p56
      %p58 = scmp.ne.s32.totalorder %s50, %s52
      %p59 = scmp.eq.s32.totalorder %s21, 1
      %p60 = por %p58, %p59
      %p61 = scmp.ne.s32.totalorder %s52, %s53
      %p62 = scmp.eq.s32.totalorder %s21, 0
      %p63 = por %p61, %p62
      %p64 = scmp.ne.s32.totalorder %s52, %s53
      %p65 = scmp.eq.s32.totalorder %s22, 1
      %p66 = por %p64, %p65
      %p68 = scmp.ne.s32.totalorder %s53, %s67
      %p69 = scmp.eq.s32.totalorder %s22, 0
      %p70 = por %p68, %p69
      %s72 = sadd.s32 %s71, 1
      %p75 = scmp.eq.s32.totalorder %s16, 1
      %p76 = scmp.ne.s32.totalorder %s71, %s73
      %p77 = scmp.eq.s32.totalorder %s16, 0
      %p78 = por %p76, %p77
      %p79 = scmp.ne.s32.totalorder %s71, %s73
      %p80 = scmp.eq.s32.totalorder %s21, 1
      %p81 = por %p79, %p80
      %p82 = scmp.ne.s32.totalorder %s73, %s74
      %p83 = scmp.eq.s32.totalorder %s21, 0
      %p84 = por %p82, %p83
      %p85 = scmp.ne.s32.totalorder %s73, %s74
      %p86 = scmp.eq.s32.totalorder %s22, 1
      %p87 = por %p85, %p86
      %p89 = scmp.ne.s32.totalorder %s74, %s88
      %p90 = scmp.eq.s32.totalorder %s22, 0
      %p91 = por %p89, %p90
      %s93 = sadd.s32 %s92, 1
      %p96 = scmp.eq.s32.totalorder %s16, 1
      %p97 = scmp.ne.s32.totalorder %s92, %s94
      %p98 = scmp.eq.s32.totalorder %s16, 0
      %p99 = por %p97, %p98
      %p100 = scmp.ne.s32.totalorder %s92, %s94
      %p101 = scmp.eq.s32.totalorder %s21, 1
      %p102 = por %p100, %p101
      %p103 = scmp.ne.s32.totalorder %s94, %s95
      %p104 = scmp.eq.s32.totalorder %s21, 0
      %p105 = por %p103, %p104
      %p106 = scmp.ne.s32.totalorder %s94, %s95
      %p107 = scmp.eq.s32.totalorder %s22, 1
      %p108 = por %p106, %p107
      %p110 = scmp.ne.s32.totalorder %s95, %s109
      %p111 = scmp.eq.s32.totalorder %s22, 0
      %p112 = por %p110, %p111
      %s114 = sadd.s32 %s113, 1
      %p117 = scmp.eq.s32.totalorder %s16, 1
      %p118 = scmp.ne.s32.totalorder %s113, %s115
      %p119 = scmp.eq.s32.totalorder %s16, 0
      %p120 = por %p118, %p119
      %p121 = scmp.ne.s32.totalorder %s113, %s115
      %p122 = scmp.eq.s32.totalorder %s21, 1
      %p123 = por %p121, %p122
      %p124 = scmp.ne.s32.totalorder %s115, %s116
      %p125 = scmp.eq.s32.totalorder %s21, 0
      %p126 = por %p124, %p125
      %p127 = scmp.ne.s32.totalorder %s115, %s116
      %p128 = scmp.eq.s32.totalorder %s22, 1
      %p129 = por %p127, %p128
      %p131 = scmp.ne.s32.totalorder %s116, %s130
      %p132 = scmp.eq.s32.totalorder %s22, 0
      %p133 = por %p131, %p132
      %s134 = ssub.s32 %s16, %s23
      %p135 = scmp.eq.s32.totalorder %s134, 0
      %s137 = sadd.s32 %s136, 1
      %s138 = scalar_select %p135, %s136, %s137
      %p141 = pneg %p135
      %p142 = scmp.eq.s32.totalorder %s16, 1
      %p143 = por %p141, %p142
      %p144 = scmp.ne.s32.totalorder %s136, %s139
      %p145 = scmp.eq.s32.totalorder %s16, 0
      %p146 = por %p144, %p145
      %p147 = scmp.ne.s32.totalorder %s136, %s139
      %p148 = scmp.eq.s32.totalorder %s21, 1
      %p149 = por %p147, %p148
      %p150 = scmp.ne.s32.totalorder %s139, %s140
      %p151 = scmp.eq.s32.totalorder %s21, 0
      %p152 = por %p150, %p151
      %p153 = scmp.ne.s32.totalorder %s139, %s140
      %p154 = scmp.eq.s32.totalorder %s22, 1
      %p155 = por %p153, %p154
      %p157 = scmp.ne.s32.totalorder %s140, %s156
      %p158 = scmp.eq.s32.totalorder %s22, 0
      %p159 = por %p157, %p158
      %s160 = ssub.s32 %s16, %s23
      %p161 = scmp.eq.s32.totalorder %s160, 0
      %s163 = sadd.s32 %s162, 1
      %s164 = scalar_select %p161, %s162, %s163
      %p167 = pneg %p161
      %p168 = scmp.eq.s32.totalorder %s16, 1
      %p169 = por %p167, %p168
      %p170 = scmp.ne.s32.totalorder %s162, %s165
      %p171 = scmp.eq.s32.totalorder %s16, 0
      %p172 = por %p170, %p171
      %p173 = scmp.ne.s32.totalorder %s162, %s165
      %p174 = scmp.eq.s32.totalorder %s21, 1
      %p175 = por %p173, %p174
      %p176 = scmp.ne.s32.totalorder %s165, %s166
      %p177 = scmp.eq.s32.totalorder %s21, 0
      %p178 = por %p176, %p177
      %p179 = scmp.ne.s32.totalorder %s165, %s166
      %p180 = scmp.eq.s32.totalorder %s22, 1
      %p181 = por %p179, %p180
      %p183 = scmp.ne.s32.totalorder %s166, %s182
      %p184 = scmp.eq.s32.totalorder %s22, 0
      %p185 = por %p183, %p184
      %s186 = ssub.s32 %s16, %s23
      %p187 = scmp.eq.s32.totalorder %s186, 0
      %s189 = sadd.s32 %s188, 1
      %s190 = scalar_select %p187, %s188, %s189
      %p193 = pneg %p187
      %p194 = scmp.eq.s32.totalorder %s16, 1
      %p195 = por %p193, %p194
      %p196 = scmp.ne.s32.totalorder %s188, %s191
      %p197 = scmp.eq.s32.totalorder %s16, 0
      %p198 = por %p196, %p197
      %p199 = scmp.ne.s32.totalorder %s188, %s191
      %p200 = scmp.eq.s32.totalorder %s21, 1
      %p201 = por %p199, %p200
      %p202 = scmp.ne.s32.totalorder %s191, %s192
      %p203 = scmp.eq.s32.totalorder %s21, 0
      %p204 = por %p202, %p203
      %p205 = scmp.ne.s32.totalorder %s191, %s192
      %p206 = scmp.eq.s32.totalorder %s22, 1
      %p207 = por %p205, %p206
      %p209 = scmp.ne.s32.totalorder %s192, %s208
      %p210 = scmp.eq.s32.totalorder %s22, 0
      %p211 = por %p209, %p210
      %p212 = scmp.le.s32.totalorder 1, %s16
      %p213 = scmp.lt.s32.totalorder %s16, 3
      %p214 = pnand %p212, %p213
      %p215 = pneg %p214
      // Predicated region
      $region9: #{tpu_custom_call.1} parent=5 // pred_check
        _
      $region10: #{tpu_custom_call.1} parent=5 // pred_check_branch
        %217 = sbr.rel (%p214) target = $region12
      $region11: #{tpu_custom_call.1} parent=5 // pred_region
        %s218 = ssub.s32 %s16, 1
        // Predicated region
        $region13: #{tpu_custom_call.1} parent=11 // pred_check
          %p219 = pneg %p63
        $region14: #{tpu_custom_call.1} parent=11 // pred_check_branch
          %221 = sbr.rel (%p219) target = $region16
        $region15: #{tpu_custom_call.1} parent=11 // pred_region
          _
        $region16: #{tpu_custom_call.1} parent=11 // pred_fallthru
          _
        // Predicated region
        $region17: #{tpu_custom_call.1} parent=11 // pred_check
          %p222 = pneg %p84
        $region18: #{tpu_custom_call.1} parent=11 // pred_check_branch
          %224 = sbr.rel (%p222) target = $region20
        $region19: #{tpu_custom_call.1} parent=11 // pred_region
          _
        $region20: #{tpu_custom_call.1} parent=11 // pred_fallthru
          _
        // Predicated region
        $region21: #{tpu_custom_call.1} parent=11 // pred_check
          %p225 = pneg %p105
        $region22: #{tpu_custom_call.1} parent=11 // pred_check_branch
          %227 = sbr.rel (%p225) target = $region24
        $region23: #{tpu_custom_call.1} parent=11 // pred_region
          _
        $region24: #{tpu_custom_call.1} parent=11 // pred_fallthru
          _
        // Predicated region
        $region25: #{tpu_custom_call.1} parent=11 // pred_check
          %p228 = pneg %p126
        $region26: #{tpu_custom_call.1} parent=11 // pred_check_branch
          %230 = sbr.rel (%p228) target = $region28
        $region27: #{tpu_custom_call.1} parent=11 // pred_region
          _
        $region28: #{tpu_custom_call.1} parent=11 // pred_fallthru
          _
      $region12: #{tpu_custom_call.1} parent=5 // pred_fallthru
        _
      %p231 = scmp.lt.s32.totalorder %s16, 2
      // Predicated region
      $region29: #{tpu_custom_call.1} parent=5 // pred_check
        %p232 = pneg %p231
      $region30: #{tpu_custom_call.1} parent=5 // pred_check_branch
        %234 = sbr.rel (%p232) target = $region32
      $region31: #{tpu_custom_call.1} parent=5 // pred_region
        // Predicated region
        $region33: #{tpu_custom_call.1} parent=31 // pred_check
          %p235 = pneg %p36
        $region34: #{tpu_custom_call.1} parent=31 // pred_check_branch
          %237 = sbr.rel (%p235) target = $region36
        $region35: #{tpu_custom_call.1} parent=31 // pred_region
          %p238 = scmp.lt.s32.totalorder %s16, 1
          %s239 = scalar_select %p238, %s16, 1
          %s240 = smul.addr %s239, 32
          %s241 = smul.addr %s240, 8
          %s242 = scalar_lea.vmem %s0, %s241
        $region36: #{tpu_custom_call.1} parent=31 // pred_fallthru
          _
        // Predicated region
        $region37: #{tpu_custom_call.1} parent=31 // pred_check
          %p243 = pneg %p146
        $region38: #{tpu_custom_call.1} parent=31 // pred_check_branch
          %245 = sbr.rel (%p243) target = $region40
        $region39: #{tpu_custom_call.1} parent=31 // pred_region
          %p246 = scmp.lt.s32.totalorder %s16, 1
          %s247 = scalar_select %p246, %s16, 1
          %s248 = scalar_lea.vmem %s5, %s247
        $region40: #{tpu_custom_call.1} parent=31 // pred_fallthru
          _
        // Predicated region
        $region41: #{tpu_custom_call.1} parent=31 // pred_check
          %p249 = pneg %p172
        $region42: #{tpu_custom_call.1} parent=31 // pred_check_branch
          %251 = sbr.rel (%p249) target = $region44
        $region43: #{tpu_custom_call.1} parent=31 // pred_region
          %p252 = scmp.lt.s32.totalorder %s16, 1
          %s253 = scalar_select %p252, %s16, 1
          %s254 = scalar_lea.vmem %s6, %s253
        $region44: #{tpu_custom_call.1} parent=31 // pred_fallthru
          _
      $region32: #{tpu_custom_call.1} parent=5 // pred_fallthru
        _
      %p255 = scmp.le.s32.totalorder 1, %s16
      %p256 = scmp.lt.s32.totalorder %s16, 3
      %p257 = pnand %p255, %p256
      %p258 = pneg %p257
      // Predicated region
      $region45: #{tpu_custom_call.1} parent=5 // pred_check
        _
      $region46: #{tpu_custom_call.1} parent=5 // pred_check_branch
        %260 = sbr.rel (%p257) target = $region48
      $region47: #{tpu_custom_call.1} parent=5 // pred_region
        %s261 = ssub.s32 %s16, 1
        %p262 = scmp.lt.s32.totalorder %s21, 1
        %s263 = scalar_select %p262, %s21, 1
        %s264 = smul.addr %s263, 32
        %s265 = smul.addr %s264, 8
        %s266 = scalar_lea.vmem %s0, %s265
        %p267 = pneg %p42
        %p268 = pneg %p39
        %p269 = pneg %p63
        %p270 = pneg %p60
        %p271 = pneg %p84
        %p272 = pneg %p81
        %p273 = pneg %p105
        %p274 = pneg %p102
        %p275 = pneg %p126
        %p276 = pneg %p123
        %p277 = scmp.lt.s32.totalorder %s21, 1
        %s278 = scalar_select %p277, %s21, 1
        %s279 = scalar_lea.vmem %s5, %s278
        %p280 = pneg %p152
        %p281 = pneg %p149
        %p282 = scmp.lt.s32.totalorder %s21, 1
        %s283 = scalar_select %p282, %s21, 1
        %s284 = scalar_lea.vmem %s6, %s283
        %p285 = pneg %p178
        %p286 = pneg %p175
        %p287 = pneg %p204
        %p288 = pneg %p201
        %s289 = sand.u32 %s191, 1
        %s290 = scalar_lea.sflag [#allocation4], %s289
        %s291 = sand.u32 %s191, 1
        %s292 = smul.addr %s291, 32
        %s293 = scalar_lea.vmem [#allocation3], %s292
        %p294 = scmp.lt.s32.totalorder %s21, 1
        %s295 = scalar_select %p294, %s21, 1
        %s296 = smul.addr %s295, 32
        %s297 = smul.addr %s296, 8
        %s298 = scalar_lea.vmem %s0, %s297
        %p299 = scmp.lt.s32.totalorder %s21, 1
        %s300 = scalar_select %p299, %s21, 1
        %s301 = scalar_lea.vmem %s5, %s300
        %p302 = scmp.lt.s32.totalorder %s21, 1
        %s303 = scalar_select %p302, %s21, 1
        %s304 = scalar_lea.vmem %s6, %s303
        %vm305 = vcmask 31744
        %306 = vst.msk [vmem:[#allocation2] sm:$0xff] %vm305, 0.0
        %307 = vst.msk [vmem:[#allocation2 + $0x8] sm:$0xff] %vm305, 0.0
        %vm308 = vcmask 25600
        %309 = vst.msk [vmem:[#allocation2 + $0x10] sm:$0x3] %vm308, 0.0
        %s310 = scalar_lea.vmem [#allocation2], 408
        %311 = vst.msk [vmem:[%s310] sm:$0xff] %vm305, 0.0
        %312 = vst.msk [vmem:[%s310 + $0x8] sm:$0xff] %vm305, 0.0
        %313 = vst.msk [vmem:[%s310 + $0x10] sm:$0x3] %vm308, 0.0
        %s314 = scalar_lea.vmem [#allocation2], 24
        %vm315 = vcmask 24576
        %316 = vst.msk [vmem:[%s314] sm:$0x1] %vm315, 0.0
        %317 = vst.msk [vmem:[%s314 + $0x18] sm:$0x1] %vm315, 0.0
        %318 = vst.msk [vmem:[%s314 + $0x30] sm:$0x1] %vm315, 0.0
        %319 = vst.msk [vmem:[%s314 + $0x48] sm:$0x1] %vm315, 0.0
        %320 = vst.msk [vmem:[%s314 + $0x60] sm:$0x1] %vm315, 0.0
        %321 = vst.msk [vmem:[%s314 + $0x78] sm:$0x1] %vm315, 0.0
        %322 = vst.msk [vmem:[%s314 + $0x90] sm:$0x1] %vm315, 0.0
        %323 = vst.msk [vmem:[%s314 + $0xa8] sm:$0x1] %vm315, 0.0
        %324 = vst.msk [vmem:[%s314 + $0xc0] sm:$0x1] %vm315, 0.0
        %325 = vst.msk [vmem:[%s314 + $0xd8] sm:$0x1] %vm315, 0.0
        %326 = vst.msk [vmem:[%s314 + $0xf0] sm:$0x1] %vm315, 0.0
        %327 = vst.msk [vmem:[%s314 + $0x108] sm:$0x1] %vm315, 0.0
        %328 = vst.msk [vmem:[%s314 + $0x120] sm:$0x1] %vm315, 0.0
        %329 = vst.msk [vmem:[%s314 + $0x138] sm:$0x1] %vm315, 0.0
        %330 = vst.msk [vmem:[%s314 + $0x150] sm:$0x1] %vm315, 0.0
        %331 = vst.msk [vmem:[%s314 + $0x168] sm:$0x1] %vm315, 0.0
        %332 = vst.msk [vmem:[%s314 + $0x11] sm:$0x1] %vm315, 0.0
        %333 = vst.msk [vmem:[%s314 + $0x29] sm:$0x1] %vm315, 0.0
        %334 = vst.msk [vmem:[%s314 + $0x41] sm:$0x1] %vm315, 0.0
        %335 = vst.msk [vmem:[%s314 + $0x59] sm:$0x1] %vm315, 0.0
        %336 = vst.msk [vmem:[%s314 + $0x71] sm:$0x1] %vm315, 0.0
        %337 = vst.msk [vmem:[%s314 + $0x89] sm:$0x1] %vm315, 0.0
        %338 = vst.msk [vmem:[%s314 + $0xa1] sm:$0x1] %vm315, 0.0
        %339 = vst.msk [vmem:[%s314 + $0xb9] sm:$0x1] %vm315, 0.0
        %340 = vst.msk [vmem:[%s314 + $0xd1] sm:$0x1] %vm315, 0.0
        %341 = vst.msk [vmem:[%s314 + $0xe9] sm:$0x1] %vm315, 0.0
        %342 = vst.msk [vmem:[%s314 + $0x101] sm:$0x1] %vm315, 0.0
        %343 = vst.msk [vmem:[%s314 + $0x119] sm:$0x1] %vm315, 0.0
        %344 = vst.msk [vmem:[%s314 + $0x131] sm:$0x1] %vm315, 0.0
        %345 = vst.msk [vmem:[%s314 + $0x149] sm:$0x1] %vm315, 0.0
        %346 = vst.msk [vmem:[%s314 + $0x161] sm:$0x1] %vm315, 0.0
        %347 = vst.msk [vmem:[%s314 + $0x179] sm:$0x1] %vm315, 0.0
        %v348 = vld [vmem:[%s298] sm:$0xff]
        %v349 = vld [vmem:[%s298 + $0x8] sm:$0xff]
        %v350 = vld [vmem:[%s298 + $0x10] sm:$0xff]
        %v351 = vld [vmem:[%s298 + $0x18] sm:$0xff]
        %v352 = vld [vmem:[%s298 + $0x20] sm:$0xff]
        %v353 = vld [vmem:[%s298 + $0x28] sm:$0xff]
        %v354 = vld [vmem:[%s298 + $0x30] sm:$0xff]
        %v355 = vld [vmem:[%s298 + $0x38] sm:$0xff]
        %v356 = vld [vmem:[%s298 + $0x40] sm:$0xff]
        %v357 = vld [vmem:[%s298 + $0x48] sm:$0xff]
        %v358 = vld [vmem:[%s298 + $0x50] sm:$0xff]
        %v359 = vld [vmem:[%s298 + $0x58] sm:$0xff]
        %v360 = vld [vmem:[%s298 + $0x60] sm:$0xff]
        %v361 = vld [vmem:[%s298 + $0x68] sm:$0xff]
        %v362 = vld [vmem:[%s298 + $0x70] sm:$0xff]
        %v363 = vld [vmem:[%s298 + $0x78] sm:$0xff]
        %v364 = vld [vmem:[%s298 + $0x80] sm:$0xff]
        %v365 = vld [vmem:[%s298 + $0x88] sm:$0xff]
        %v366 = vld [vmem:[%s298 + $0x90] sm:$0xff]
        %v367 = vld [vmem:[%s298 + $0x98] sm:$0xff]
        %v368 = vld [vmem:[%s298 + $0xa0] sm:$0xff]
        %v369 = vld [vmem:[%s298 + $0xa8] sm:$0xff]
        %v370 = vld [vmem:[%s298 + $0xb0] sm:$0xff]
        %v371 = vld [vmem:[%s298 + $0xb8] sm:$0xff]
        %v372 = vld [vmem:[%s298 + $0xc0] sm:$0xff]
        %v373 = vld [vmem:[%s298 + $0xc8] sm:$0xff]
        %v374 = vld [vmem:[%s298 + $0xd0] sm:$0xff]
        %v375 = vld [vmem:[%s298 + $0xd8] sm:$0xff]
        %v376 = vld [vmem:[%s298 + $0xe0] sm:$0xff]
        %v377 = vld [vmem:[%s298 + $0xe8] sm:$0xff]
        %v378 = vld [vmem:[%s298 + $0xf0] sm:$0xff]
        %v379 = vld [vmem:[%s298 + $0xf8] sm:$0xff]
        %380 = vst.msk [vmem:[%s314 + $0x1] sm:$0xff] %vm305, %v348
        %381 = vst.msk [vmem:[%s314 + $0x9] sm:$0xff] %vm305, %v349
        %382 = vst.msk [vmem:[%s314 + $0x19] sm:$0xff] %vm305, %v350
        %383 = vst.msk [vmem:[%s314 + $0x21] sm:$0xff] %vm305, %v351
        %384 = vst.msk [vmem:[%s314 + $0x31] sm:$0xff] %vm305, %v352
        %385 = vst.msk [vmem:[%s314 + $0x39] sm:$0xff] %vm305, %v353
        %386 = vst.msk [vmem:[%s314 + $0x49] sm:$0xff] %vm305, %v354
        %387 = vst.msk [vmem:[%s314 + $0x51] sm:$0xff] %vm305, %v355
        %388 = vst.msk [vmem:[%s314 + $0x61] sm:$0xff] %vm305, %v356
        %389 = vst.msk [vmem:[%s314 + $0x69] sm:$0xff] %vm305, %v357
        %390 = vst.msk [vmem:[%s314 + $0x79] sm:$0xff] %vm305, %v358
        %391 = vst.msk [vmem:[%s314 + $0x81] sm:$0xff] %vm305, %v359
        %392 = vst.msk [vmem:[%s314 + $0x91] sm:$0xff] %vm305, %v360
        %393 = vst.msk [vmem:[%s314 + $0x99] sm:$0xff] %vm305, %v361
        %394 = vst.msk [vmem:[%s314 + $0xa9] sm:$0xff] %vm305, %v362
        %395 = vst.msk [vmem:[%s314 + $0xb1] sm:$0xff] %vm305, %v363
        %396 = vst.msk [vmem:[%s314 + $0xc1] sm:$0xff] %vm305, %v364
        %397 = vst.msk [vmem:[%s314 + $0xc9] sm:$0xff] %vm305, %v365
        %398 = vst.msk [vmem:[%s314 + $0xd9] sm:$0xff] %vm305, %v366
        %399 = vst.msk [vmem:[%s314 + $0xe1] sm:$0xff] %vm305, %v367
        %400 = vst.msk [vmem:[%s314 + $0xf1] sm:$0xff] %vm305, %v368
        %401 = vst.msk [vmem:[%s314 + $0xf9] sm:$0xff] %vm305, %v369
        %402 = vst.msk [vmem:[%s314 + $0x109] sm:$0xff] %vm305, %v370
        %403 = vst.msk [vmem:[%s314 + $0x111] sm:$0xff] %vm305, %v371
        %404 = vst.msk [vmem:[%s314 + $0x121] sm:$0xff] %vm305, %v372
        %405 = vst.msk [vmem:[%s314 + $0x129] sm:$0xff] %vm305, %v373
        %406 = vst.msk [vmem:[%s314 + $0x139] sm:$0xff] %vm305, %v374
        %407 = vst.msk [vmem:[%s314 + $0x141] sm:$0xff] %vm305, %v375
        %408 = vst.msk [vmem:[%s314 + $0x151] sm:$0xff] %vm305, %v376
        %409 = vst.msk [vmem:[%s314 + $0x159] sm:$0xff] %vm305, %v377
        %410 = vst.msk [vmem:[%s314 + $0x169] sm:$0xff] %vm305, %v378
        %411 = vst.msk [vmem:[%s314 + $0x171] sm:$0xff] %vm305, %v379
        %v412 = vld [vmem:[#allocation2] sm:$0xff]
        %v413 = vld [vmem:[#allocation2 + $0x8] sm:$0xff]
        %v414 = vld [vmem:[#allocation2 + $0x18] sm:$0xff]
        %v415 = vld [vmem:[#allocation2 + $0x20] sm:$0xff]
        %v416 = vld [vmem:[#allocation2 + $0x30] sm:$0xff]
        %v417 = vld [vmem:[#allocation2 + $0x38] sm:$0xff]
        %v418 = vld [vmem:[#allocation2 + $0x48] sm:$0xff]
        %v419 = vld [vmem:[#allocation2 + $0x50] sm:$0xff]
        %v420 = vld [vmem:[#allocation2 + $0x60] sm:$0xff]
        %v421 = vld [vmem:[#allocation2 + $0x68] sm:$0xff]
        %v422 = vld [vmem:[#allocation2 + $0x78] sm:$0xff]
        %v423 = vld [vmem:[#allocation2 + $0x80] sm:$0xff]
        %v424 = vld [vmem:[#allocation2 + $0x90] sm:$0xff]
        %v425 = vld [vmem:[#allocation2 + $0x98] sm:$0xff]
        %v426 = vld [vmem:[#allocation2 + $0xa8] sm:$0xff]
        %v427 = vld [vmem:[#allocation2 + $0xb0] sm:$0xff]
        %v428 = vld [vmem:[#allocation2 + $0xc0] sm:$0xff]
        %v429 = vld [vmem:[#allocation2 + $0xc8] sm:$0xff]
        %v430 = vld [vmem:[#allocation2 + $0xd8] sm:$0xff]
        %v431 = vld [vmem:[#allocation2 + $0xe0] sm:$0xff]
        %v432 = vld [vmem:[#allocation2 + $0xf0] sm:$0xff]
        %v433 = vld [vmem:[#allocation2 + $0xf8] sm:$0xff]
        %v434 = vld [vmem:[#allocation2 + $0x108] sm:$0xff]
        %v435 = vld [vmem:[#allocation2 + $0x110] sm:$0xff]
        %v436 = vld [vmem:[#allocation2 + $0x120] sm:$0xff]
        %v437 = vld [vmem:[#allocation2 + $0x128] sm:$0xff]
        %v438 = vld [vmem:[#allocation2 + $0x138] sm:$0xff]
        %v439 = vld [vmem:[#allocation2 + $0x140] sm:$0xff]
        %v440 = vld [vmem:[#allocation2 + $0x150] sm:$0xff]
        %v441 = vld [vmem:[#allocation2 + $0x158] sm:$0xff]
        %v442 = vld [vmem:[#allocation2 + $0x168] sm:$0xff]
        %v443 = vld [vmem:[#allocation2 + $0x170] sm:$0xff]
        %v444 = vld [vmem:[#allocation2 + $0x1] sm:$0xff]
        %v445 = vld [vmem:[#allocation2 + $0x9] sm:$0xff]
        %v446 = vld [vmem:[#allocation2 + $0x19] sm:$0xff]
        %v447 = vld [vmem:[#allocation2 + $0x21] sm:$0xff]
        %v448 = vld [vmem:[#allocation2 + $0x31] sm:$0xff]
        %v449 = vld [vmem:[#allocation2 + $0x39] sm:$0xff]
        %v450 = vld [vmem:[#allocation2 + $0x49] sm:$0xff]
        %v451 = vld [vmem:[#allocation2 + $0x51] sm:$0xff]
        %v452 = vld [vmem:[#allocation2 + $0x61] sm:$0xff]
        %v453 = vld [vmem:[#allocation2 + $0x69] sm:$0xff]
        %v454 = vld [vmem:[#allocation2 + $0x79] sm:$0xff]
        %v455 = vld [vmem:[#allocation2 + $0x81] sm:$0xff]
        %v456 = vld [vmem:[#allocation2 + $0x91] sm:$0xff]
        %v457 = vld [vmem:[#allocation2 + $0x99] sm:$0xff]
        %v458 = vld [vmem:[#allocation2 + $0xa9] sm:$0xff]
        %v459 = vld [vmem:[#allocation2 + $0xb1] sm:$0xff]
        %v460 = vld [vmem:[#allocation2 + $0xc1] sm:$0xff]
        %v461 = vld [vmem:[#allocation2 + $0xc9] sm:$0xff]
        %v462 = vld [vmem:[#allocation2 + $0xd9] sm:$0xff]
        %v463 = vld [vmem:[#allocation2 + $0xe1] sm:$0xff]
        %v464 = vld [vmem:[#allocation2 + $0xf1] sm:$0xff]
        %v465 = vld [vmem:[#allocation2 + $0xf9] sm:$0xff]
        %v466 = vld [vmem:[#allocation2 + $0x109] sm:$0xff]
        %v467 = vld [vmem:[#allocation2 + $0x111] sm:$0xff]
        %v468 = vld [vmem:[#allocation2 + $0x121] sm:$0xff]
        %v469 = vld [vmem:[#allocation2 + $0x129] sm:$0xff]
        %v470 = vld [vmem:[#allocation2 + $0x139] sm:$0xff]
        %v471 = vld [vmem:[#allocation2 + $0x141] sm:$0xff]
        %v472 = vld [vmem:[#allocation2 + $0x151] sm:$0xff]
        %v473 = vld [vmem:[#allocation2 + $0x159] sm:$0xff]
        %v474 = vld [vmem:[#allocation2 + $0x169] sm:$0xff]
        %v475 = vld [vmem:[#allocation2 + $0x171] sm:$0xff]
        %v476 = vld [vmem:[#allocation2 + $0x2] sm:$0xff]
        %v477 = vld [vmem:[#allocation2 + $0xa] sm:$0xff]
        %v478 = vld [vmem:[#allocation2 + $0x1a] sm:$0xff]
        %v479 = vld [vmem:[#allocation2 + $0x22] sm:$0xff]
        %v480 = vld [vmem:[#allocation2 + $0x32] sm:$0xff]
        %v481 = vld [vmem:[#allocation2 + $0x3a] sm:$0xff]
        %v482 = vld [vmem:[#allocation2 + $0x4a] sm:$0xff]
        %v483 = vld [vmem:[#allocation2 + $0x52] sm:$0xff]
        %v484 = vld [vmem:[#allocation2 + $0x62] sm:$0xff]
        %v485 = vld [vmem:[#allocation2 + $0x6a] sm:$0xff]
        %v486 = vld [vmem:[#allocation2 + $0x7a] sm:$0xff]
        %v487 = vld [vmem:[#allocation2 + $0x82] sm:$0xff]
        %v488 = vld [vmem:[#allocation2 + $0x92] sm:$0xff]
        %v489 = vld [vmem:[#allocation2 + $0x9a] sm:$0xff]
        %v490 = vld [vmem:[#allocation2 + $0xaa] sm:$0xff]
        %v491 = vld [vmem:[#allocation2 + $0xb2] sm:$0xff]
        %v492 = vld [vmem:[#allocation2 + $0xc2] sm:$0xff]
        %v493 = vld [vmem:[#allocation2 + $0xca] sm:$0xff]
        %v494 = vld [vmem:[#allocation2 + $0xda] sm:$0xff]
        %v495 = vld [vmem:[#allocation2 + $0xe2] sm:$0xff]
        %v496 = vld [vmem:[#allocation2 + $0xf2] sm:$0xff]
        %v497 = vld [vmem:[#allocation2 + $0xfa] sm:$0xff]
        %v498 = vld [vmem:[#allocation2 + $0x10a] sm:$0xff]
        %v499 = vld [vmem:[#allocation2 + $0x112] sm:$0xff]
        %v500 = vld [vmem:[#allocation2 + $0x122] sm:$0xff]
        %v501 = vld [vmem:[#allocation2 + $0x12a] sm:$0xff]
        %v502 = vld [vmem:[#allocation2 + $0x13a] sm:$0xff]
        %v503 = vld [vmem:[#allocation2 + $0x142] sm:$0xff]
        %v504 = vld [vmem:[#allocation2 + $0x152] sm:$0xff]
        %v505 = vld [vmem:[#allocation2 + $0x15a] sm:$0xff]
        %v506 = vld [vmem:[#allocation2 + $0x16a] sm:$0xff]
        %v507 = vld [vmem:[#allocation2 + $0x172] sm:$0xff]
        %v508 = vld [vmem:[%s314] sm:$0xff]
        %v509 = vld [vmem:[%s314 + $0x8] sm:$0xff]
        %v510 = vld [vmem:[%s314 + $0x18] sm:$0xff]
        %v511 = vld [vmem:[%s314 + $0x20] sm:$0xff]
        %v512 = vld [vmem:[%s314 + $0x30] sm:$0xff]
        %v513 = vld [vmem:[%s314 + $0x38] sm:$0xff]
        %v514 = vld [vmem:[%s314 + $0x48] sm:$0xff]
        %v515 = vld [vmem:[%s314 + $0x50] sm:$0xff]
        %v516 = vld [vmem:[%s314 + $0x60] sm:$0xff]
        %v517 = vld [vmem:[%s314 + $0x68] sm:$0xff]
        %v518 = vld [vmem:[%s314 + $0x78] sm:$0xff]
        %v519 = vld [vmem:[%s314 + $0x80] sm:$0xff]
        %v520 = vld [vmem:[%s314 + $0x90] sm:$0xff]
        %v521 = vld [vmem:[%s314 + $0x98] sm:$0xff]
        %v522 = vld [vmem:[%s314 + $0xa8] sm:$0xff]
        %v523 = vld [vmem:[%s314 + $0xb0] sm:$0xff]
        %v524 = vld [vmem:[%s314 + $0xc0] sm:$0xff]
        %v525 = vld [vmem:[%s314 + $0xc8] sm:$0xff]
        %v526 = vld [vmem:[%s314 + $0xd8] sm:$0xff]
        %v527 = vld [vmem:[%s314 + $0xe0] sm:$0xff]
        %v528 = vld [vmem:[%s314 + $0xf0] sm:$0xff]
        %v529 = vld [vmem:[%s314 + $0xf8] sm:$0xff]
        %v530 = vld [vmem:[%s314 + $0x108] sm:$0xff]
        %v531 = vld [vmem:[%s314 + $0x110] sm:$0xff]
        %v532 = vld [vmem:[%s314 + $0x120] sm:$0xff]
        %v533 = vld [vmem:[%s314 + $0x128] sm:$0xff]
        %v534 = vld [vmem:[%s314 + $0x138] sm:$0xff]
        %v535 = vld [vmem:[%s314 + $0x140] sm:$0xff]
        %v536 = vld [vmem:[%s314 + $0x150] sm:$0xff]
        %v537 = vld [vmem:[%s314 + $0x158] sm:$0xff]
        %v538 = vld [vmem:[%s314 + $0x168] sm:$0xff]
        %v539 = vld [vmem:[%s314 + $0x170] sm:$0xff]
        %v540 = vld [vmem:[%s314 + $0x1] sm:$0xff]
        %v541 = vld [vmem:[%s314 + $0x9] sm:$0xff]
        %v542 = vld [vmem:[%s314 + $0x19] sm:$0xff]
        %v543 = vld [vmem:[%s314 + $0x21] sm:$0xff]
        %v544 = vld [vmem:[%s314 + $0x31] sm:$0xff]
        %v545 = vld [vmem:[%s314 + $0x39] sm:$0xff]
        %v546 = vld [vmem:[%s314 + $0x49] sm:$0xff]
        %v547 = vld [vmem:[%s314 + $0x51] sm:$0xff]
        %v548 = vld [vmem:[%s314 + $0x61] sm:$0xff]
        %v549 = vld [vmem:[%s314 + $0x69] sm:$0xff]
        %v550 = vld [vmem:[%s314 + $0x79] sm:$0xff]
        %v551 = vld [vmem:[%s314 + $0x81] sm:$0xff]
        %v552 = vld [vmem:[%s314 + $0x91] sm:$0xff]
        %v553 = vld [vmem:[%s314 + $0x99] sm:$0xff]
        %v554 = vld [vmem:[%s314 + $0xa9] sm:$0xff]
        %v555 = vld [vmem:[%s314 + $0xb1] sm:$0xff]
        %v556 = vld [vmem:[%s314 + $0xc1] sm:$0xff]
        %v557 = vld [vmem:[%s314 + $0xc9] sm:$0xff]
        %v558 = vld [vmem:[%s314 + $0xd9] sm:$0xff]
        %v559 = vld [vmem:[%s314 + $0xe1] sm:$0xff]
        %v560 = vld [vmem:[%s314 + $0xf1] sm:$0xff]
        %v561 = vld [vmem:[%s314 + $0xf9] sm:$0xff]
        %v562 = vld [vmem:[%s314 + $0x109] sm:$0xff]
        %v563 = vld [vmem:[%s314 + $0x111] sm:$0xff]
        %v564 = vld [vmem:[%s314 + $0x121] sm:$0xff]
        %v565 = vld [vmem:[%s314 + $0x129] sm:$0xff]
        %v566 = vld [vmem:[%s314 + $0x139] sm:$0xff]
        %v567 = vld [vmem:[%s314 + $0x141] sm:$0xff]
        %v568 = vld [vmem:[%s314 + $0x151] sm:$0xff]
        %v569 = vld [vmem:[%s314 + $0x159] sm:$0xff]
        %v570 = vld [vmem:[%s314 + $0x169] sm:$0xff]
        %v571 = vld [vmem:[%s314 + $0x171] sm:$0xff]
        %v572 = vld [vmem:[%s314 + $0x2] sm:$0xff]
        %v573 = vld [vmem:[%s314 + $0xa] sm:$0xff]
        %v574 = vld [vmem:[%s314 + $0x1a] sm:$0xff]
        %v575 = vld [vmem:[%s314 + $0x22] sm:$0xff]
        %v576 = vld [vmem:[%s314 + $0x32] sm:$0xff]
        %v577 = vld [vmem:[%s314 + $0x3a] sm:$0xff]
        %v578 = vld [vmem:[%s314 + $0x4a] sm:$0xff]
        %v579 = vld [vmem:[%s314 + $0x52] sm:$0xff]
        %v580 = vld [vmem:[%s314 + $0x62] sm:$0xff]
        %v581 = vld [vmem:[%s314 + $0x6a] sm:$0xff]
        %v582 = vld [vmem:[%s314 + $0x7a] sm:$0xff]
        %v583 = vld [vmem:[%s314 + $0x82] sm:$0xff]
        %v584 = vld [vmem:[%s314 + $0x92] sm:$0xff]
        %v585 = vld [vmem:[%s314 + $0x9a] sm:$0xff]
        %v586 = vld [vmem:[%s314 + $0xaa] sm:$0xff]
        %v587 = vld [vmem:[%s314 + $0xb2] sm:$0xff]
        %v588 = vld [vmem:[%s314 + $0xc2] sm:$0xff]
        %v589 = vld [vmem:[%s314 + $0xca] sm:$0xff]
        %v590 = vld [vmem:[%s314 + $0xda] sm:$0xff]
        %v591 = vld [vmem:[%s314 + $0xe2] sm:$0xff]
        %v592 = vld [vmem:[%s314 + $0xf2] sm:$0xff]
        %v593 = vld [vmem:[%s314 + $0xfa] sm:$0xff]
        %v594 = vld [vmem:[%s314 + $0x10a] sm:$0xff]
        %v595 = vld [vmem:[%s314 + $0x112] sm:$0xff]
        %v596 = vld [vmem:[%s314 + $0x122] sm:$0xff]
        %v597 = vld [vmem:[%s314 + $0x12a] sm:$0xff]
        %v598 = vld [vmem:[%s314 + $0x13a] sm:$0xff]
        %v599 = vld [vmem:[%s314 + $0x142] sm:$0xff]
        %v600 = vld [vmem:[%s314 + $0x152] sm:$0xff]
        %v601 = vld [vmem:[%s314 + $0x15a] sm:$0xff]
        %v602 = vld [vmem:[%s314 + $0x16a] sm:$0xff]
        %v603 = vld [vmem:[%s314 + $0x172] sm:$0xff]
        %s604 = scalar_lea.vmem [#allocation2], 48
        %v605 = vld [vmem:[%s604] sm:$0xff]
        %v606 = vld [vmem:[%s604 + $0x8] sm:$0xff]
        %v607 = vld [vmem:[%s604 + $0x18] sm:$0xff]
        %v608 = vld [vmem:[%s604 + $0x20] sm:$0xff]
        %v609 = vld [vmem:[%s604 + $0x30] sm:$0xff]
        %v610 = vld [vmem:[%s604 + $0x38] sm:$0xff]
        %v611 = vld [vmem:[%s604 + $0x48] sm:$0xff]
        %v612 = vld [vmem:[%s604 + $0x50] sm:$0xff]
        %v613 = vld [vmem:[%s604 + $0x60] sm:$0xff]
        %v614 = vld [vmem:[%s604 + $0x68] sm:$0xff]
        %v615 = vld [vmem:[%s604 + $0x78] sm:$0xff]
        %v616 = vld [vmem:[%s604 + $0x80] sm:$0xff]
        %v617 = vld [vmem:[%s604 + $0x90] sm:$0xff]
        %v618 = vld [vmem:[%s604 + $0x98] sm:$0xff]
        %v619 = vld [vmem:[%s604 + $0xa8] sm:$0xff]
        %v620 = vld [vmem:[%s604 + $0xb0] sm:$0xff]
        %v621 = vld [vmem:[%s604 + $0xc0] sm:$0xff]
        %v622 = vld [vmem:[%s604 + $0xc8] sm:$0xff]
        %v623 = vld [vmem:[%s604 + $0xd8] sm:$0xff]
        %v624 = vld [vmem:[%s604 + $0xe0] sm:$0xff]
        %v625 = vld [vmem:[%s604 + $0xf0] sm:$0xff]
        %v626 = vld [vmem:[%s604 + $0xf8] sm:$0xff]
        %v627 = vld [vmem:[%s604 + $0x108] sm:$0xff]
        %v628 = vld [vmem:[%s604 + $0x110] sm:$0xff]
        %v629 = vld [vmem:[%s604 + $0x120] sm:$0xff]
        %v630 = vld [vmem:[%s604 + $0x128] sm:$0xff]
        %v631 = vld [vmem:[%s604 + $0x138] sm:$0xff]
        %v632 = vld [vmem:[%s604 + $0x140] sm:$0xff]
        %v633 = vld [vmem:[%s604 + $0x150] sm:$0xff]
        %v634 = vld [vmem:[%s604 + $0x158] sm:$0xff]
        %v635 = vld [vmem:[%s604 + $0x168] sm:$0xff]
        %v636 = vld [vmem:[%s604 + $0x170] sm:$0xff]
        %v637 = vld [vmem:[%s604 + $0x1] sm:$0xff]
        %v638 = vld [vmem:[%s604 + $0x9] sm:$0xff]
        %v639 = vld [vmem:[%s604 + $0x19] sm:$0xff]
        %v640 = vld [vmem:[%s604 + $0x21] sm:$0xff]
        %v641 = vld [vmem:[%s604 + $0x31] sm:$0xff]
        %v642 = vld [vmem:[%s604 + $0x39] sm:$0xff]
        %v643 = vld [vmem:[%s604 + $0x49] sm:$0xff]
        %v644 = vld [vmem:[%s604 + $0x51] sm:$0xff]
        %v645 = vld [vmem:[%s604 + $0x61] sm:$0xff]
        %v646 = vld [vmem:[%s604 + $0x69] sm:$0xff]
        %v647 = vld [vmem:[%s604 + $0x79] sm:$0xff]
        %v648 = vld [vmem:[%s604 + $0x81] sm:$0xff]
        %v649 = vld [vmem:[%s604 + $0x91] sm:$0xff]
        %v650 = vld [vmem:[%s604 + $0x99] sm:$0xff]
        %v651 = vld [vmem:[%s604 + $0xa9] sm:$0xff]
        %v652 = vld [vmem:[%s604 + $0xb1] sm:$0xff]
        %v653 = vld [vmem:[%s604 + $0xc1] sm:$0xff]
        %v654 = vld [vmem:[%s604 + $0xc9] sm:$0xff]
        %v655 = vld [vmem:[%s604 + $0xd9] sm:$0xff]
        %v656 = vld [vmem:[%s604 + $0xe1] sm:$0xff]
        %v657 = vld [vmem:[%s604 + $0xf1] sm:$0xff]
        %v658 = vld [vmem:[%s604 + $0xf9] sm:$0xff]
        %v659 = vld [vmem:[%s604 + $0x109] sm:$0xff]
        %v660 = vld [vmem:[%s604 + $0x111] sm:$0xff]
        %v661 = vld [vmem:[%s604 + $0x121] sm:$0xff]
        %v662 = vld [vmem:[%s604 + $0x129] sm:$0xff]
        %v663 = vld [vmem:[%s604 + $0x139] sm:$0xff]
        %v664 = vld [vmem:[%s604 + $0x141] sm:$0xff]
        %v665 = vld [vmem:[%s604 + $0x151] sm:$0xff]
        %v666 = vld [vmem:[%s604 + $0x159] sm:$0xff]
        %v667 = vld [vmem:[%s604 + $0x169] sm:$0xff]
        %v668 = vld [vmem:[%s604 + $0x171] sm:$0xff]
        %v669 = vld [vmem:[%s604 + $0x2] sm:$0xff]
        %v670 = vld [vmem:[%s604 + $0xa] sm:$0xff]
        %v671 = vld [vmem:[%s604 + $0x1a] sm:$0xff]
        %v672 = vld [vmem:[%s604 + $0x22] sm:$0xff]
        %v673 = vld [vmem:[%s604 + $0x32] sm:$0xff]
        %v674 = vld [vmem:[%s604 + $0x3a] sm:$0xff]
        %v675 = vld [vmem:[%s604 + $0x4a] sm:$0xff]
        %v676 = vld [vmem:[%s604 + $0x52] sm:$0xff]
        %v677 = vld [vmem:[%s604 + $0x62] sm:$0xff]
        %v678 = vld [vmem:[%s604 + $0x6a] sm:$0xff]
        %v679 = vld [vmem:[%s604 + $0x7a] sm:$0xff]
        %v680 = vld [vmem:[%s604 + $0x82] sm:$0xff]
        %v681 = vld [vmem:[%s604 + $0x92] sm:$0xff]
        %v682 = vld [vmem:[%s604 + $0x9a] sm:$0xff]
        %v683 = vld [vmem:[%s604 + $0xaa] sm:$0xff]
        %v684 = vld [vmem:[%s604 + $0xb2] sm:$0xff]
        %v685 = vld [vmem:[%s604 + $0xc2] sm:$0xff]
        %v686 = vld [vmem:[%s604 + $0xca] sm:$0xff]
        %v687 = vld [vmem:[%s604 + $0xda] sm:$0xff]
        %v688 = vld [vmem:[%s604 + $0xe2] sm:$0xff]
        %v689 = vld [vmem:[%s604 + $0xf2] sm:$0xff]
        %v690 = vld [vmem:[%s604 + $0xfa] sm:$0xff]
        %v691 = vld [vmem:[%s604 + $0x10a] sm:$0xff]
        %v692 = vld [vmem:[%s604 + $0x112] sm:$0xff]
        %v693 = vld [vmem:[%s604 + $0x122] sm:$0xff]
        %v694 = vld [vmem:[%s604 + $0x12a] sm:$0xff]
        %v695 = vld [vmem:[%s604 + $0x13a] sm:$0xff]
        %v696 = vld [vmem:[%s604 + $0x142] sm:$0xff]
        %v697 = vld [vmem:[%s604 + $0x152] sm:$0xff]
        %v698 = vld [vmem:[%s604 + $0x15a] sm:$0xff]
        %v699 = vld [vmem:[%s604 + $0x16a] sm:$0xff]
        %v700 = vld [vmem:[%s604 + $0x172] sm:$0xff]
        %733 = vrot.lane.b32.xlu0 %v444, 4
        %v734 = vpop.permute.xlu0 %733
        %735 = vrot.lane.b32.xlu0 %v445, 4
        %v736 = vpop.permute.xlu0 %735
        %737 = vrot.lane.b32.xlu0 %v446, 4
        %v738 = vpop.permute.xlu0 %737
        %739 = vrot.lane.b32.xlu0 %v447, 4
        %v740 = vpop.permute.xlu0 %739
        %741 = vrot.lane.b32.xlu0 %v448, 4
        %v742 = vpop.permute.xlu0 %741
        %743 = vrot.lane.b32.xlu0 %v449, 4
        %v744 = vpop.permute.xlu0 %743
        %745 = vrot.lane.b32.xlu0 %v450, 4
        %v746 = vpop.permute.xlu0 %745
        %747 = vrot.lane.b32.xlu0 %v451, 4
        %v748 = vpop.permute.xlu0 %747
        %749 = vrot.lane.b32.xlu0 %v452, 4
        %v750 = vpop.permute.xlu0 %749
        %751 = vrot.lane.b32.xlu0 %v453, 4
        %v752 = vpop.permute.xlu0 %751
        %753 = vrot.lane.b32.xlu0 %v454, 4
        %v754 = vpop.permute.xlu0 %753
        %755 = vrot.lane.b32.xlu0 %v455, 4
        %v756 = vpop.permute.xlu0 %755
        %757 = vrot.lane.b32.xlu0 %v456, 4
        %v758 = vpop.permute.xlu0 %757
        %759 = vrot.lane.b32.xlu0 %v457, 4
        %v760 = vpop.permute.xlu0 %759
        %761 = vrot.lane.b32.xlu0 %v458, 4
        %v762 = vpop.permute.xlu0 %761
        %763 = vrot.lane.b32.xlu0 %v459, 4
        %v764 = vpop.permute.xlu0 %763
        %765 = vrot.lane.b32.xlu0 %v460, 4
        %v766 = vpop.permute.xlu0 %765
        %767 = vrot.lane.b32.xlu0 %v461, 4
        %v768 = vpop.permute.xlu0 %767
        %769 = vrot.lane.b32.xlu0 %v462, 4
        %v770 = vpop.permute.xlu0 %769
        %771 = vrot.lane.b32.xlu0 %v463, 4
        %v772 = vpop.permute.xlu0 %771
        %773 = vrot.lane.b32.xlu0 %v464, 4
        %v774 = vpop.permute.xlu0 %773
        %775 = vrot.lane.b32.xlu0 %v465, 4
        %v776 = vpop.permute.xlu0 %775
        %777 = vrot.lane.b32.xlu0 %v466, 4
        %v778 = vpop.permute.xlu0 %777
        %779 = vrot.lane.b32.xlu0 %v467, 4
        %v780 = vpop.permute.xlu0 %779
        %781 = vrot.lane.b32.xlu0 %v468, 4
        %v782 = vpop.permute.xlu0 %781
        %783 = vrot.lane.b32.xlu0 %v469, 4
        %v784 = vpop.permute.xlu0 %783
        %785 = vrot.lane.b32.xlu0 %v470, 4
        %v786 = vpop.permute.xlu0 %785
        %787 = vrot.lane.b32.xlu0 %v471, 4
        %v788 = vpop.permute.xlu0 %787
        %789 = vrot.lane.b32.xlu0 %v472, 4
        %v790 = vpop.permute.xlu0 %789
        %791 = vrot.lane.b32.xlu0 %v473, 4
        %v792 = vpop.permute.xlu0 %791
        %793 = vrot.lane.b32.xlu0 %v474, 4
        %v794 = vpop.permute.xlu0 %793
        %795 = vrot.lane.b32.xlu0 %v475, 4
        %v796 = vpop.permute.xlu0 %795
        %861 = vrot.lane.b32.xlu0 %v476, 8
        %v862 = vpop.permute.xlu0 %861
        %863 = vrot.lane.b32.xlu0 %v477, 8
        %v864 = vpop.permute.xlu0 %863
        %865 = vrot.lane.b32.xlu0 %v478, 8
        %v866 = vpop.permute.xlu0 %865
        %867 = vrot.lane.b32.xlu0 %v479, 8
        %v868 = vpop.permute.xlu0 %867
        %869 = vrot.lane.b32.xlu0 %v480, 8
        %v870 = vpop.permute.xlu0 %869
        %871 = vrot.lane.b32.xlu0 %v481, 8
        %v872 = vpop.permute.xlu0 %871
        %873 = vrot.lane.b32.xlu0 %v482, 8
        %v874 = vpop.permute.xlu0 %873
        %875 = vrot.lane.b32.xlu0 %v483, 8
        %v876 = vpop.permute.xlu0 %875
        %877 = vrot.lane.b32.xlu0 %v484, 8
        %v878 = vpop.permute.xlu0 %877
        %879 = vrot.lane.b32.xlu0 %v485, 8
        %v880 = vpop.permute.xlu0 %879
        %881 = vrot.lane.b32.xlu0 %v486, 8
        %v882 = vpop.permute.xlu0 %881
        %883 = vrot.lane.b32.xlu0 %v487, 8
        %v884 = vpop.permute.xlu0 %883
        %885 = vrot.lane.b32.xlu0 %v488, 8
        %v886 = vpop.permute.xlu0 %885
        %887 = vrot.lane.b32.xlu0 %v489, 8
        %v888 = vpop.permute.xlu0 %887
        %889 = vrot.lane.b32.xlu0 %v490, 8
        %v890 = vpop.permute.xlu0 %889
        %891 = vrot.lane.b32.xlu0 %v491, 8
        %v892 = vpop.permute.xlu0 %891
        %893 = vrot.lane.b32.xlu0 %v492, 8
        %v894 = vpop.permute.xlu0 %893
        %895 = vrot.lane.b32.xlu0 %v493, 8
        %v896 = vpop.permute.xlu0 %895
        %897 = vrot.lane.b32.xlu0 %v494, 8
        %v898 = vpop.permute.xlu0 %897
        %899 = vrot.lane.b32.xlu0 %v495, 8
        %v900 = vpop.permute.xlu0 %899
        %901 = vrot.lane.b32.xlu0 %v496, 8
        %v902 = vpop.permute.xlu0 %901
        %903 = vrot.lane.b32.xlu0 %v497, 8
        %v904 = vpop.permute.xlu0 %903
        %905 = vrot.lane.b32.xlu0 %v498, 8
        %v906 = vpop.permute.xlu0 %905
        %907 = vrot.lane.b32.xlu0 %v499, 8
        %v908 = vpop.permute.xlu0 %907
        %909 = vrot.lane.b32.xlu0 %v500, 8
        %v910 = vpop.permute.xlu0 %909
        %911 = vrot.lane.b32.xlu0 %v501, 8
        %v912 = vpop.permute.xlu0 %911
        %913 = vrot.lane.b32.xlu0 %v502, 8
        %v914 = vpop.permute.xlu0 %913
        %915 = vrot.lane.b32.xlu0 %v503, 8
        %v916 = vpop.permute.xlu0 %915
        %917 = vrot.lane.b32.xlu0 %v504, 8
        %v918 = vpop.permute.xlu0 %917
        %919 = vrot.lane.b32.xlu0 %v505, 8
        %v920 = vpop.permute.xlu0 %919
        %921 = vrot.lane.b32.xlu0 %v506, 8
        %v922 = vpop.permute.xlu0 %921
        %923 = vrot.lane.b32.xlu0 %v507, 8
        %v924 = vpop.permute.xlu0 %923
        %989 = vrot.lane.b32.xlu0 %v508, 12
        %v990 = vpop.permute.xlu0 %989
        %991 = vrot.lane.b32.xlu0 %v509, 12
        %v992 = vpop.permute.xlu0 %991
        %993 = vrot.lane.b32.xlu0 %v510, 12
        %v994 = vpop.permute.xlu0 %993
        %995 = vrot.lane.b32.xlu0 %v511, 12
        %v996 = vpop.permute.xlu0 %995
        %997 = vrot.lane.b32.xlu0 %v512, 12
        %v998 = vpop.permute.xlu0 %997
        %999 = vrot.lane.b32.xlu0 %v513, 12
        %v1000 = vpop.permute.xlu0 %999
        %1001 = vrot.lane.b32.xlu0 %v514, 12
        %v1002 = vpop.permute.xlu0 %1001
        %1003 = vrot.lane.b32.xlu0 %v515, 12
        %v1004 = vpop.permute.xlu0 %1003
        %1005 = vrot.lane.b32.xlu0 %v516, 12
        %v1006 = vpop.permute.xlu0 %1005
        %1007 = vrot.lane.b32.xlu0 %v517, 12
        %v1008 = vpop.permute.xlu0 %1007
        %1009 = vrot.lane.b32.xlu0 %v518, 12
        %v1010 = vpop.permute.xlu0 %1009
        %1011 = vrot.lane.b32.xlu0 %v519, 12
        %v1012 = vpop.permute.xlu0 %1011
        %1013 = vrot.lane.b32.xlu0 %v520, 12
        %v1014 = vpop.permute.xlu0 %1013
        %1015 = vrot.lane.b32.xlu0 %v521, 12
        %v1016 = vpop.permute.xlu0 %1015
        %1017 = vrot.lane.b32.xlu0 %v522, 12
        %v1018 = vpop.permute.xlu0 %1017
        %1019 = vrot.lane.b32.xlu0 %v523, 12
        %v1020 = vpop.permute.xlu0 %1019
        %1021 = vrot.lane.b32.xlu0 %v524, 12
        %v1022 = vpop.permute.xlu0 %1021
        %1023 = vrot.lane.b32.xlu0 %v525, 12
        %v1024 = vpop.permute.xlu0 %1023
        %1025 = vrot.lane.b32.xlu0 %v526, 12
        %v1026 = vpop.permute.xlu0 %1025
        %1027 = vrot.lane.b32.xlu0 %v527, 12
        %v1028 = vpop.permute.xlu0 %1027
        %1029 = vrot.lane.b32.xlu0 %v528, 12
        %v1030 = vpop.permute.xlu0 %1029
        %1031 = vrot.lane.b32.xlu0 %v529, 12
        %v1032 = vpop.permute.xlu0 %1031
        %1033 = vrot.lane.b32.xlu0 %v530, 12
        %v1034 = vpop.permute.xlu0 %1033
        %1035 = vrot.lane.b32.xlu0 %v531, 12
        %v1036 = vpop.permute.xlu0 %1035
        %1037 = vrot.lane.b32.xlu0 %v532, 12
        %v1038 = vpop.permute.xlu0 %1037
        %1039 = vrot.lane.b32.xlu0 %v533, 12
        %v1040 = vpop.permute.xlu0 %1039
        %1041 = vrot.lane.b32.xlu0 %v534, 12
        %v1042 = vpop.permute.xlu0 %1041
        %1043 = vrot.lane.b32.xlu0 %v535, 12
        %v1044 = vpop.permute.xlu0 %1043
        %1045 = vrot.lane.b32.xlu0 %v536, 12
        %v1046 = vpop.permute.xlu0 %1045
        %1047 = vrot.lane.b32.xlu0 %v537, 12
        %v1048 = vpop.permute.xlu0 %1047
        %1049 = vrot.lane.b32.xlu0 %v538, 12
        %v1050 = vpop.permute.xlu0 %1049
        %1051 = vrot.lane.b32.xlu0 %v539, 12
        %v1052 = vpop.permute.xlu0 %1051
        %1117 = vrot.lane.b32.xlu0 %v540, 16
        %v1118 = vpop.permute.xlu0 %1117
        %1119 = vrot.lane.b32.xlu0 %v541, 16
        %v1120 = vpop.permute.xlu0 %1119
        %1121 = vrot.lane.b32.xlu0 %v542, 16
        %v1122 = vpop.permute.xlu0 %1121
        %1123 = vrot.lane.b32.xlu0 %v543, 16
        %v1124 = vpop.permute.xlu0 %1123
        %1125 = vrot.lane.b32.xlu0 %v544, 16
        %v1126 = vpop.permute.xlu0 %1125
        %1127 = vrot.lane.b32.xlu0 %v545, 16
        %v1128 = vpop.permute.xlu0 %1127
        %1129 = vrot.lane.b32.xlu0 %v546, 16
        %v1130 = vpop.permute.xlu0 %1129
        %1131 = vrot.lane.b32.xlu0 %v547, 16
        %v1132 = vpop.permute.xlu0 %1131
        %1133 = vrot.lane.b32.xlu0 %v548, 16
        %v1134 = vpop.permute.xlu0 %1133
        %1135 = vrot.lane.b32.xlu0 %v549, 16
        %v1136 = vpop.permute.xlu0 %1135
        %1137 = vrot.lane.b32.xlu0 %v550, 16
        %v1138 = vpop.permute.xlu0 %1137
        %1139 = vrot.lane.b32.xlu0 %v551, 16
        %v1140 = vpop.permute.xlu0 %1139
        %1141 = vrot.lane.b32.xlu0 %v552, 16
        %v1142 = vpop.permute.xlu0 %1141
        %1143 = vrot.lane.b32.xlu0 %v553, 16
        %v1144 = vpop.permute.xlu0 %1143
        %1145 = vrot.lane.b32.xlu0 %v554, 16
        %v1146 = vpop.permute.xlu0 %1145
        %1147 = vrot.lane.b32.xlu0 %v555, 16
        %v1148 = vpop.permute.xlu0 %1147
        %1149 = vrot.lane.b32.xlu0 %v556, 16
        %v1150 = vpop.permute.xlu0 %1149
        %1151 = vrot.lane.b32.xlu0 %v557, 16
        %v1152 = vpop.permute.xlu0 %1151
        %1153 = vrot.lane.b32.xlu0 %v558, 16
        %v1154 = vpop.permute.xlu0 %1153
        %1155 = vrot.lane.b32.xlu0 %v559, 16
        %v1156 = vpop.permute.xlu0 %1155
        %1157 = vrot.lane.b32.xlu0 %v560, 16
        %v1158 = vpop.permute.xlu0 %1157
        %1159 = vrot.lane.b32.xlu0 %v561, 16
        %v1160 = vpop.permute.xlu0 %1159
        %1161 = vrot.lane.b32.xlu0 %v562, 16
        %v1162 = vpop.permute.xlu0 %1161
        %1163 = vrot.lane.b32.xlu0 %v563, 16
        %v1164 = vpop.permute.xlu0 %1163
        %1165 = vrot.lane.b32.xlu0 %v564, 16
        %v1166 = vpop.permute.xlu0 %1165
        %1167 = vrot.lane.b32.xlu0 %v565, 16
        %v1168 = vpop.permute.xlu0 %1167
        %1169 = vrot.lane.b32.xlu0 %v566, 16
        %v1170 = vpop.permute.xlu0 %1169
        %1171 = vrot.lane.b32.xlu0 %v567, 16
        %v1172 = vpop.permute.xlu0 %1171
        %1173 = vrot.lane.b32.xlu0 %v568, 16
        %v1174 = vpop.permute.xlu0 %1173
        %1175 = vrot.lane.b32.xlu0 %v569, 16
        %v1176 = vpop.permute.xlu0 %1175
        %1177 = vrot.lane.b32.xlu0 %v570, 16
        %v1178 = vpop.permute.xlu0 %1177
        %1179 = vrot.lane.b32.xlu0 %v571, 16
        %v1180 = vpop.permute.xlu0 %1179
        %1245 = vrot.lane.b32.xlu0 %v572, 20
        %v1246 = vpop.permute.xlu0 %1245
        %1247 = vrot.lane.b32.xlu0 %v573, 20
        %v1248 = vpop.permute.xlu0 %1247
        %1249 = vrot.lane.b32.xlu0 %v574, 20
        %v1250 = vpop.permute.xlu0 %1249
        %1251 = vrot.lane.b32.xlu0 %v575, 20
        %v1252 = vpop.permute.xlu0 %1251
        %1253 = vrot.lane.b32.xlu0 %v576, 20
        %v1254 = vpop.permute.xlu0 %1253
        %1255 = vrot.lane.b32.xlu0 %v577, 20
        %v1256 = vpop.permute.xlu0 %1255
        %1257 = vrot.lane.b32.xlu0 %v578, 20
        %v1258 = vpop.permute.xlu0 %1257
        %1259 = vrot.lane.b32.xlu0 %v579, 20
        %v1260 = vpop.permute.xlu0 %1259
        %1261 = vrot.lane.b32.xlu0 %v580, 20
        %v1262 = vpop.permute.xlu0 %1261
        %1263 = vrot.lane.b32.xlu0 %v581, 20
        %v1264 = vpop.permute.xlu0 %1263
        %1265 = vrot.lane.b32.xlu0 %v582, 20
        %v1266 = vpop.permute.xlu0 %1265
        %1267 = vrot.lane.b32.xlu0 %v583, 20
        %v1268 = vpop.permute.xlu0 %1267
        %1269 = vrot.lane.b32.xlu0 %v584, 20
        %v1270 = vpop.permute.xlu0 %1269
        %1271 = vrot.lane.b32.xlu0 %v585, 20
        %v1272 = vpop.permute.xlu0 %1271
        %1273 = vrot.lane.b32.xlu0 %v586, 20
        %v1274 = vpop.permute.xlu0 %1273
        %1275 = vrot.lane.b32.xlu0 %v587, 20
        %v1276 = vpop.permute.xlu0 %1275
        %1277 = vrot.lane.b32.xlu0 %v588, 20
        %v1278 = vpop.permute.xlu0 %1277
        %1279 = vrot.lane.b32.xlu0 %v589, 20
        %v1280 = vpop.permute.xlu0 %1279
        %1281 = vrot.lane.b32.xlu0 %v590, 20
        %v1282 = vpop.permute.xlu0 %1281
        %1283 = vrot.lane.b32.xlu0 %v591, 20
        %v1284 = vpop.permute.xlu0 %1283
        %1285 = vrot.lane.b32.xlu0 %v592, 20
        %v1286 = vpop.permute.xlu0 %1285
        %1287 = vrot.lane.b32.xlu0 %v593, 20
        %v1288 = vpop.permute.xlu0 %1287
        %1289 = vrot.lane.b32.xlu0 %v594, 20
        %v1290 = vpop.permute.xlu0 %1289
        %1291 = vrot.lane.b32.xlu0 %v595, 20
        %v1292 = vpop.permute.xlu0 %1291
        %1293 = vrot.lane.b32.xlu0 %v596, 20
        %v1294 = vpop.permute.xlu0 %1293
        %1295 = vrot.lane.b32.xlu0 %v597, 20
        %v1296 = vpop.permute.xlu0 %1295
        %1297 = vrot.lane.b32.xlu0 %v598, 20
        %v1298 = vpop.permute.xlu0 %1297
        %1299 = vrot.lane.b32.xlu0 %v599, 20
        %v1300 = vpop.permute.xlu0 %1299
        %1301 = vrot.lane.b32.xlu0 %v600, 20
        %v1302 = vpop.permute.xlu0 %1301
        %1303 = vrot.lane.b32.xlu0 %v601, 20
        %v1304 = vpop.permute.xlu0 %1303
        %1305 = vrot.lane.b32.xlu0 %v602, 20
        %v1306 = vpop.permute.xlu0 %1305
        %1307 = vrot.lane.b32.xlu0 %v603, 20
        %v1308 = vpop.permute.xlu0 %1307
        %1373 = vrot.lane.b32.xlu0 %v605, 24
        %v1374 = vpop.permute.xlu0 %1373
        %1375 = vrot.lane.b32.xlu0 %v606, 24
        %v1376 = vpop.permute.xlu0 %1375
        %1377 = vrot.lane.b32.xlu0 %v607, 24
        %v1378 = vpop.permute.xlu0 %1377
        %1379 = vrot.lane.b32.xlu0 %v608, 24
        %v1380 = vpop.permute.xlu0 %1379
        %1381 = vrot.lane.b32.xlu0 %v609, 24
        %v1382 = vpop.permute.xlu0 %1381
        %1383 = vrot.lane.b32.xlu0 %v610, 24
        %v1384 = vpop.permute.xlu0 %1383
        %1385 = vrot.lane.b32.xlu0 %v611, 24
        %v1386 = vpop.permute.xlu0 %1385
        %1387 = vrot.lane.b32.xlu0 %v612, 24
        %v1388 = vpop.permute.xlu0 %1387
        %1389 = vrot.lane.b32.xlu0 %v613, 24
        %v1390 = vpop.permute.xlu0 %1389
        %1391 = vrot.lane.b32.xlu0 %v614, 24
        %v1392 = vpop.permute.xlu0 %1391
        %1393 = vrot.lane.b32.xlu0 %v615, 24
        %v1394 = vpop.permute.xlu0 %1393
        %1395 = vrot.lane.b32.xlu0 %v616, 24
        %v1396 = vpop.permute.xlu0 %1395
        %1397 = vrot.lane.b32.xlu0 %v617, 24
        %v1398 = vpop.permute.xlu0 %1397
        %1399 = vrot.lane.b32.xlu0 %v618, 24
        %v1400 = vpop.permute.xlu0 %1399
        %1401 = vrot.lane.b32.xlu0 %v619, 24
        %v1402 = vpop.permute.xlu0 %1401
        %1403 = vrot.lane.b32.xlu0 %v620, 24
        %v1404 = vpop.permute.xlu0 %1403
        %1405 = vrot.lane.b32.xlu0 %v621, 24
        %v1406 = vpop.permute.xlu0 %1405
        %1407 = vrot.lane.b32.xlu0 %v622, 24
        %v1408 = vpop.permute.xlu0 %1407
        %1409 = vrot.lane.b32.xlu0 %v623, 24
        %v1410 = vpop.permute.xlu0 %1409
        %1411 = vrot.lane.b32.xlu0 %v624, 24
        %v1412 = vpop.permute.xlu0 %1411
        %1413 = vrot.lane.b32.xlu0 %v625, 24
        %v1414 = vpop.permute.xlu0 %1413
        %1415 = vrot.lane.b32.xlu0 %v626, 24
        %v1416 = vpop.permute.xlu0 %1415
        %1417 = vrot.lane.b32.xlu0 %v627, 24
        %v1418 = vpop.permute.xlu0 %1417
        %1419 = vrot.lane.b32.xlu0 %v628, 24
        %v1420 = vpop.permute.xlu0 %1419
        %1421 = vrot.lane.b32.xlu0 %v629, 24
        %v1422 = vpop.permute.xlu0 %1421
        %1423 = vrot.lane.b32.xlu0 %v630, 24
        %v1424 = vpop.permute.xlu0 %1423
        %1425 = vrot.lane.b32.xlu0 %v631, 24
        %v1426 = vpop.permute.xlu0 %1425
        %1427 = vrot.lane.b32.xlu0 %v632, 24
        %v1428 = vpop.permute.xlu0 %1427
        %1429 = vrot.lane.b32.xlu0 %v633, 24
        %v1430 = vpop.permute.xlu0 %1429
        %1431 = vrot.lane.b32.xlu0 %v634, 24
        %v1432 = vpop.permute.xlu0 %1431
        %1433 = vrot.lane.b32.xlu0 %v635, 24
        %v1434 = vpop.permute.xlu0 %1433
        %1435 = vrot.lane.b32.xlu0 %v636, 24
        %v1436 = vpop.permute.xlu0 %1435
        %1501 = vrot.lane.b32.xlu0 %v637, 28
        %v1502 = vpop.permute.xlu0 %1501
        %1503 = vrot.lane.b32.xlu0 %v638, 28
        %v1504 = vpop.permute.xlu0 %1503
        %1505 = vrot.lane.b32.xlu0 %v639, 28
        %v1506 = vpop.permute.xlu0 %1505
        %1507 = vrot.lane.b32.xlu0 %v640, 28
        %v1508 = vpop.permute.xlu0 %1507
        %1509 = vrot.lane.b32.xlu0 %v641, 28
        %v1510 = vpop.permute.xlu0 %1509
        %1511 = vrot.lane.b32.xlu0 %v642, 28
        %v1512 = vpop.permute.xlu0 %1511
        %1513 = vrot.lane.b32.xlu0 %v643, 28
        %v1514 = vpop.permute.xlu0 %1513
        %1515 = vrot.lane.b32.xlu0 %v644, 28
        %v1516 = vpop.permute.xlu0 %1515
        %1517 = vrot.lane.b32.xlu0 %v645, 28
        %v1518 = vpop.permute.xlu0 %1517
        %1519 = vrot.lane.b32.xlu0 %v646, 28
        %v1520 = vpop.permute.xlu0 %1519
        %1521 = vrot.lane.b32.xlu0 %v647, 28
        %v1522 = vpop.permute.xlu0 %1521
        %1523 = vrot.lane.b32.xlu0 %v648, 28
        %v1524 = vpop.permute.xlu0 %1523
        %1525 = vrot.lane.b32.xlu0 %v649, 28
        %v1526 = vpop.permute.xlu0 %1525
        %1527 = vrot.lane.b32.xlu0 %v650, 28
        %v1528 = vpop.permute.xlu0 %1527
        %1529 = vrot.lane.b32.xlu0 %v651, 28
        %v1530 = vpop.permute.xlu0 %1529
        %1531 = vrot.lane.b32.xlu0 %v652, 28
        %v1532 = vpop.permute.xlu0 %1531
        %1533 = vrot.lane.b32.xlu0 %v653, 28
        %v1534 = vpop.permute.xlu0 %1533
        %1535 = vrot.lane.b32.xlu0 %v654, 28
        %v1536 = vpop.permute.xlu0 %1535
        %1537 = vrot.lane.b32.xlu0 %v655, 28
        %v1538 = vpop.permute.xlu0 %1537
        %1539 = vrot.lane.b32.xlu0 %v656, 28
        %v1540 = vpop.permute.xlu0 %1539
        %1541 = vrot.lane.b32.xlu0 %v657, 28
        %v1542 = vpop.permute.xlu0 %1541
        %1543 = vrot.lane.b32.xlu0 %v658, 28
        %v1544 = vpop.permute.xlu0 %1543
        %1545 = vrot.lane.b32.xlu0 %v659, 28
        %v1546 = vpop.permute.xlu0 %1545
        %1547 = vrot.lane.b32.xlu0 %v660, 28
        %v1548 = vpop.permute.xlu0 %1547
        %1549 = vrot.lane.b32.xlu0 %v661, 28
        %v1550 = vpop.permute.xlu0 %1549
        %1551 = vrot.lane.b32.xlu0 %v662, 28
        %v1552 = vpop.permute.xlu0 %1551
        %1553 = vrot.lane.b32.xlu0 %v663, 28
        %v1554 = vpop.permute.xlu0 %1553
        %1555 = vrot.lane.b32.xlu0 %v664, 28
        %v1556 = vpop.permute.xlu0 %1555
        %1557 = vrot.lane.b32.xlu0 %v665, 28
        %v1558 = vpop.permute.xlu0 %1557
        %1559 = vrot.lane.b32.xlu0 %v666, 28
        %v1560 = vpop.permute.xlu0 %1559
        %1561 = vrot.lane.b32.xlu0 %v667, 28
        %v1562 = vpop.permute.xlu0 %1561
        %1563 = vrot.lane.b32.xlu0 %v668, 28
        %v1564 = vpop.permute.xlu0 %1563
        %1629 = vrot.lane.b32.xlu0 %v669, 32
        %v1630 = vpop.permute.xlu0 %1629
        %1631 = vrot.lane.b32.xlu0 %v670, 32
        %v1632 = vpop.permute.xlu0 %1631
        %1633 = vrot.lane.b32.xlu0 %v671, 32
        %v1634 = vpop.permute.xlu0 %1633
        %1635 = vrot.lane.b32.xlu0 %v672, 32
        %v1636 = vpop.permute.xlu0 %1635
        %1637 = vrot.lane.b32.xlu0 %v673, 32
        %v1638 = vpop.permute.xlu0 %1637
        %1639 = vrot.lane.b32.xlu0 %v674, 32
        %v1640 = vpop.permute.xlu0 %1639
        %1641 = vrot.lane.b32.xlu0 %v675, 32
        %v1642 = vpop.permute.xlu0 %1641
        %1643 = vrot.lane.b32.xlu0 %v676, 32
        %v1644 = vpop.permute.xlu0 %1643
        %1645 = vrot.lane.b32.xlu0 %v677, 32
        %v1646 = vpop.permute.xlu0 %1645
        %1647 = vrot.lane.b32.xlu0 %v678, 32
        %v1648 = vpop.permute.xlu0 %1647
        %1649 = vrot.lane.b32.xlu0 %v679, 32
        %v1650 = vpop.permute.xlu0 %1649
        %1651 = vrot.lane.b32.xlu0 %v680, 32
        %v1652 = vpop.permute.xlu0 %1651
        %1653 = vrot.lane.b32.xlu0 %v681, 32
        %v1654 = vpop.permute.xlu0 %1653
        %1655 = vrot.lane.b32.xlu0 %v682, 32
        %v1656 = vpop.permute.xlu0 %1655
        %1657 = vrot.lane.b32.xlu0 %v683, 32
        %v1658 = vpop.permute.xlu0 %1657
        %1659 = vrot.lane.b32.xlu0 %v684, 32
        %v1660 = vpop.permute.xlu0 %1659
        %1661 = vrot.lane.b32.xlu0 %v685, 32
        %v1662 = vpop.permute.xlu0 %1661
        %1663 = vrot.lane.b32.xlu0 %v686, 32
        %v1664 = vpop.permute.xlu0 %1663
        %1665 = vrot.lane.b32.xlu0 %v687, 32
        %v1666 = vpop.permute.xlu0 %1665
        %1667 = vrot.lane.b32.xlu0 %v688, 32
        %v1668 = vpop.permute.xlu0 %1667
        %1669 = vrot.lane.b32.xlu0 %v689, 32
        %v1670 = vpop.permute.xlu0 %1669
        %1671 = vrot.lane.b32.xlu0 %v690, 32
        %v1672 = vpop.permute.xlu0 %1671
        %1673 = vrot.lane.b32.xlu0 %v691, 32
        %v1674 = vpop.permute.xlu0 %1673
        %1675 = vrot.lane.b32.xlu0 %v692, 32
        %v1676 = vpop.permute.xlu0 %1675
        %1677 = vrot.lane.b32.xlu0 %v693, 32
        %v1678 = vpop.permute.xlu0 %1677
        %1679 = vrot.lane.b32.xlu0 %v694, 32
        %v1680 = vpop.permute.xlu0 %1679
        %1681 = vrot.lane.b32.xlu0 %v695, 32
        %v1682 = vpop.permute.xlu0 %1681
        %1683 = vrot.lane.b32.xlu0 %v696, 32
        %v1684 = vpop.permute.xlu0 %1683
        %1685 = vrot.lane.b32.xlu0 %v697, 32
        %v1686 = vpop.permute.xlu0 %1685
        %1687 = vrot.lane.b32.xlu0 %v698, 32
        %v1688 = vpop.permute.xlu0 %1687
        %1689 = vrot.lane.b32.xlu0 %v699, 32
        %v1690 = vpop.permute.xlu0 %1689
        %1691 = vrot.lane.b32.xlu0 %v700, 32
        %v1692 = vpop.permute.xlu0 %1691
        %v1725 = vsel %vm305, %v412, %v734
        %v1726 = vsel %vm305, %v413, %v736
        %v1727 = vsel %vm305, %v414, %v738
        %v1728 = vsel %vm305, %v415, %v740
        %v1729 = vsel %vm305, %v416, %v742
        %v1730 = vsel %vm305, %v417, %v744
        %v1731 = vsel %vm305, %v418, %v746
        %v1732 = vsel %vm305, %v419, %v748
        %v1733 = vsel %vm305, %v420, %v750
        %v1734 = vsel %vm305, %v421, %v752
        %v1735 = vsel %vm305, %v422, %v754
        %v1736 = vsel %vm305, %v423, %v756
        %v1737 = vsel %vm305, %v424, %v758
        %v1738 = vsel %vm305, %v425, %v760
        %v1739 = vsel %vm305, %v426, %v762
        %v1740 = vsel %vm305, %v427, %v764
        %v1741 = vsel %vm305, %v428, %v766
        %v1742 = vsel %vm305, %v429, %v768
        %v1743 = vsel %vm305, %v430, %v770
        %v1744 = vsel %vm305, %v431, %v772
        %v1745 = vsel %vm305, %v432, %v774
        %v1746 = vsel %vm305, %v433, %v776
        %v1747 = vsel %vm305, %v434, %v778
        %v1748 = vsel %vm305, %v435, %v780
        %v1749 = vsel %vm305, %v436, %v782
        %v1750 = vsel %vm305, %v437, %v784
        %v1751 = vsel %vm305, %v438, %v786
        %v1752 = vsel %vm305, %v439, %v788
        %v1753 = vsel %vm305, %v440, %v790
        %v1754 = vsel %vm305, %v441, %v792
        %v1755 = vsel %vm305, %v442, %v794
        %v1756 = vsel %vm305, %v443, %v796
        %vm1757 = vcmask 64512
        %v1758 = vsel %vm1757, %v1725, %v862
        %v1759 = vsel %vm1757, %v1726, %v864
        %v1760 = vsel %vm1757, %v1727, %v866
        %v1761 = vsel %vm1757, %v1728, %v868
        %v1762 = vsel %vm1757, %v1729, %v870
        %v1763 = vsel %vm1757, %v1730, %v872
        %v1764 = vsel %vm1757, %v1731, %v874
        %v1765 = vsel %vm1757, %v1732, %v876
        %v1766 = vsel %vm1757, %v1733, %v878
        %v1767 = vsel %vm1757, %v1734, %v880
        %v1768 = vsel %vm1757, %v1735, %v882
        %v1769 = vsel %vm1757, %v1736, %v884
        %v1770 = vsel %vm1757, %v1737, %v886
        %v1771 = vsel %vm1757, %v1738, %v888
        %v1772 = vsel %vm1757, %v1739, %v890
        %v1773 = vsel %vm1757, %v1740, %v892
        %v1774 = vsel %vm1757, %v1741, %v894
        %v1775 = vsel %vm1757, %v1742, %v896
        %v1776 = vsel %vm1757, %v1743, %v898
        %v1777 = vsel %vm1757, %v1744, %v900
        %v1778 = vsel %vm1757, %v1745, %v902
        %v1779 = vsel %vm1757, %v1746, %v904
        %v1780 = vsel %vm1757, %v1747, %v906
        %v1781 = vsel %vm1757, %v1748, %v908
        %v1782 = vsel %vm1757, %v1749, %v910
        %v1783 = vsel %vm1757, %v1750, %v912
        %v1784 = vsel %vm1757, %v1751, %v914
        %v1785 = vsel %vm1757, %v1752, %v916
        %v1786 = vsel %vm1757, %v1753, %v918
        %v1787 = vsel %vm1757, %v1754, %v920
        %v1788 = vsel %vm1757, %v1755, %v922
        %v1789 = vsel %vm1757, %v1756, %v924
        %vm1790 = vcmask 97280
        %v1791 = vsel %vm1790, %v1758, %v990
        %v1792 = vsel %vm1790, %v1759, %v992
        %v1793 = vsel %vm1790, %v1760, %v994
        %v1794 = vsel %vm1790, %v1761, %v996
        %v1795 = vsel %vm1790, %v1762, %v998
        %v1796 = vsel %vm1790, %v1763, %v1000
        %v1797 = vsel %vm1790, %v1764, %v1002
        %v1798 = vsel %vm1790, %v1765, %v1004
        %v1799 = vsel %vm1790, %v1766, %v1006
        %v1800 = vsel %vm1790, %v1767, %v1008
        %v1801 = vsel %vm1790, %v1768, %v1010
        %v1802 = vsel %vm1790, %v1769, %v1012
        %v1803 = vsel %vm1790, %v1770, %v1014
        %v1804 = vsel %vm1790, %v1771, %v1016
        %v1805 = vsel %vm1790, %v1772, %v1018
        %v1806 = vsel %vm1790, %v1773, %v1020
        %v1807 = vsel %vm1790, %v1774, %v1022
        %v1808 = vsel %vm1790, %v1775, %v1024
        %v1809 = vsel %vm1790, %v1776, %v1026
        %v1810 = vsel %vm1790, %v1777, %v1028
        %v1811 = vsel %vm1790, %v1778, %v1030
        %v1812 = vsel %vm1790, %v1779, %v1032
        %v1813 = vsel %vm1790, %v1780, %v1034
        %v1814 = vsel %vm1790, %v1781, %v1036
        %v1815 = vsel %vm1790, %v1782, %v1038
        %v1816 = vsel %vm1790, %v1783, %v1040
        %v1817 = vsel %vm1790, %v1784, %v1042
        %v1818 = vsel %vm1790, %v1785, %v1044
        %v1819 = vsel %vm1790, %v1786, %v1046
        %v1820 = vsel %vm1790, %v1787, %v1048
        %v1821 = vsel %vm1790, %v1788, %v1050
        %v1822 = vsel %vm1790, %v1789, %v1052
        %vm1823 = vcmask 130048
        %v1824 = vsel %vm1823, %v1791, %v1118
        %v1825 = vsel %vm1823, %v1792, %v1120
        %v1826 = vsel %vm1823, %v1793, %v1122
        %v1827 = vsel %vm1823, %v1794, %v1124
        %v1828 = vsel %vm1823, %v1795, %v1126
        %v1829 = vsel %vm1823, %v1796, %v1128
        %v1830 = vsel %vm1823, %v1797, %v1130
        %v1831 = vsel %vm1823, %v1798, %v1132
        %v1832 = vsel %vm1823, %v1799, %v1134
        %v1833 = vsel %vm1823, %v1800, %v1136
        %v1834 = vsel %vm1823, %v1801, %v1138
        %v1835 = vsel %vm1823, %v1802, %v1140
        %v1836 = vsel %vm1823, %v1803, %v1142
        %v1837 = vsel %vm1823, %v1804, %v1144
        %v1838 = vsel %vm1823, %v1805, %v1146
        %v1839 = vsel %vm1823, %v1806, %v1148
        %v1840 = vsel %vm1823, %v1807, %v1150
        %v1841 = vsel %vm1823, %v1808, %v1152
        %v1842 = vsel %vm1823, %v1809, %v1154
        %v1843 = vsel %vm1823, %v1810, %v1156
        %v1844 = vsel %vm1823, %v1811, %v1158
        %v1845 = vsel %vm1823, %v1812, %v1160
        %v1846 = vsel %vm1823, %v1813, %v1162
        %v1847 = vsel %vm1823, %v1814, %v1164
        %v1848 = vsel %vm1823, %v1815, %v1166
        %v1849 = vsel %vm1823, %v1816, %v1168
        %v1850 = vsel %vm1823, %v1817, %v1170
        %v1851 = vsel %vm1823, %v1818, %v1172
        %v1852 = vsel %vm1823, %v1819, %v1174
        %v1853 = vsel %vm1823, %v1820, %v1176
        %v1854 = vsel %vm1823, %v1821, %v1178
        %v1855 = vsel %vm1823, %v1822, %v1180
        %vm1856 = vcmask 162816
        %v1857 = vsel %vm1856, %v1824, %v1246
        %v1858 = vsel %vm1856, %v1825, %v1248
        %v1859 = vsel %vm1856, %v1826, %v1250
        %v1860 = vsel %vm1856, %v1827, %v1252
        %v1861 = vsel %vm1856, %v1828, %v1254
        %v1862 = vsel %vm1856, %v1829, %v1256
        %v1863 = vsel %vm1856, %v1830, %v1258
        %v1864 = vsel %vm1856, %v1831, %v1260
        %v1865 = vsel %vm1856, %v1832, %v1262
        %v1866 = vsel %vm1856, %v1833, %v1264
        %v1867 = vsel %vm1856, %v1834, %v1266
        %v1868 = vsel %vm1856, %v1835, %v1268
        %v1869 = vsel %vm1856, %v1836, %v1270
        %v1870 = vsel %vm1856, %v1837, %v1272
        %v1871 = vsel %vm1856, %v1838, %v1274
        %v1872 = vsel %vm1856, %v1839, %v1276
        %v1873 = vsel %vm1856, %v1840, %v1278
        %v1874 = vsel %vm1856, %v1841, %v1280
        %v1875 = vsel %vm1856, %v1842, %v1282
        %v1876 = vsel %vm1856, %v1843, %v1284
        %v1877 = vsel %vm1856, %v1844, %v1286
        %v1878 = vsel %vm1856, %v1845, %v1288
        %v1879 = vsel %vm1856, %v1846, %v1290
        %v1880 = vsel %vm1856, %v1847, %v1292
        %v1881 = vsel %vm1856, %v1848, %v1294
        %v1882 = vsel %vm1856, %v1849, %v1296
        %v1883 = vsel %vm1856, %v1850, %v1298
        %v1884 = vsel %vm1856, %v1851, %v1300
        %v1885 = vsel %vm1856, %v1852, %v1302
        %v1886 = vsel %vm1856, %v1853, %v1304
        %v1887 = vsel %vm1856, %v1854, %v1306
        %v1888 = vsel %vm1856, %v1855, %v1308
        %vm1889 = vcmask 195584
        %v1890 = vsel %vm1889, %v1857, %v1374
        %v1891 = vsel %vm1889, %v1858, %v1376
        %v1892 = vsel %vm1889, %v1859, %v1378
        %v1893 = vsel %vm1889, %v1860, %v1380
        %v1894 = vsel %vm1889, %v1861, %v1382
        %v1895 = vsel %vm1889, %v1862, %v1384
        %v1896 = vsel %vm1889, %v1863, %v1386
        %v1897 = vsel %vm1889, %v1864, %v1388
        %v1898 = vsel %vm1889, %v1865, %v1390
        %v1899 = vsel %vm1889, %v1866, %v1392
        %v1900 = vsel %vm1889, %v1867, %v1394
        %v1901 = vsel %vm1889, %v1868, %v1396
        %v1902 = vsel %vm1889, %v1869, %v1398
        %v1903 = vsel %vm1889, %v1870, %v1400
        %v1904 = vsel %vm1889, %v1871, %v1402
        %v1905 = vsel %vm1889, %v1872, %v1404
        %v1906 = vsel %vm1889, %v1873, %v1406
        %v1907 = vsel %vm1889, %v1874, %v1408
        %v1908 = vsel %vm1889, %v1875, %v1410
        %v1909 = vsel %vm1889, %v1876, %v1412
        %v1910 = vsel %vm1889, %v1877, %v1414
        %v1911 = vsel %vm1889, %v1878, %v1416
        %v1912 = vsel %vm1889, %v1879, %v1418
        %v1913 = vsel %vm1889, %v1880, %v1420
        %v1914 = vsel %vm1889, %v1881, %v1422
        %v1915 = vsel %vm1889, %v1882, %v1424
        %v1916 = vsel %vm1889, %v1883, %v1426
        %v1917 = vsel %vm1889, %v1884, %v1428
        %v1918 = vsel %vm1889, %v1885, %v1430
        %v1919 = vsel %vm1889, %v1886, %v1432
        %v1920 = vsel %vm1889, %v1887, %v1434
        %v1921 = vsel %vm1889, %v1888, %v1436
        %vm1922 = vcmask 228352
        %v1923 = vsel %vm1922, %v1890, %v1502
        %v1924 = vsel %vm1922, %v1891, %v1504
        %v1925 = vsel %vm1922, %v1892, %v1506
        %v1926 = vsel %vm1922, %v1893, %v1508
        %v1927 = vsel %vm1922, %v1894, %v1510
        %v1928 = vsel %vm1922, %v1895, %v1512
        %v1929 = vsel %vm1922, %v1896, %v1514
        %v1930 = vsel %vm1922, %v1897, %v1516
        %v1931 = vsel %vm1922, %v1898, %v1518
        %v1932 = vsel %vm1922, %v1899, %v1520
        %v1933 = vsel %vm1922, %v1900, %v1522
        %v1934 = vsel %vm1922, %v1901, %v1524
        %v1935 = vsel %vm1922, %v1902, %v1526
        %v1936 = vsel %vm1922, %v1903, %v1528
        %v1937 = vsel %vm1922, %v1904, %v1530
        %v1938 = vsel %vm1922, %v1905, %v1532
        %v1939 = vsel %vm1922, %v1906, %v1534
        %v1940 = vsel %vm1922, %v1907, %v1536
        %v1941 = vsel %vm1922, %v1908, %v1538
        %v1942 = vsel %vm1922, %v1909, %v1540
        %v1943 = vsel %vm1922, %v1910, %v1542
        %v1944 = vsel %vm1922, %v1911, %v1544
        %v1945 = vsel %vm1922, %v1912, %v1546
        %v1946 = vsel %vm1922, %v1913, %v1548
        %v1947 = vsel %vm1922, %v1914, %v1550
        %v1948 = vsel %vm1922, %v1915, %v1552
        %v1949 = vsel %vm1922, %v1916, %v1554
        %v1950 = vsel %vm1922, %v1917, %v1556
        %v1951 = vsel %vm1922, %v1918, %v1558
        %v1952 = vsel %vm1922, %v1919, %v1560
        %v1953 = vsel %vm1922, %v1920, %v1562
        %v1954 = vsel %vm1922, %v1921, %v1564
        %vm1955 = vcmask 261120
        %v1956 = vsel %vm1955, %v1923, %v1630
        %v1957 = vsel %vm1955, %v1924, %v1632
        %v1958 = vsel %vm1955, %v1925, %v1634
        %v1959 = vsel %vm1955, %v1926, %v1636
        %v1960 = vsel %vm1955, %v1927, %v1638
        %v1961 = vsel %vm1955, %v1928, %v1640
        %v1962 = vsel %vm1955, %v1929, %v1642
        %v1963 = vsel %vm1955, %v1930, %v1644
        %v1964 = vsel %vm1955, %v1931, %v1646
        %v1965 = vsel %vm1955, %v1932, %v1648
        %v1966 = vsel %vm1955, %v1933, %v1650
        %v1967 = vsel %vm1955, %v1934, %v1652
        %v1968 = vsel %vm1955, %v1935, %v1654
        %v1969 = vsel %vm1955, %v1936, %v1656
        %v1970 = vsel %vm1955, %v1937, %v1658
        %v1971 = vsel %vm1955, %v1938, %v1660
        %v1972 = vsel %vm1955, %v1939, %v1662
        %v1973 = vsel %vm1955, %v1940, %v1664
        %v1974 = vsel %vm1955, %v1941, %v1666
        %v1975 = vsel %vm1955, %v1942, %v1668
        %v1976 = vsel %vm1955, %v1943, %v1670
        %v1977 = vsel %vm1955, %v1944, %v1672
        %v1978 = vsel %vm1955, %v1945, %v1674
        %v1979 = vsel %vm1955, %v1946, %v1676
        %v1980 = vsel %vm1955, %v1947, %v1678
        %v1981 = vsel %vm1955, %v1948, %v1680
        %v1982 = vsel %vm1955, %v1949, %v1682
        %v1983 = vsel %vm1955, %v1950, %v1684
        %v1984 = vsel %vm1955, %v1951, %v1686
        %v1985 = vsel %vm1955, %v1952, %v1688
        %v1986 = vsel %vm1955, %v1953, %v1690
        %v1987 = vsel %vm1955, %v1954, %v1692
        %v1988 = vld [vmem:[%s1] sm:$0xff]
        %v1989 = vld [vmem:[%s1 + $0x8] sm:$0xff]
        %v1990 = vld [vmem:[%s1 + $0x10] sm:$0xff]
        %v1991 = vld [vmem:[%s1 + $0x18] sm:$0xff]
        %v1992 = vld [vmem:[%s1 + $0x20] sm:$0xf]
        %vm1993 = vcmask 293888
        %v1995 = vsel %vm1993, %v1956, 0
        %v1998 = vsel %vm1993, %v1957, 0
        %v2001 = vsel %vm1993, %v1958, 0
        %v2004 = vsel %vm1993, %v1959, 0
        %v2007 = vsel %vm1993, %v1960, 0
        %v2010 = vsel %vm1993, %v1961, 0
        %v2013 = vsel %vm1993, %v1962, 0
        %v2016 = vsel %vm1993, %v1963, 0
        %v2019 = vsel %vm1993, %v1964, 0
        %v2022 = vsel %vm1993, %v1965, 0
        %v2025 = vsel %vm1993, %v1966, 0
        %v2028 = vsel %vm1993, %v1967, 0
        %v2031 = vsel %vm1993, %v1968, 0
        %v2034 = vsel %vm1993, %v1969, 0
        %v2037 = vsel %vm1993, %v1970, 0
        %v2040 = vsel %vm1993, %v1971, 0
        %v2043 = vsel %vm1993, %v1972, 0
        %v2046 = vsel %vm1993, %v1973, 0
        %v2049 = vsel %vm1993, %v1974, 0
        %v2052 = vsel %vm1993, %v1975, 0
        %v2055 = vsel %vm1993, %v1976, 0
        %v2058 = vsel %vm1993, %v1977, 0
        %v2061 = vsel %vm1993, %v1978, 0
        %v2064 = vsel %vm1993, %v1979, 0
        %v2067 = vsel %vm1993, %v1980, 0
        %v2070 = vsel %vm1993, %v1981, 0
        %v2073 = vsel %vm1993, %v1982, 0
        %v2076 = vsel %vm1993, %v1983, 0
        %v2079 = vsel %vm1993, %v1984, 0
        %v2082 = vsel %vm1993, %v1985, 0
        %v2085 = vsel %vm1993, %v1986, 0
        %v2088 = vsel %vm1993, %v1987, 0
        %vm2090 = vcmask 1043456
        %v2092 = vsel %vm2090, %v1992, 0
        %2094 = vmatprep.subr.mxu0 0.0
        %2095 = vmatpush1.msra.mxu0 %v1988
        %2096 = vmatprep.subr.mxu0 0.0
        %2097 = vmatpush1.msra.mxu0 %v1989
        %2098 = vmatprep.subr.mxu0 0.0
        %2099 = vmatpush1.msra.mxu0 %v1990
        %2100 = vmatprep.subr.mxu0 0.0
        %2101 = vmatpush1.msra.mxu0 %v1991
        %2102 = vmatprep.subr.mxu0 0.0
        %2103 = vmatpush1.msra.mxu0 %v2092
        %2104 = vmatprep.subr.mxu0 0.0
        %2105 = vmatpush1.msra.mxu0 0.0
        %2106 = vmatprep.subr.mxu0 0.0
        %2107 = vmatpush1.msra.mxu0 0.0
        %2108 = vmatprep.subr.mxu0 0.0
        %2109 = vmatpush1.msra.mxu0 0.0
        %2110 = vmatprep.subr.mxu0 0.0
        %2111 = vmatpush1.msra.mxu0 0.0
        %2112 = vmatprep.subr.mxu0 0.0
        %2113 = vmatpush1.msra.mxu0 0.0
        %2114 = vmatprep.subr.mxu0 0.0
        %2115 = vmatpush1.msra.mxu0 0.0
        %2116 = vmatprep.subr.mxu0 0.0
        %2117 = vmatpush1.msra.mxu0 0.0
        %2118 = vmatprep.subr.mxu0 0.0
        %2119 = vmatpush1.msra.mxu0 0.0
        %2120 = vmatprep.subr.mxu0 0.0
        %2121 = vmatpush1.msra.mxu0 0.0
        %2122 = vmatprep.subr.mxu0 0.0
        %2123 = vmatpush1.msra.mxu0 0.0
        %2124 = vmatprep.subr.mxu0 0.0
        %2125 = vmatpush1.msra.mxu0 0.0
        %2126 = vmatprep.subr.mxu0 0.0
        %2127 = vmatpush1.msra.mxu0 0.0
        %2128 = vmatprep.subr.mxu0 0.0
        %2129 = vmatpush1.msra.mxu0 0.0
        %2130 = vmatprep.subr.mxu0 0.0
        %2131 = vmatpush1.msra.mxu0 0.0
        %2132 = vmatprep.subr.mxu0 0.0
        %2133 = vmatpush1.msra.mxu0 0.0
        %2134 = vmatprep.subr.mxu0 0.0
        %2135 = vmatpush1.msra.mxu0 0.0
        %2136 = vmatprep.subr.mxu0 0.0
        %2137 = vmatpush1.msra.mxu0 0.0
        %2138 = vmatprep.subr.mxu0 0.0
        %2139 = vmatpush1.msra.mxu0 0.0
        %2140 = vmatprep.subr.mxu0 0.0
        %2141 = vmatpush1.msra.mxu0 0.0
        %2142 = vmatprep.subr.mxu0 0.0
        %2143 = vmatpush1.msra.mxu0 0.0
        %2144 = vmatprep.subr.mxu0 0.0
        %2145 = vmatpush1.msra.mxu0 0.0
        %2146 = vmatprep.subr.mxu0 0.0
        %2147 = vmatpush1.msra.mxu0 0.0
        %2148 = vmatprep.subr.mxu0 0.0
        %2149 = vmatpush1.msra.mxu0 0.0
        %2150 = vmatprep.subr.mxu0 0.0
        %2151 = vmatpush1.msra.mxu0 0.0
        %2152 = vmatprep.subr.mxu0 0.0
        %2153 = vmatpush1.msra.mxu0 0.0
        %2154 = vmatprep.subr.mxu0 0.0
        %2155 = vmatpush1.msra.mxu0 0.0
        %2156 = vmatprep.subr.mxu0 0.0
        %2157 = vmatpush1.msra.mxu0 0.0
        %2158 = vmatprep.mubr.f32.mxu0 0.0
        %2159 = vmatmul.mubr.f32.gmra.mrb[0].mxu0 %v1995
        %v2160 = vpop.f32.mrb[0].mxu0
        %v2161 = vadd.f32 0.0, %v2160
        %v2162 = vpop.f32.mrb[0].mxu0
        %2163 = vmatprep.mubr.f32.mxu0 0.0
        %2164 = vmatmul.mubr.f32.gmra.mrb[0].mxu0 %v1998
        %v2165 = vpop.f32.mrb[0].mxu0
        %v2166 = vadd.f32 0.0, %v2165
        %v2167 = vpop.f32.mrb[0].mxu0
        %2168 = vmatprep.mubr.f32.mxu0 0.0
        %2169 = vmatmul.mubr.f32.gmra.mrb[0].mxu0 %v2001
        %v2170 = vpop.f32.mrb[0].mxu0
        %v2171 = vadd.f32 0.0, %v2170
        %v2172 = vpop.f32.mrb[0].mxu0
        %2173 = vmatprep.mubr.f32.mxu0 0.0
        %2174 = vmatmul.mubr.f32.gmra.mrb[0].mxu0 %v2004
        %v2175 = vpop.f32.mrb[0].mxu0
        %v2176 = vadd.f32 0.0, %v2175
        %v2177 = vpop.f32.mrb[0].mxu0
        %2178 = vmatprep.mubr.f32.mxu0 0.0
        %2179 = vmatmul.mubr.f32.gmra.mrb[0].mxu0 %v2007
        %v2180 = vpop.f32.mrb[0].mxu0
        %v2181 = vadd.f32 0.0, %v2180
        %v2182 = vpop.f32.mrb[0].mxu0
        %2183 = vmatprep.mubr.f32.mxu0 0.0
        %2184 = vmatmul.mubr.f32.gmra.mrb[0].mxu0 %v2010
        %v2185 = vpop.f32.mrb[0].mxu0
        %v2186 = vadd.f32 0.0, %v2185
        %v2187 = vpop.f32.mrb[0].mxu0
        %2188 = vmatprep.mubr.f32.mxu0 0.0
        %2189 = vmatmul.mubr.f32.gmra.mrb[0].mxu0 %v2013
        %v2190 = vpop.f32.mrb[0].mxu0
        %v2191 = vadd.f32 0.0, %v2190
        %v2192 = vpop.f32.mrb[0].mxu0
        %2193 = vmatprep.mubr.f32.mxu0 0.0
        %2194 = vmatmul.mubr.f32.gmra.mrb[0].mxu0 %v2016
        %v2195 = vpop.f32.mrb[0].mxu0
        %v2196 = vadd.f32 0.0, %v2195
        %v2197 = vpop.f32.mrb[0].mxu0
        %2198 = vmatprep.mubr.f32.mxu0 0.0
        %2199 = vmatmul.mubr.f32.gmra.mrb[0].mxu0 %v2019
        %v2200 = vpop.f32.mrb[0].mxu0
        %v2201 = vadd.f32 0.0, %v2200
        %v2202 = vpop.f32.mrb[0].mxu0
        %2203 = vmatprep.mubr.f32.mxu0 0.0
        %2204 = vmatmul.mubr.f32.gmra.mrb[0].mxu0 %v2022
        %v2205 = vpop.f32.mrb[0].mxu0
        %v2206 = vadd.f32 0.0, %v2205
        %v2207 = vpop.f32.mrb[0].mxu0
        %2208 = vmatprep.mubr.f32.mxu0 0.0
        %2209 = vmatmul.mubr.f32.gmra.mrb[0].mxu0 %v2025
        %v2210 = vpop.f32.mrb[0].mxu0
        %v2211 = vadd.f32 0.0, %v2210
        %v2212 = vpop.f32.mrb[0].mxu0
        %2213 = vmatprep.mubr.f32.mxu0 0.0
        %2214 = vmatmul.mubr.f32.gmra.mrb[0].mxu0 %v2028
        %v2215 = vpop.f32.mrb[0].mxu0
        %v2216 = vadd.f32 0.0, %v2215
        %v2217 = vpop.f32.mrb[0].mxu0
        %2218 = vmatprep.mubr.f32.mxu0 0.0
        %2219 = vmatmul.mubr.f32.gmra.mrb[0].mxu0 %v2031
        %v2220 = vpop.f32.mrb[0].mxu0
        %v2221 = vadd.f32 0.0, %v2220
        %v2222 = vpop.f32.mrb[0].mxu0
        %2223 = vmatprep.mubr.f32.mxu0 0.0
        %2224 = vmatmul.mubr.f32.gmra.mrb[0].mxu0 %v2034
        %v2225 = vpop.f32.mrb[0].mxu0
        %v2226 = vadd.f32 0.0, %v2225
        %v2227 = vpop.f32.mrb[0].mxu0
        %2228 = vmatprep.mubr.f32.mxu0 0.0
        %2229 = vmatmul.mubr.f32.gmra.mrb[0].mxu0 %v2037
        %v2230 = vpop.f32.mrb[0].mxu0
        %v2231 = vadd.f32 0.0, %v2230
        %v2232 = vpop.f32.mrb[0].mxu0
        %2233 = vmatprep.mubr.f32.mxu0 0.0
        %2234 = vmatmul.mubr.f32.gmra.mrb[0].mxu0 %v2040
        %v2235 = vpop.f32.mrb[0].mxu0
        %v2236 = vadd.f32 0.0, %v2235
        %v2237 = vpop.f32.mrb[0].mxu0
        %2238 = vmatprep.mubr.f32.mxu0 0.0
        %2239 = vmatmul.mubr.f32.gmra.mrb[0].mxu0 %v2043
        %v2240 = vpop.f32.mrb[0].mxu0
        %v2241 = vadd.f32 0.0, %v2240
        %v2242 = vpop.f32.mrb[0].mxu0
        %2243 = vmatprep.mubr.f32.mxu0 0.0
        %2244 = vmatmul.mubr.f32.gmra.mrb[0].mxu0 %v2046
        %v2245 = vpop.f32.mrb[0].mxu0
        %v2246 = vadd.f32 0.0, %v2245
        %v2247 = vpop.f32.mrb[0].mxu0
        %2248 = vmatprep.mubr.f32.mxu0 0.0
        %2249 = vmatmul.mubr.f32.gmra.mrb[0].mxu0 %v2049
        %v2250 = vpop.f32.mrb[0].mxu0
        %v2251 = vadd.f32 0.0, %v2250
        %v2252 = vpop.f32.mrb[0].mxu0
        %2253 = vmatprep.mubr.f32.mxu0 0.0
        %2254 = vmatmul.mubr.f32.gmra.mrb[0].mxu0 %v2052
        %v2255 = vpop.f32.mrb[0].mxu0
        %v2256 = vadd.f32 0.0, %v2255
        %v2257 = vpop.f32.mrb[0].mxu0
        %2258 = vmatprep.mubr.f32.mxu0 0.0
        %2259 = vmatmul.mubr.f32.gmra.mrb[0].mxu0 %v2055
        %v2260 = vpop.f32.mrb[0].mxu0
        %v2261 = vadd.f32 0.0, %v2260
        %v2262 = vpop.f32.mrb[0].mxu0
        %2263 = vmatprep.mubr.f32.mxu0 0.0
        %2264 = vmatmul.mubr.f32.gmra.mrb[0].mxu0 %v2058
        %v2265 = vpop.f32.mrb[0].mxu0
        %v2266 = vadd.f32 0.0, %v2265
        %v2267 = vpop.f32.mrb[0].mxu0
        %2268 = vmatprep.mubr.f32.mxu0 0.0
        %2269 = vmatmul.mubr.f32.gmra.mrb[0].mxu0 %v2061
        %v2270 = vpop.f32.mrb[0].mxu0
        %v2271 = vadd.f32 0.0, %v2270
        %v2272 = vpop.f32.mrb[0].mxu0
        %2273 = vmatprep.mubr.f32.mxu0 0.0
        %2274 = vmatmul.mubr.f32.gmra.mrb[0].mxu0 %v2064
        %v2275 = vpop.f32.mrb[0].mxu0
        %v2276 = vadd.f32 0.0, %v2275
        %v2277 = vpop.f32.mrb[0].mxu0
        %2278 = vmatprep.mubr.f32.mxu0 0.0
        %2279 = vmatmul.mubr.f32.gmra.mrb[0].mxu0 %v2067
        %v2280 = vpop.f32.mrb[0].mxu0
        %v2281 = vadd.f32 0.0, %v2280
        %v2282 = vpop.f32.mrb[0].mxu0
        %2283 = vmatprep.mubr.f32.mxu0 0.0
        %2284 = vmatmul.mubr.f32.gmra.mrb[0].mxu0 %v2070
        %v2285 = vpop.f32.mrb[0].mxu0
        %v2286 = vadd.f32 0.0, %v2285
        %v2287 = vpop.f32.mrb[0].mxu0
        %2288 = vmatprep.mubr.f32.mxu0 0.0
        %2289 = vmatmul.mubr.f32.gmra.mrb[0].mxu0 %v2073
        %v2290 = vpop.f32.mrb[0].mxu0
        %v2291 = vadd.f32 0.0, %v2290
        %v2292 = vpop.f32.mrb[0].mxu0
        %2293 = vmatprep.mubr.f32.mxu0 0.0
        %2294 = vmatmul.mubr.f32.gmra.mrb[0].mxu0 %v2076
        %v2295 = vpop.f32.mrb[0].mxu0
        %v2296 = vadd.f32 0.0, %v2295
        %v2297 = vpop.f32.mrb[0].mxu0
        %2298 = vmatprep.mubr.f32.mxu0 0.0
        %2299 = vmatmul.mubr.f32.gmra.mrb[0].mxu0 %v2079
        %v2300 = vpop.f32.mrb[0].mxu0
        %v2301 = vadd.f32 0.0, %v2300
        %v2302 = vpop.f32.mrb[0].mxu0
        %2303 = vmatprep.mubr.f32.mxu0 0.0
        %2304 = vmatmul.mubr.f32.gmra.mrb[0].mxu0 %v2082
        %v2305 = vpop.f32.mrb[0].mxu0
        %v2306 = vadd.f32 0.0, %v2305
        %v2307 = vpop.f32.mrb[0].mxu0
        %2308 = vmatprep.mubr.f32.mxu0 0.0
        %2309 = vmatmul.mubr.f32.gmra.mrb[0].mxu0 %v2085
        %v2310 = vpop.f32.mrb[0].mxu0
        %v2311 = vadd.f32 0.0, %v2310
        %v2312 = vpop.f32.mrb[0].mxu0
        %2313 = vmatprep.mubr.f32.mxu0 0.0
        %2314 = vmatmul.mubr.f32.gmra.mrb[0].mxu0 %v2088
        %v2315 = vpop.f32.mrb[0].mxu0
        %v2316 = vadd.f32 0.0, %v2315
        %v2317 = vpop.f32.mrb[0].mxu0
        %2318 = vdwg.mxu0
        %v2319 = vld [vmem:[%s2] sm:$0x1]
        %v2320 = vsel %vm1823, %v2161, 0.0
        %v2321 = vsel %vm1823, %v2166, 0.0
        %v2322 = vadd.f32 %v2320, %v2321
        %v2323 = vsel %vm1823, %v2171, 0.0
        %v2324 = vadd.f32 %v2322, %v2323
        %v2325 = vsel %vm1823, %v2176, 0.0
        %v2326 = vadd.f32 %v2324, %v2325
        %v2327 = vsel %vm1823, %v2181, 0.0
        %v2328 = vadd.f32 %v2326, %v2327
        %v2329 = vsel %vm1823, %v2186, 0.0
        %v2330 = vadd.f32 %v2328, %v2329
        %v2331 = vsel %vm1823, %v2191, 0.0
        %v2332 = vadd.f32 %v2330, %v2331
        %v2333 = vsel %vm1823, %v2196, 0.0
        %v2334 = vadd.f32 %v2332, %v2333
        %v2335 = vsel %vm1823, %v2201, 0.0
        %v2336 = vadd.f32 %v2334, %v2335
        %v2337 = vsel %vm1823, %v2206, 0.0
        %v2338 = vadd.f32 %v2336, %v2337
        %v2339 = vsel %vm1823, %v2211, 0.0
        %v2340 = vadd.f32 %v2338, %v2339
        %v2341 = vsel %vm1823, %v2216, 0.0
        %v2342 = vadd.f32 %v2340, %v2341
        %v2343 = vsel %vm1823, %v2221, 0.0
        %v2344 = vadd.f32 %v2342, %v2343
        %v2345 = vsel %vm1823, %v2226, 0.0
        %v2346 = vadd.f32 %v2344, %v2345
        %v2347 = vsel %vm1823, %v2231, 0.0
        %v2348 = vadd.f32 %v2346, %v2347
        %v2349 = vsel %vm1823, %v2236, 0.0
        %v2350 = vadd.f32 %v2348, %v2349
        %v2351 = vsel %vm1823, %v2241, 0.0
        %v2352 = vadd.f32 %v2350, %v2351
        %v2353 = vsel %vm1823, %v2246, 0.0
        %v2354 = vadd.f32 %v2352, %v2353
        %v2355 = vsel %vm1823, %v2251, 0.0
        %v2356 = vadd.f32 %v2354, %v2355
        %v2357 = vsel %vm1823, %v2256, 0.0
        %v2358 = vadd.f32 %v2356, %v2357
        %v2359 = vsel %vm1823, %v2261, 0.0
        %v2360 = vadd.f32 %v2358, %v2359
        %v2361 = vsel %vm1823, %v2266, 0.0
        %v2362 = vadd.f32 %v2360, %v2361
        %v2363 = vsel %vm1823, %v2271, 0.0
        %v2364 = vadd.f32 %v2362, %v2363
        %v2365 = vsel %vm1823, %v2276, 0.0
        %v2366 = vadd.f32 %v2364, %v2365
        %v2367 = vsel %vm1823, %v2281, 0.0
        %v2368 = vadd.f32 %v2366, %v2367
        %v2369 = vsel %vm1823, %v2286, 0.0
        %v2370 = vadd.f32 %v2368, %v2369
        %v2371 = vsel %vm1823, %v2291, 0.0
        %v2372 = vadd.f32 %v2370, %v2371
        %v2373 = vsel %vm1823, %v2296, 0.0
        %v2374 = vadd.f32 %v2372, %v2373
        %v2375 = vsel %vm1823, %v2301, 0.0
        %v2376 = vadd.f32 %v2374, %v2375
        %v2377 = vsel %vm1823, %v2306, 0.0
        %v2378 = vadd.f32 %v2376, %v2377
        %v2379 = vsel %vm1823, %v2311, 0.0
        %v2380 = vadd.f32 %v2378, %v2379
        %v2381 = vsel %vm1823, %v2316, 0.0
        %v2382 = vadd.f32 %v2380, %v2381
        %v2383 = vrot.slane %v2382, 4
        %v2384 = vadd.f32 %v2382, %v2383
        %v2385 = vrot.slane %v2384, 2
        %v2386 = vadd.f32 %v2384, %v2385
        %v2387 = vrot.slane %v2386, 1
        %v2388 = vadd.f32 %v2386, %v2387
        %v2389 = vmul.f32 %v2319, 256.0
        %v2390 = vadd.f32 %v2388, %v2389
        %vm2391 = vcmask 8192
        %v2392 = vsel %vm2391, %v2390, 0.0
        %2393 = vadd.xlane.f32.xlu0 %v2392
        %v2394 = vpop.xlane.xlu0 %2393
        %2396 = vrot.lane.b32.xlu0 %v2390, 126
        %v2397 = vpop.permute.xlu0 %2396
        %v2399 = vsel %vm2391, %v2397, 0.0
        %2400 = vadd.xlane.f32.xlu0 %v2399
        %v2401 = vpop.xlane.xlu0 %2400
        %2402 = vrot.lane.b32.xlu0 %v2390, 124
        %v2403 = vpop.permute.xlu0 %2402
        %v2405 = vsel %vm2391, %v2403, 0.0
        %2406 = vadd.xlane.f32.xlu0 %v2405
        %v2407 = vpop.xlane.xlu0 %2406
        %2408 = vrot.lane.b32.xlu0 %v2390, 122
        %v2409 = vpop.permute.xlu0 %2408
        %v2411 = vsel %vm2391, %v2409, 0.0
        %2412 = vadd.xlane.f32.xlu0 %v2411
        %v2413 = vpop.xlane.xlu0 %2412
        %2414 = vrot.lane.b32.xlu0 %v2390, 120
        %v2415 = vpop.permute.xlu0 %2414
        %v2417 = vsel %vm2391, %v2415, 0.0
        %2418 = vadd.xlane.f32.xlu0 %v2417
        %v2419 = vpop.xlane.xlu0 %2418
        %2420 = vrot.lane.b32.xlu0 %v2390, 118
        %v2421 = vpop.permute.xlu0 %2420
        %v2423 = vsel %vm2391, %v2421, 0.0
        %2424 = vadd.xlane.f32.xlu0 %v2423
        %v2425 = vpop.xlane.xlu0 %2424
        %2426 = vrot.lane.b32.xlu0 %v2390, 116
        %v2427 = vpop.permute.xlu0 %2426
        %v2429 = vsel %vm2391, %v2427, 0.0
        %2430 = vadd.xlane.f32.xlu0 %v2429
        %v2431 = vpop.xlane.xlu0 %2430
        %2432 = vrot.lane.b32.xlu0 %v2390, 114
        %v2433 = vpop.permute.xlu0 %2432
        %v2435 = vsel %vm2391, %v2433, 0.0
        %2436 = vadd.xlane.f32.xlu0 %v2435
        %v2437 = vpop.xlane.xlu0 %2436
        %vm2438 = vcmask 15360
        %v2439 = vsel %vm2438, %v2394, %v2401
        %v2440 = vsel %vm305, %v2439, %v2407
        %vm2441 = vcmask 48128
        %v2442 = vsel %vm2441, %v2440, %v2413
        %v2443 = vsel %vm1757, %v2442, %v2419
        %vm2444 = vcmask 80896
        %v2445 = vsel %vm2444, %v2443, %v2425
        %v2446 = vsel %vm1790, %v2445, %v2431
        %vm2447 = vcmask 113664
        %v2448 = vsel %vm2447, %v2446, %v2437
        %v2449 = vmul.f32 %v2448, 0.001953125
        %v2450 = vsub.f32 %v2319, %v2449
        %v2452 = vlaneseq
        %v2453 = vshrl.u32 %v2452, 7
        %v2454 = vsub.s32 0, %v2453
        %v2455 = vrot.slane %v2450, %v2454
        %v2457 = vadd.f32 %v2161, %v2455
        %v2458 = vadd.f32 %v2166, %v2455
        %v2459 = vadd.f32 %v2171, %v2455
        %v2460 = vadd.f32 %v2176, %v2455
        %v2461 = vadd.f32 %v2181, %v2455
        %v2462 = vadd.f32 %v2186, %v2455
        %v2463 = vadd.f32 %v2191, %v2455
        %v2464 = vadd.f32 %v2196, %v2455
        %v2465 = vadd.f32 %v2201, %v2455
        %v2466 = vadd.f32 %v2206, %v2455
        %v2467 = vadd.f32 %v2211, %v2455
        %v2468 = vadd.f32 %v2216, %v2455
        %v2469 = vadd.f32 %v2221, %v2455
        %v2470 = vadd.f32 %v2226, %v2455
        %v2471 = vadd.f32 %v2231, %v2455
        %v2472 = vadd.f32 %v2236, %v2455
        %v2473 = vadd.f32 %v2241, %v2455
        %v2474 = vadd.f32 %v2246, %v2455
        %v2475 = vadd.f32 %v2251, %v2455
        %v2476 = vadd.f32 %v2256, %v2455
        %v2477 = vadd.f32 %v2261, %v2455
        %v2478 = vadd.f32 %v2266, %v2455
        %v2479 = vadd.f32 %v2271, %v2455
        %v2480 = vadd.f32 %v2276, %v2455
        %v2481 = vadd.f32 %v2281, %v2455
        %v2482 = vadd.f32 %v2286, %v2455
        %v2483 = vadd.f32 %v2291, %v2455
        %v2484 = vadd.f32 %v2296, %v2455
        %v2485 = vadd.f32 %v2301, %v2455
        %v2486 = vadd.f32 %v2306, %v2455
        %v2487 = vadd.f32 %v2311, %v2455
        %v2488 = vadd.f32 %v2316, %v2455
        %v2489 = vmul.f32 %v2457, %v2457
        %v2490 = vmul.f32 %v2458, %v2458
        %v2491 = vmul.f32 %v2459, %v2459
        %v2492 = vmul.f32 %v2460, %v2460
        %v2493 = vmul.f32 %v2461, %v2461
        %v2494 = vmul.f32 %v2462, %v2462
        %v2495 = vmul.f32 %v2463, %v2463
        %v2496 = vmul.f32 %v2464, %v2464
        %v2497 = vmul.f32 %v2465, %v2465
        %v2498 = vmul.f32 %v2466, %v2466
        %v2499 = vmul.f32 %v2467, %v2467
        %v2500 = vmul.f32 %v2468, %v2468
        %v2501 = vmul.f32 %v2469, %v2469
        %v2502 = vmul.f32 %v2470, %v2470
        %v2503 = vmul.f32 %v2471, %v2471
        %v2504 = vmul.f32 %v2472, %v2472
        %v2505 = vmul.f32 %v2473, %v2473
        %v2506 = vmul.f32 %v2474, %v2474
        %v2507 = vmul.f32 %v2475, %v2475
        %v2508 = vmul.f32 %v2476, %v2476
        %v2509 = vmul.f32 %v2477, %v2477
        %v2510 = vmul.f32 %v2478, %v2478
        %v2511 = vmul.f32 %v2479, %v2479
        %v2512 = vmul.f32 %v2480, %v2480
        %v2513 = vmul.f32 %v2481, %v2481
        %v2514 = vmul.f32 %v2482, %v2482
        %v2515 = vmul.f32 %v2483, %v2483
        %v2516 = vmul.f32 %v2484, %v2484
        %v2517 = vmul.f32 %v2485, %v2485
        %v2518 = vmul.f32 %v2486, %v2486
        %v2519 = vmul.f32 %v2487, %v2487
        %v2520 = vmul.f32 %v2488, %v2488
        %v2521 = vsel %vm1823, %v2489, 0.0
        %v2522 = vsel %vm1823, %v2490, 0.0
        %v2523 = vadd.f32 %v2521, %v2522
        %v2524 = vsel %vm1823, %v2491, 0.0
        %v2525 = vadd.f32 %v2523, %v2524
        %v2526 = vsel %vm1823, %v2492, 0.0
        %v2527 = vadd.f32 %v2525, %v2526
        %v2528 = vsel %vm1823, %v2493, 0.0
        %v2529 = vadd.f32 %v2527, %v2528
        %v2530 = vsel %vm1823, %v2494, 0.0
        %v2531 = vadd.f32 %v2529, %v2530
        %v2532 = vsel %vm1823, %v2495, 0.0
        %v2533 = vadd.f32 %v2531, %v2532
        %v2534 = vsel %vm1823, %v2496, 0.0
        %v2535 = vadd.f32 %v2533, %v2534
        %v2536 = vsel %vm1823, %v2497, 0.0
        %v2537 = vadd.f32 %v2535, %v2536
        %v2538 = vsel %vm1823, %v2498, 0.0
        %v2539 = vadd.f32 %v2537, %v2538
        %v2540 = vsel %vm1823, %v2499, 0.0
        %v2541 = vadd.f32 %v2539, %v2540
        %v2542 = vsel %vm1823, %v2500, 0.0
        %v2543 = vadd.f32 %v2541, %v2542
        %v2544 = vsel %vm1823, %v2501, 0.0
        %v2545 = vadd.f32 %v2543, %v2544
        %v2546 = vsel %vm1823, %v2502, 0.0
        %v2547 = vadd.f32 %v2545, %v2546
        %v2548 = vsel %vm1823, %v2503, 0.0
        %v2549 = vadd.f32 %v2547, %v2548
        %v2550 = vsel %vm1823, %v2504, 0.0
        %v2551 = vadd.f32 %v2549, %v2550
        %v2552 = vsel %vm1823, %v2505, 0.0
        %v2553 = vadd.f32 %v2551, %v2552
        %v2554 = vsel %vm1823, %v2506, 0.0
        %v2555 = vadd.f32 %v2553, %v2554
        %v2556 = vsel %vm1823, %v2507, 0.0
        %v2557 = vadd.f32 %v2555, %v2556
        %v2558 = vsel %vm1823, %v2508, 0.0
        %v2559 = vadd.f32 %v2557, %v2558
        %v2560 = vsel %vm1823, %v2509, 0.0
        %v2561 = vadd.f32 %v2559, %v2560
        %v2562 = vsel %vm1823, %v2510, 0.0
        %v2563 = vadd.f32 %v2561, %v2562
        %v2564 = vsel %vm1823, %v2511, 0.0
        %v2565 = vadd.f32 %v2563, %v2564
        %v2566 = vsel %vm1823, %v2512, 0.0
        %v2567 = vadd.f32 %v2565, %v2566
        %v2568 = vsel %vm1823, %v2513, 0.0
        %v2569 = vadd.f32 %v2567, %v2568
        %v2570 = vsel %vm1823, %v2514, 0.0
        %v2571 = vadd.f32 %v2569, %v2570
        %v2572 = vsel %vm1823, %v2515, 0.0
        %v2573 = vadd.f32 %v2571, %v2572
        %v2574 = vsel %vm1823, %v2516, 0.0
        %v2575 = vadd.f32 %v2573, %v2574
        %v2576 = vsel %vm1823, %v2517, 0.0
        %v2577 = vadd.f32 %v2575, %v2576
        %v2578 = vsel %vm1823, %v2518, 0.0
        %v2579 = vadd.f32 %v2577, %v2578
        %v2580 = vsel %vm1823, %v2519, 0.0
        %v2581 = vadd.f32 %v2579, %v2580
        %v2582 = vsel %vm1823, %v2520, 0.0
        %v2583 = vadd.f32 %v2581, %v2582
        %v2584 = vrot.slane %v2583, 4
        %v2585 = vadd.f32 %v2583, %v2584
        %v2586 = vrot.slane %v2585, 2
        %v2587 = vadd.f32 %v2585, %v2586
        %v2588 = vrot.slane %v2587, 1
        %v2589 = vadd.f32 %v2587, %v2588
        %v2590 = vsel %vm2438, %v2589, 0.0
        %2591 = vadd.xlane.f32.xlu0 %v2590
        %v2592 = vpop.xlane.xlu0 %2591
        %2594 = vrot.lane.b32.xlu0 %v2589, 126
        %v2595 = vpop.permute.xlu0 %2594
        %v2597 = vsel %vm2438, %v2595, 0.0
        %2598 = vadd.xlane.f32.xlu0 %v2597
        %v2599 = vpop.xlane.xlu0 %2598
        %2600 = vrot.lane.b32.xlu0 %v2589, 124
        %v2601 = vpop.permute.xlu0 %2600
        %v2603 = vsel %vm2438, %v2601, 0.0
        %2604 = vadd.xlane.f32.xlu0 %v2603
        %v2605 = vpop.xlane.xlu0 %2604
        %2606 = vrot.lane.b32.xlu0 %v2589, 122
        %v2607 = vpop.permute.xlu0 %2606
        %v2609 = vsel %vm2438, %v2607, 0.0
        %2610 = vadd.xlane.f32.xlu0 %v2609
        %v2611 = vpop.xlane.xlu0 %2610
        %2612 = vrot.lane.b32.xlu0 %v2589, 120
        %v2613 = vpop.permute.xlu0 %2612
        %v2615 = vsel %vm2438, %v2613, 0.0
        %2616 = vadd.xlane.f32.xlu0 %v2615
        %v2617 = vpop.xlane.xlu0 %2616
        %2618 = vrot.lane.b32.xlu0 %v2589, 118
        %v2619 = vpop.permute.xlu0 %2618
        %v2621 = vsel %vm2438, %v2619, 0.0
        %2622 = vadd.xlane.f32.xlu0 %v2621
        %v2623 = vpop.xlane.xlu0 %2622
        %2624 = vrot.lane.b32.xlu0 %v2589, 116
        %v2625 = vpop.permute.xlu0 %2624
        %v2627 = vsel %vm2438, %v2625, 0.0
        %2628 = vadd.xlane.f32.xlu0 %v2627
        %v2629 = vpop.xlane.xlu0 %2628
        %2630 = vrot.lane.b32.xlu0 %v2589, 114
        %v2631 = vpop.permute.xlu0 %2630
        %v2633 = vsel %vm2438, %v2631, 0.0
        %2634 = vadd.xlane.f32.xlu0 %v2633
        %v2635 = vpop.xlane.xlu0 %2634
        %v2636 = vsel %vm2438, %v2592, %v2599
        %v2637 = vsel %vm305, %v2636, %v2605
        %v2638 = vsel %vm2441, %v2637, %v2611
        %v2639 = vsel %vm1757, %v2638, %v2617
        %v2640 = vsel %vm2444, %v2639, %v2623
        %v2641 = vsel %vm1790, %v2640, %v2629
        %v2642 = vsel %vm2447, %v2641, %v2635
        %v2643 = vmul.f32 %v2642, 0.001953125
        %v2644 = vld [vmem:[%s3] sm:$0x1]
        %v2645 = vadd.f32 %v2643, 1e-05
        %v2646 = vrsqrt.pop %v2645
        %v2647 = vmul.f32 %v2644, %v2646
        %v2648 = vld [vmem:[%s4] sm:$0x1]
        %v2649 = vld [vmem:[%s301] sm:$0x1]
        %v2650 = vmul.f32 %v2647, %v2649
        %v2651 = vmul.f32 %v2648, %v2649
        %v2652 = vld [vmem:[%s304] sm:$0x1]
        %v2653 = vadd.f32 %v2651, %v2652
        %v2655 = vlaneseq
        %v2656 = vshrl.u32 %v2655, 7
        %v2657 = vsub.s32 0, %v2656
        %v2658 = vrot.slane %v2650, %v2657
        %v2660 = vmul.f32 %v2457, %v2658
        %v2661 = vmul.f32 %v2458, %v2658
        %v2662 = vmul.f32 %v2459, %v2658
        %v2663 = vmul.f32 %v2460, %v2658
        %v2664 = vmul.f32 %v2461, %v2658
        %v2665 = vmul.f32 %v2462, %v2658
        %v2666 = vmul.f32 %v2463, %v2658
        %v2667 = vmul.f32 %v2464, %v2658
        %v2668 = vmul.f32 %v2465, %v2658
        %v2669 = vmul.f32 %v2466, %v2658
        %v2670 = vmul.f32 %v2467, %v2658
        %v2671 = vmul.f32 %v2468, %v2658
        %v2672 = vmul.f32 %v2469, %v2658
        %v2673 = vmul.f32 %v2470, %v2658
        %v2674 = vmul.f32 %v2471, %v2658
        %v2675 = vmul.f32 %v2472, %v2658
        %v2676 = vmul.f32 %v2473, %v2658
        %v2677 = vmul.f32 %v2474, %v2658
        %v2678 = vmul.f32 %v2475, %v2658
        %v2679 = vmul.f32 %v2476, %v2658
        %v2680 = vmul.f32 %v2477, %v2658
        %v2681 = vmul.f32 %v2478, %v2658
        %v2682 = vmul.f32 %v2479, %v2658
        %v2683 = vmul.f32 %v2480, %v2658
        %v2684 = vmul.f32 %v2481, %v2658
        %v2685 = vmul.f32 %v2482, %v2658
        %v2686 = vmul.f32 %v2483, %v2658
        %v2687 = vmul.f32 %v2484, %v2658
        %v2688 = vmul.f32 %v2485, %v2658
        %v2689 = vmul.f32 %v2486, %v2658
        %v2690 = vmul.f32 %v2487, %v2658
        %v2691 = vmul.f32 %v2488, %v2658
        %v2693 = vlaneseq
        %v2694 = vshrl.u32 %v2693, 7
        %v2695 = vsub.s32 0, %v2694
        %v2696 = vrot.slane %v2653, %v2695
        %v2698 = vadd.f32 %v2660, %v2696
        %v2699 = vadd.f32 %v2661, %v2696
        %v2700 = vadd.f32 %v2662, %v2696
        %v2701 = vadd.f32 %v2663, %v2696
        %v2702 = vadd.f32 %v2664, %v2696
        %v2703 = vadd.f32 %v2665, %v2696
        %v2704 = vadd.f32 %v2666, %v2696
        %v2705 = vadd.f32 %v2667, %v2696
        %v2706 = vadd.f32 %v2668, %v2696
        %v2707 = vadd.f32 %v2669, %v2696
        %v2708 = vadd.f32 %v2670, %v2696
        %v2709 = vadd.f32 %v2671, %v2696
        %v2710 = vadd.f32 %v2672, %v2696
        %v2711 = vadd.f32 %v2673, %v2696
        %v2712 = vadd.f32 %v2674, %v2696
        %v2713 = vadd.f32 %v2675, %v2696
        %v2714 = vadd.f32 %v2676, %v2696
        %v2715 = vadd.f32 %v2677, %v2696
        %v2716 = vadd.f32 %v2678, %v2696
        %v2717 = vadd.f32 %v2679, %v2696
        %v2718 = vadd.f32 %v2680, %v2696
        %v2719 = vadd.f32 %v2681, %v2696
        %v2720 = vadd.f32 %v2682, %v2696
        %v2721 = vadd.f32 %v2683, %v2696
        %v2722 = vadd.f32 %v2684, %v2696
        %v2723 = vadd.f32 %v2685, %v2696
        %v2724 = vadd.f32 %v2686, %v2696
        %v2725 = vadd.f32 %v2687, %v2696
        %v2726 = vadd.f32 %v2688, %v2696
        %v2727 = vadd.f32 %v2689, %v2696
        %v2728 = vadd.f32 %v2690, %v2696
        %v2729 = vadd.f32 %v2691, %v2696
        %v2730 = vxor.u32 %v2698, 2147483648
        %v2731 = vxor.u32 %v2699, 2147483648
        %v2732 = vxor.u32 %v2700, 2147483648
        %v2733 = vxor.u32 %v2701, 2147483648
        %v2734 = vxor.u32 %v2702, 2147483648
        %v2735 = vxor.u32 %v2703, 2147483648
        %v2736 = vxor.u32 %v2704, 2147483648
        %v2737 = vxor.u32 %v2705, 2147483648
        %v2738 = vxor.u32 %v2706, 2147483648
        %v2739 = vxor.u32 %v2707, 2147483648
        %v2740 = vxor.u32 %v2708, 2147483648
        %v2741 = vxor.u32 %v2709, 2147483648
        %v2742 = vxor.u32 %v2710, 2147483648
        %v2743 = vxor.u32 %v2711, 2147483648
        %v2744 = vxor.u32 %v2712, 2147483648
        %v2745 = vxor.u32 %v2713, 2147483648
        %v2746 = vxor.u32 %v2714, 2147483648
        %v2747 = vxor.u32 %v2715, 2147483648
        %v2748 = vxor.u32 %v2716, 2147483648
        %v2749 = vxor.u32 %v2717, 2147483648
        %v2750 = vxor.u32 %v2718, 2147483648
        %v2751 = vxor.u32 %v2719, 2147483648
        %v2752 = vxor.u32 %v2720, 2147483648
        %v2753 = vxor.u32 %v2721, 2147483648
        %v2754 = vxor.u32 %v2722, 2147483648
        %v2755 = vxor.u32 %v2723, 2147483648
        %v2756 = vxor.u32 %v2724, 2147483648
        %v2757 = vxor.u32 %v2725, 2147483648
        %v2758 = vxor.u32 %v2726, 2147483648
        %v2759 = vxor.u32 %v2727, 2147483648
        %v2760 = vxor.u32 %v2728, 2147483648
        %v2761 = vxor.u32 %v2729, 2147483648
        %v2762 = vmul.f32 %v2730, 1.442695
        %v2763 = vpow.pop %v2762
        %v2764 = vmul.f32 %v2731, 1.442695
        %v2765 = vpow.pop %v2764
        %v2766 = vmul.f32 %v2732, 1.442695
        %v2767 = vpow.pop %v2766
        %v2768 = vmul.f32 %v2733, 1.442695
        %v2769 = vpow.pop %v2768
        %v2770 = vmul.f32 %v2734, 1.442695
        %v2771 = vpow.pop %v2770
        %v2772 = vmul.f32 %v2735, 1.442695
        %v2773 = vpow.pop %v2772
        %v2774 = vmul.f32 %v2736, 1.442695
        %v2775 = vpow.pop %v2774
        %v2776 = vmul.f32 %v2737, 1.442695
        %v2777 = vpow.pop %v2776
        %v2778 = vmul.f32 %v2738, 1.442695
        %v2779 = vpow.pop %v2778
        %v2780 = vmul.f32 %v2739, 1.442695
        %v2781 = vpow.pop %v2780
        %v2782 = vmul.f32 %v2740, 1.442695
        %v2783 = vpow.pop %v2782
        %v2784 = vmul.f32 %v2741, 1.442695
        %v2785 = vpow.pop %v2784
        %v2786 = vmul.f32 %v2742, 1.442695
        %v2787 = vpow.pop %v2786
        %v2788 = vmul.f32 %v2743, 1.442695
        %v2789 = vpow.pop %v2788
        %v2790 = vmul.f32 %v2744, 1.442695
        %v2791 = vpow.pop %v2790
        %v2792 = vmul.f32 %v2745, 1.442695
        %v2793 = vpow.pop %v2792
        %v2794 = vmul.f32 %v2746, 1.442695
        %v2795 = vpow.pop %v2794
        %v2796 = vmul.f32 %v2747, 1.442695
        %v2797 = vpow.pop %v2796
        %v2798 = vmul.f32 %v2748, 1.442695
        %v2799 = vpow.pop %v2798
        %v2800 = vmul.f32 %v2749, 1.442695
        %v2801 = vpow.pop %v2800
        %v2802 = vmul.f32 %v2750, 1.442695
        %v2803 = vpow.pop %v2802
        %v2804 = vmul.f32 %v2751, 1.442695
        %v2805 = vpow.pop %v2804
        %v2806 = vmul.f32 %v2752, 1.442695
        %v2807 = vpow.pop %v2806
        %v2808 = vmul.f32 %v2753, 1.442695
        %v2809 = vpow.pop %v2808
        %v2810 = vmul.f32 %v2754, 1.442695
        %v2811 = vpow.pop %v2810
        %v2812 = vmul.f32 %v2755, 1.442695
        %v2813 = vpow.pop %v2812
        %v2814 = vmul.f32 %v2756, 1.442695
        %v2815 = vpow.pop %v2814
        %v2816 = vmul.f32 %v2757, 1.442695
        %v2817 = vpow.pop %v2816
        %v2818 = vmul.f32 %v2758, 1.442695
        %v2819 = vpow.pop %v2818
        %v2820 = vmul.f32 %v2759, 1.442695
        %v2821 = vpow.pop %v2820
        %v2822 = vmul.f32 %v2760, 1.442695
        %v2823 = vpow.pop %v2822
        %v2824 = vmul.f32 %v2761, 1.442695
        %v2825 = vpow.pop %v2824
        %v2826 = vadd.f32 %v2763, 1.0
        %v2827 = vadd.f32 %v2765, 1.0
        %v2828 = vadd.f32 %v2767, 1.0
        %v2829 = vadd.f32 %v2769, 1.0
        %v2830 = vadd.f32 %v2771, 1.0
        %v2831 = vadd.f32 %v2773, 1.0
        %v2832 = vadd.f32 %v2775, 1.0
        %v2833 = vadd.f32 %v2777, 1.0
        %v2834 = vadd.f32 %v2779, 1.0
        %v2835 = vadd.f32 %v2781, 1.0
        %v2836 = vadd.f32 %v2783, 1.0
        %v2837 = vadd.f32 %v2785, 1.0
        %v2838 = vadd.f32 %v2787, 1.0
        %v2839 = vadd.f32 %v2789, 1.0
        %v2840 = vadd.f32 %v2791, 1.0
        %v2841 = vadd.f32 %v2793, 1.0
        %v2842 = vadd.f32 %v2795, 1.0
        %v2843 = vadd.f32 %v2797, 1.0
        %v2844 = vadd.f32 %v2799, 1.0
        %v2845 = vadd.f32 %v2801, 1.0
        %v2846 = vadd.f32 %v2803, 1.0
        %v2847 = vadd.f32 %v2805, 1.0
        %v2848 = vadd.f32 %v2807, 1.0
        %v2849 = vadd.f32 %v2809, 1.0
        %v2850 = vadd.f32 %v2811, 1.0
        %v2851 = vadd.f32 %v2813, 1.0
        %v2852 = vadd.f32 %v2815, 1.0
        %v2853 = vadd.f32 %v2817, 1.0
        %v2854 = vadd.f32 %v2819, 1.0
        %v2855 = vadd.f32 %v2821, 1.0
        %v2856 = vadd.f32 %v2823, 1.0
        %v2857 = vadd.f32 %v2825, 1.0
        %v2858 = vrcp.pop %v2826
        %v2859 = vmul.f32 1.0, %v2858
        %v2860 = vrcp.pop %v2827
        %v2861 = vmul.f32 1.0, %v2860
        %v2862 = vrcp.pop %v2828
        %v2863 = vmul.f32 1.0, %v2862
        %v2864 = vrcp.pop %v2829
        %v2865 = vmul.f32 1.0, %v2864
        %v2866 = vrcp.pop %v2830
        %v2867 = vmul.f32 1.0, %v2866
        %v2868 = vrcp.pop %v2831
        %v2869 = vmul.f32 1.0, %v2868
        %v2870 = vrcp.pop %v2832
        %v2871 = vmul.f32 1.0, %v2870
        %v2872 = vrcp.pop %v2833
        %v2873 = vmul.f32 1.0, %v2872
        %v2874 = vrcp.pop %v2834
        %v2875 = vmul.f32 1.0, %v2874
        %v2876 = vrcp.pop %v2835
        %v2877 = vmul.f32 1.0, %v2876
        %v2878 = vrcp.pop %v2836
        %v2879 = vmul.f32 1.0, %v2878
        %v2880 = vrcp.pop %v2837
        %v2881 = vmul.f32 1.0, %v2880
        %v2882 = vrcp.pop %v2838
        %v2883 = vmul.f32 1.0, %v2882
        %v2884 = vrcp.pop %v2839
        %v2885 = vmul.f32 1.0, %v2884
        %v2886 = vrcp.pop %v2840
        %v2887 = vmul.f32 1.0, %v2886
        %v2888 = vrcp.pop %v2841
        %v2889 = vmul.f32 1.0, %v2888
        %v2890 = vrcp.pop %v2842
        %v2891 = vmul.f32 1.0, %v2890
        %v2892 = vrcp.pop %v2843
        %v2893 = vmul.f32 1.0, %v2892
        %v2894 = vrcp.pop %v2844
        %v2895 = vmul.f32 1.0, %v2894
        %v2896 = vrcp.pop %v2845
        %v2897 = vmul.f32 1.0, %v2896
        %v2898 = vrcp.pop %v2846
        %v2899 = vmul.f32 1.0, %v2898
        %v2900 = vrcp.pop %v2847
        %v2901 = vmul.f32 1.0, %v2900
        %v2902 = vrcp.pop %v2848
        %v2903 = vmul.f32 1.0, %v2902
        %v2904 = vrcp.pop %v2849
        %v2905 = vmul.f32 1.0, %v2904
        %v2906 = vrcp.pop %v2850
        %v2907 = vmul.f32 1.0, %v2906
        %v2908 = vrcp.pop %v2851
        %v2909 = vmul.f32 1.0, %v2908
        %v2910 = vrcp.pop %v2852
        %v2911 = vmul.f32 1.0, %v2910
        %v2912 = vrcp.pop %v2853
        %v2913 = vmul.f32 1.0, %v2912
        %v2914 = vrcp.pop %v2854
        %v2915 = vmul.f32 1.0, %v2914
        %v2916 = vrcp.pop %v2855
        %v2917 = vmul.f32 1.0, %v2916
        %v2918 = vrcp.pop %v2856
        %v2919 = vmul.f32 1.0, %v2918
        %v2920 = vrcp.pop %v2857
        %v2921 = vmul.f32 1.0, %v2920
        %v2922 = vmul.f32 %v2698, %v2859
        %v2923 = vmul.f32 %v2699, %v2861
        %v2924 = vmul.f32 %v2700, %v2863
        %v2925 = vmul.f32 %v2701, %v2865
        %v2926 = vmul.f32 %v2702, %v2867
        %v2927 = vmul.f32 %v2703, %v2869
        %v2928 = vmul.f32 %v2704, %v2871
        %v2929 = vmul.f32 %v2705, %v2873
        %v2930 = vmul.f32 %v2706, %v2875
        %v2931 = vmul.f32 %v2707, %v2877
        %v2932 = vmul.f32 %v2708, %v2879
        %v2933 = vmul.f32 %v2709, %v2881
        %v2934 = vmul.f32 %v2710, %v2883
        %v2935 = vmul.f32 %v2711, %v2885
        %v2936 = vmul.f32 %v2712, %v2887
        %v2937 = vmul.f32 %v2713, %v2889
        %v2938 = vmul.f32 %v2714, %v2891
        %v2939 = vmul.f32 %v2715, %v2893
        %v2940 = vmul.f32 %v2716, %v2895
        %v2941 = vmul.f32 %v2717, %v2897
        %v2942 = vmul.f32 %v2718, %v2899
        %v2943 = vmul.f32 %v2719, %v2901
        %v2944 = vmul.f32 %v2720, %v2903
        %v2945 = vmul.f32 %v2721, %v2905
        %v2946 = vmul.f32 %v2722, %v2907
        %v2947 = vmul.f32 %v2723, %v2909
        %v2948 = vmul.f32 %v2724, %v2911
        %v2949 = vmul.f32 %v2725, %v2913
        %v2950 = vmul.f32 %v2726, %v2915
        %v2951 = vmul.f32 %v2727, %v2917
        %v2952 = vmul.f32 %v2728, %v2919
        %v2953 = vmul.f32 %v2729, %v2921
        %2954 = vxpose.xlu0.b32.start [1/16] %v2922, 128
        %2955 = vxpose.xlu0.b32.cont [2/16] %v2923, 128
        %2956 = vxpose.xlu0.b32.cont [3/16] %v2924, 128
        %2957 = vxpose.xlu0.b32.cont [4/16] %v2925, 128
        %2958 = vxpose.xlu0.b32.cont [5/16] %v2926, 128
        %2959 = vxpose.xlu0.b32.cont [6/16] %v2927, 128
        %2960 = vxpose.xlu0.b32.cont [7/16] %v2928, 128
        %2961 = vxpose.xlu0.b32.cont [8/16] %v2929, 128
        %2962 = vxpose.xlu0.b32.cont [9/16] %v2930, 128
        %2963 = vxpose.xlu0.b32.cont [10/16] %v2931, 128
        %2964 = vxpose.xlu0.b32.cont [11/16] %v2932, 128
        %2965 = vxpose.xlu0.b32.cont [12/16] %v2933, 128
        %2966 = vxpose.xlu0.b32.cont [13/16] %v2934, 128
        %2967 = vxpose.xlu0.b32.cont [14/16] %v2935, 128
        %2968 = vxpose.xlu0.b32.cont [15/16] %v2936, 128
        %2969 = vxpose.xlu0.b32.end [16/16] %v2937, 128
        %v2970 = vpop.trf.xlu0
        %v2971 = vpop.trf.xlu0
        %v2972 = vpop.trf.xlu0
        %v2973 = vpop.trf.xlu0
        %v2974 = vpop.trf.xlu0
        %v2975 = vpop.trf.xlu0
        %v2976 = vpop.trf.xlu0
        %v2977 = vpop.trf.xlu0
        %v2978 = vpop.trf.xlu0
        %v2979 = vpop.trf.xlu0
        %v2980 = vpop.trf.xlu0
        %v2981 = vpop.trf.xlu0
        %v2982 = vpop.trf.xlu0
        %v2983 = vpop.trf.xlu0
        %v2984 = vpop.trf.xlu0
        %v2985 = vpop.trf.xlu0
        %2986 = vxpose.xlu0.b32.start [1/16] %v2938, 128
        %2987 = vxpose.xlu0.b32.cont [2/16] %v2939, 128
        %2988 = vxpose.xlu0.b32.cont [3/16] %v2940, 128
        %2989 = vxpose.xlu0.b32.cont [4/16] %v2941, 128
        %2990 = vxpose.xlu0.b32.cont [5/16] %v2942, 128
        %2991 = vxpose.xlu0.b32.cont [6/16] %v2943, 128
        %2992 = vxpose.xlu0.b32.cont [7/16] %v2944, 128
        %2993 = vxpose.xlu0.b32.cont [8/16] %v2945, 128
        %2994 = vxpose.xlu0.b32.cont [9/16] %v2946, 128
        %2995 = vxpose.xlu0.b32.cont [10/16] %v2947, 128
        %2996 = vxpose.xlu0.b32.cont [11/16] %v2948, 128
        %2997 = vxpose.xlu0.b32.cont [12/16] %v2949, 128
        %2998 = vxpose.xlu0.b32.cont [13/16] %v2950, 128
        %2999 = vxpose.xlu0.b32.cont [14/16] %v2951, 128
        %3000 = vxpose.xlu0.b32.cont [15/16] %v2952, 128
        %3001 = vxpose.xlu0.b32.end [16/16] %v2953, 128
        %v3002 = vpop.trf.xlu0
        %v3003 = vpop.trf.xlu0
        %v3004 = vpop.trf.xlu0
        %v3005 = vpop.trf.xlu0
        %v3006 = vpop.trf.xlu0
        %v3007 = vpop.trf.xlu0
        %v3008 = vpop.trf.xlu0
        %v3009 = vpop.trf.xlu0
        %v3010 = vpop.trf.xlu0
        %v3011 = vpop.trf.xlu0
        %v3012 = vpop.trf.xlu0
        %v3013 = vpop.trf.xlu0
        %v3014 = vpop.trf.xlu0
        %v3015 = vpop.trf.xlu0
        %v3016 = vpop.trf.xlu0
        %v3017 = vpop.trf.xlu0
        %3018 = vst [vmem:[%s293] sm:$0xff] %v2970
        %3019 = vst [vmem:[%s293 + $0x8] sm:$0xff] %v3002
        %3020 = vst [vmem:[%s293 + $0x10] sm:$0xff] %v2971
        %3021 = vst [vmem:[%s293 + $0x18] sm:$0xff] %v3003
        %s3022 = sand.u32 %s191, 1
        %s3023 = scalar_lea.sflag [#allocation4], %s3022
        %s3024 = sand.u32 %s191, 1
        %s3025 = smul.addr %s3024, 32
        %s3026 = scalar_lea.vmem [#allocation3], %s3025
        // Predicated region
        $region49: #{tpu_custom_call.1} parent=47 // pred_check
          %p3027 = pneg %p201
        $region50: #{tpu_custom_call.1} parent=47 // pred_check_branch
          %3029 = sbr.rel (%p3027) target = $region52
        $region51: #{tpu_custom_call.1} parent=47 // pred_region
          %s3031 = ssub.s32 512, 512
          %3032 = vsyncadd %s3023, %s3031
          %s3033 = smul.addr %s21, 4
          %s3034 = smul.addr %s3033, 128
          %s3035 = scalar_lea.hbm %s7, %s3034
          %s3036 = sshll.u32 %s3026, 4
          %s3037 = int_to_ptr.vmem [resolvable:$true] %s3036
          %3042 = dma.vmem_to_hbm [thread:$0]  %s3037, 512, %s3035, %s3023, 256, 256, 16
        $region52: #{tpu_custom_call.1} parent=47 // pred_fallthru
          _
      $region48: #{tpu_custom_call.1} parent=5 // pred_fallthru
        _
      %p3043 = scmp.le.s32.totalorder 2, %s16
      // Predicated region
      $region53: #{tpu_custom_call.1} parent=5 // pred_check
        %p3044 = pneg %p3043
      $region54: #{tpu_custom_call.1} parent=5 // pred_check_branch
        %3046 = sbr.rel (%p3044) target = $region56
      $region55: #{tpu_custom_call.1} parent=5 // pred_region
        %s3047 = ssub.s32 %s16, 2
        // Predicated region
        $region57: #{tpu_custom_call.1} parent=55 // pred_check
          %p3048 = pneg %p207
        $region58: #{tpu_custom_call.1} parent=55 // pred_check_branch
          %3050 = sbr.rel (%p3048) target = $region60
        $region59: #{tpu_custom_call.1} parent=55 // pred_region
          %s3051 = sand.u32 %s192, 1
          %s3052 = scalar_lea.sflag [#allocation4], %s3051
          %s3053 = sand.u32 %s192, 1
          %s3054 = smul.addr %s3053, 32
          %s3055 = scalar_lea.vmem [#allocation3], %s3054
          %3056 = dma.done %s3052, 512
        $region60: #{tpu_custom_call.1} parent=55 // pred_fallthru
          _
      $region56: #{tpu_custom_call.1} parent=5 // pred_fallthru
        _
    $region6: #{tpu_custom_call.1} parent=1 // loop_footer
      %s20 = sadd.s32 1, %s16
    $region7: #{tpu_custom_call.1} parent=1 // loop_footer_branch
      %15 = sbr.rel target = $region3
    $region8: #{tpu_custom_call.1} parent=1 // loop_exit
      _
    %3057 = vsyncpa [#allocation4], 1
    %s3058 = scalar_lea.sflag [#allocation4], 1
    %3059 = vsyncpa %s3058, 1

// kernel: tpu_custom_call.1
$region0: #{tpu_custom_call.1}
  #allocation0 [shape = 'u32[]', space=smem, size = 0x4, offset = 0x4, fixed_abs, tag = 'smem constant byte address 0x4 - core index']
  #allocation1 [shape = 'u32[144,128]{1,0:T(1,128)}', space=vmem, size = 0x12000, scoped, tag = 'internal scratch']
  #allocation2 [shape = 'f32[18,18,4]{2,1,0:T(8,128)}', space=vmem, size = 0x36000, scoped, tag = 'scratch operand']
  %s0 = inlined_call_operand.vmem [shape: f32[2,16,16,4], index: 0, kind: input, shape index: {}]
  %s1 = inlined_call_operand.vmem [shape: f32[36,16], index: 1, kind: input, shape index: {}]
  %s2 = inlined_call_operand.vmem [shape: f32[1,16], index: 2, kind: input, shape index: {}]
  %s3 = inlined_call_operand.vmem [shape: f32[1,16], index: 3, kind: input, shape index: {}]
  %s4 = inlined_call_operand.vmem [shape: f32[1,16], index: 4, kind: input, shape index: {}]
  %s5 = inlined_call_operand.vmem [shape: f32[2,1,16], index: 5, kind: input, shape index: {}]
  %s6 = inlined_call_operand.vmem [shape: f32[2,1,16], index: 6, kind: input, shape index: {}]
  %s7 = inlined_call_operand.hbm [shape: f32[2,16,16,16], index: 7, kind: output, shape index: {}]
  %s8 = sld [smem:[#allocation0]]
  $region61: #{tpu_custom_call.1} parent=0
    _
  %s10 = ssub.s32 1, %s8
  %s11 = scalar_select 0, %s10, %s8
  $region1: #{tpu_custom_call.1} parent=0
    #allocation3 [shape = 'u8[262144]{0}', space=vmem, size = 0x40000, scoped, tag = 'output window, operand 0']
    #allocation4 [shape = 's32[2]{0}', space=sflag, size = 0x8, scoped, tag = 'scoped memory for tpu_custom_call.1']
    %12 = vsyncpa [#allocation4], 0
    %s13 = scalar_lea.sflag [#allocation4], 1
    %14 = vsyncpa %s13, 0
    loop: start=0, step=1, limit=4
    $region2: #{tpu_custom_call.1} parent=1 // loop_pre_header
      _
    $region3: #{tpu_custom_call.1} parent=1 // loop_header
      %s16 = sphi 0, %s20
      %p17 = scmp.ge.s32.totalorder %s16, 4
      %s26 = sphi 0, %s28
      %s29 = sphi 0, %s26
      %s30 = sphi 0, %s29
      %s46 = sphi 0, %s30
      %s50 = sphi 0, %s50
      %s52 = sphi 0, %s50
      %s53 = sphi 0, %s52
      %s67 = sphi 0, %s53
      %s71 = sphi 0, %s71
      %s73 = sphi 0, %s71
      %s74 = sphi 0, %s73
      %s88 = sphi 0, %s74
      %s92 = sphi 0, %s92
      %s94 = sphi 0, %s92
      %s95 = sphi 0, %s94
      %s109 = sphi 0, %s95
      %s113 = sphi 0, %s113
      %s115 = sphi 0, %s113
      %s116 = sphi 0, %s115
      %s130 = sphi 0, %s116
      %s136 = sphi 0, %s138
      %s139 = sphi 0, %s136
      %s140 = sphi 0, %s139
      %s156 = sphi 0, %s140
      %s162 = sphi 0, %s164
      %s165 = sphi 0, %s162
      %s166 = sphi 0, %s165
      %s182 = sphi 0, %s166
      %s188 = sphi 0, %s190
      %s191 = sphi 0, %s188
      %s192 = sphi 0, %s191
      %s208 = sphi 0, %s192
    $region4: #{tpu_custom_call.1} parent=1 // loop_header_branch
      %19 = sbr.rel (%p17) target = $region8
    $region5: #{tpu_custom_call.1} parent=1 // loop_body
      %s21 = ssub.s32 %s16, 1
      %s22 = ssub.s32 %s16, 2
      %s23 = sadd.s32 %s16, 1
      %s24 = ssub.s32 %s16, %s23
      %p25 = scmp.eq.s32.totalorder %s24, 0
      %s27 = sadd.s32 %s26, 1
      %s28 = scalar_select %p25, %s26, %s27
      %p31 = pneg %p25
      %p32 = scmp.eq.s32.totalorder %s16, 1
      %p33 = por %p31, %p32
      %p34 = scmp.ne.s32.totalorder %s26, %s29
      %p35 = scmp.eq.s32.totalorder %s16, 0
      %p36 = por %p34, %p35
      %p37 = scmp.ne.s32.totalorder %s26, %s29
      %p38 = scmp.eq.s32.totalorder %s21, 1
      %p39 = por %p37, %p38
      %p40 = scmp.ne.s32.totalorder %s29, %s30
      %p41 = scmp.eq.s32.totalorder %s21, 0
      %p42 = por %p40, %p41
      %p43 = scmp.ne.s32.totalorder %s29, %s30
      %p44 = scmp.eq.s32.totalorder %s22, 1
      %p45 = por %p43, %p44
      %p47 = scmp.ne.s32.totalorder %s30, %s46
      %p48 = scmp.eq.s32.totalorder %s22, 0
      %p49 = por %p47, %p48
      %s51 = sadd.s32 %s50, 1
      %p54 = scmp.eq.s32.totalorder %s16, 1
      %p55 = scmp.ne.s32.totalorder %s50, %s52
      %p56 = scmp.eq.s32.totalorder %s16, 0
      %p57 = por %p55, %p56
      %p58 = scmp.ne.s32.totalorder %s50, %s52
      %p59 = scmp.eq.s32.totalorder %s21, 1
      %p60 = por %p58, %p59
      %p61 = scmp.ne.s32.totalorder %s52, %s53
      %p62 = scmp.eq.s32.totalorder %s21, 0
      %p63 = por %p61, %p62
      %p64 = scmp.ne.s32.totalorder %s52, %s53
      %p65 = scmp.eq.s32.totalorder %s22, 1
      %p66 = por %p64, %p65
      %p68 = scmp.ne.s32.totalorder %s53, %s67
      %p69 = scmp.eq.s32.totalorder %s22, 0
      %p70 = por %p68, %p69
      %s72 = sadd.s32 %s71, 1
      %p75 = scmp.eq.s32.totalorder %s16, 1
      %p76 = scmp.ne.s32.totalorder %s71, %s73
      %p77 = scmp.eq.s32.totalorder %s16, 0
      %p78 = por %p76, %p77
      %p79 = scmp.ne.s32.totalorder %s71, %s73
      %p80 = scmp.eq.s32.totalorder %s21, 1
      %p81 = por %p79, %p80
      %p82 = scmp.ne.s32.totalorder %s73, %s74
      %p83 = scmp.eq.s32.totalorder %s21, 0
      %p84 = por %p82, %p83
      %p85 = scmp.ne.s32.totalorder %s73, %s74
      %p86 = scmp.eq.s32.totalorder %s22, 1
      %p87 = por %p85, %p86
      %p89 = scmp.ne.s32.totalorder %s74, %s88
      %p90 = scmp.eq.s32.totalorder %s22, 0
      %p91 = por %p89, %p90
      %s93 = sadd.s32 %s92, 1
      %p96 = scmp.eq.s32.totalorder %s16, 1
      %p97 = scmp.ne.s32.totalorder %s92, %s94
      %p98 = scmp.eq.s32.totalorder %s16, 0
      %p99 = por %p97, %p98
      %p100 = scmp.ne.s32.totalorder %s92, %s94
      %p101 = scmp.eq.s32.totalorder %s21, 1
      %p102 = por %p100, %p101
      %p103 = scmp.ne.s32.totalorder %s94, %s95
      %p104 = scmp.eq.s32.totalorder %s21, 0
      %p105 = por %p103, %p104
      %p106 = scmp.ne.s32.totalorder %s94, %s95
      %p107 = scmp.eq.s32.totalorder %s22, 1
      %p108 = por %p106, %p107
      %p110 = scmp.ne.s32.totalorder %s95, %s109
      %p111 = scmp.eq.s32.totalorder %s22, 0
      %p112 = por %p110, %p111
      %s114 = sadd.s32 %s113, 1
      %p117 = scmp.eq.s32.totalorder %s16, 1
      %p118 = scmp.ne.s32.totalorder %s113, %s115
      %p119 = scmp.eq.s32.totalorder %s16, 0
      %p120 = por %p118, %p119
      %p121 = scmp.ne.s32.totalorder %s113, %s115
      %p122 = scmp.eq.s32.totalorder %s21, 1
      %p123 = por %p121, %p122
      %p124 = scmp.ne.s32.totalorder %s115, %s116
      %p125 = scmp.eq.s32.totalorder %s21, 0
      %p126 = por %p124, %p125
      %p127 = scmp.ne.s32.totalorder %s115, %s116
      %p128 = scmp.eq.s32.totalorder %s22, 1
      %p129 = por %p127, %p128
      %p131 = scmp.ne.s32.totalorder %s116, %s130
      %p132 = scmp.eq.s32.totalorder %s22, 0
      %p133 = por %p131, %p132
      %s134 = ssub.s32 %s16, %s23
      %p135 = scmp.eq.s32.totalorder %s134, 0
      %s137 = sadd.s32 %s136, 1
      %s138 = scalar_select %p135, %s136, %s137
      %p141 = pneg %p135
      %p142 = scmp.eq.s32.totalorder %s16, 1
      %p143 = por %p141, %p142
      %p144 = scmp.ne.s32.totalorder %s136, %s139
      %p145 = scmp.eq.s32.totalorder %s16, 0
      %p146 = por %p144, %p145
      %p147 = scmp.ne.s32.totalorder %s136, %s139
      %p148 = scmp.eq.s32.totalorder %s21, 1
      %p149 = por %p147, %p148
      %p150 = scmp.ne.s32.totalorder %s139, %s140
      %p151 = scmp.eq.s32.totalorder %s21, 0
      %p152 = por %p150, %p151
      %p153 = scmp.ne.s32.totalorder %s139, %s140
      %p154 = scmp.eq.s32.totalorder %s22, 1
      %p155 = por %p153, %p154
      %p157 = scmp.ne.s32.totalorder %s140, %s156
      %p158 = scmp.eq.s32.totalorder %s22, 0
      %p159 = por %p157, %p158
      %s160 = ssub.s32 %s16, %s23
      %p161 = scmp.eq.s32.totalorder %s160, 0
      %s163 = sadd.s32 %s162, 1
      %s164 = scalar_select %p161, %s162, %s163
      %p167 = pneg %p161
      %p168 = scmp.eq.s32.totalorder %s16, 1
      %p169 = por %p167, %p168
      %p170 = scmp.ne.s32.totalorder %s162, %s165
      %p171 = scmp.eq.s32.totalorder %s16, 0
      %p172 = por %p170, %p171
      %p173 = scmp.ne.s32.totalorder %s162, %s165
      %p174 = scmp.eq.s32.totalorder %s21, 1
      %p175 = por %p173, %p174
      %p176 = scmp.ne.s32.totalorder %s165, %s166
      %p177 = scmp.eq.s32.totalorder %s21, 0
      %p178 = por %p176, %p177
      %p179 = scmp.ne.s32.totalorder %s165, %s166
      %p180 = scmp.eq.s32.totalorder %s22, 1
      %p181 = por %p179, %p180
      %p183 = scmp.ne.s32.totalorder %s166, %s182
      %p184 = scmp.eq.s32.totalorder %s22, 0
      %p185 = por %p183, %p184
      %s186 = ssub.s32 %s16, %s23
      %p187 = scmp.eq.s32.totalorder %s186, 0
      %s189 = sadd.s32 %s188, 1
      %s190 = scalar_select %p187, %s188, %s189
      %p193 = pneg %p187
      %p194 = scmp.eq.s32.totalorder %s16, 1
      %p195 = por %p193, %p194
      %p196 = scmp.ne.s32.totalorder %s188, %s191
      %p197 = scmp.eq.s32.totalorder %s16, 0
      %p198 = por %p196, %p197
      %p199 = scmp.ne.s32.totalorder %s188, %s191
      %p200 = scmp.eq.s32.totalorder %s21, 1
      %p201 = por %p199, %p200
      %p202 = scmp.ne.s32.totalorder %s191, %s192
      %p203 = scmp.eq.s32.totalorder %s21, 0
      %p204 = por %p202, %p203
      %p205 = scmp.ne.s32.totalorder %s191, %s192
      %p206 = scmp.eq.s32.totalorder %s22, 1
      %p207 = por %p205, %p206
      %p209 = scmp.ne.s32.totalorder %s192, %s208
      %p210 = scmp.eq.s32.totalorder %s22, 0
      %p211 = por %p209, %p210
      %p212 = scmp.le.s32.totalorder 1, %s16
      %p213 = scmp.lt.s32.totalorder %s16, 3
      %p214 = pnand %p212, %p213
      %p215 = pneg %p214
      // Predicated region
      $region9: #{tpu_custom_call.1} parent=5 // pred_check
        _
      $region10: #{tpu_custom_call.1} parent=5 // pred_check_branch
        %217 = sbr.rel (%p214) target = $region12
      $region11: #{tpu_custom_call.1} parent=5 // pred_region
        %s218 = ssub.s32 %s16, 1
        // Predicated region
        $region13: #{tpu_custom_call.1} parent=11 // pred_check
          %p219 = pneg %p63
        $region14: #{tpu_custom_call.1} parent=11 // pred_check_branch
          %221 = sbr.rel (%p219) target = $region16
        $region15: #{tpu_custom_call.1} parent=11 // pred_region
          _
        $region16: #{tpu_custom_call.1} parent=11 // pred_fallthru
          _
        // Predicated region
        $region17: #{tpu_custom_call.1} parent=11 // pred_check
          %p222 = pneg %p84
        $region18: #{tpu_custom_call.1} parent=11 // pred_check_branch
          %224 = sbr.rel (%p222) target = $region20
        $region19: #{tpu_custom_call.1} parent=11 // pred_region
          _
        $region20: #{tpu_custom_call.1} parent=11 // pred_fallthru
          _
        // Predicated region
        $region21: #{tpu_custom_call.1} parent=11 // pred_check
          %p225 = pneg %p105
        $region22: #{tpu_custom_call.1} parent=11 // pred_check_branch
          %227 = sbr.rel (%p225) target = $region24
        $region23: #{tpu_custom_call.1} parent=11 // pred_region
          _
        $region24: #{tpu_custom_call.1} parent=11 // pred_fallthru
          _
        // Predicated region
        $region25: #{tpu_custom_call.1} parent=11 // pred_check
          %p228 = pneg %p126
        $region26: #{tpu_custom_call.1} parent=11 // pred_check_branch
          %230 = sbr.rel (%p228) target = $region28
        $region27: #{tpu_custom_call.1} parent=11 // pred_region
          _
        $region28: #{tpu_custom_call.1} parent=11 // pred_fallthru
          _
      $region12: #{tpu_custom_call.1} parent=5 // pred_fallthru
        _
      %p231 = scmp.lt.s32.totalorder %s16, 2
      // Predicated region
      $region29: #{tpu_custom_call.1} parent=5 // pred_check
        %p232 = pneg %p231
      $region30: #{tpu_custom_call.1} parent=5 // pred_check_branch
        %234 = sbr.rel (%p232) target = $region32
      $region31: #{tpu_custom_call.1} parent=5 // pred_region
        // Predicated region
        $region33: #{tpu_custom_call.1} parent=31 // pred_check
          %p235 = pneg %p36
        $region34: #{tpu_custom_call.1} parent=31 // pred_check_branch
          %237 = sbr.rel (%p235) target = $region36
        $region35: #{tpu_custom_call.1} parent=31 // pred_region
          %p238 = scmp.lt.s32.totalorder %s16, 1
          %s239 = scalar_select %p238, %s16, 1
          %s240 = smul.addr %s239, 32
          %s241 = smul.addr %s240, 8
          %s242 = scalar_lea.vmem %s0, %s241
        $region36: #{tpu_custom_call.1} parent=31 // pred_fallthru
          _
        // Predicated region
        $region37: #{tpu_custom_call.1} parent=31 // pred_check
          %p243 = pneg %p146
        $region38: #{tpu_custom_call.1} parent=31 // pred_check_branch
          %245 = sbr.rel (%p243) target = $region40
        $region39: #{tpu_custom_call.1} parent=31 // pred_region
          %p246 = scmp.lt.s32.totalorder %s16, 1
          %s247 = scalar_select %p246, %s16, 1
          %s248 = scalar_lea.vmem %s5, %s247
        $region40: #{tpu_custom_call.1} parent=31 // pred_fallthru
          _
        // Predicated region
        $region41: #{tpu_custom_call.1} parent=31 // pred_check
          %p249 = pneg %p172
        $region42: #{tpu_custom_call.1} parent=31 // pred_check_branch
          %251 = sbr.rel (%p249) target = $region44
        $region43: #{tpu_custom_call.1} parent=31 // pred_region
          %p252 = scmp.lt.s32.totalorder %s16, 1
          %s253 = scalar_select %p252, %s16, 1
          %s254 = scalar_lea.vmem %s6, %s253
        $region44: #{tpu_custom_call.1} parent=31 // pred_fallthru
          _
      $region32: #{tpu_custom_call.1} parent=5 // pred_fallthru
        _
      %p255 = scmp.le.s32.totalorder 1, %s16
      %p256 = scmp.lt.s32.totalorder %s16, 3
      %p257 = pnand %p255, %p256
      %p258 = pneg %p257
      // Predicated region
      $region45: #{tpu_custom_call.1} parent=5 // pred_check
        _
      $region46: #{tpu_custom_call.1} parent=5 // pred_check_branch
        %260 = sbr.rel (%p257) target = $region48
      $region47: #{tpu_custom_call.1} parent=5 // pred_region
        %s261 = ssub.s32 %s16, 1
        %p262 = scmp.lt.s32.totalorder %s21, 1
        %s263 = scalar_select %p262, %s21, 1
        %s264 = smul.addr %s263, 32
        %s265 = smul.addr %s264, 8
        %s266 = scalar_lea.vmem %s0, %s265
        %p267 = pneg %p42
        %p268 = pneg %p39
        %p269 = pneg %p63
        %p270 = pneg %p60
        %p271 = pneg %p84
        %p272 = pneg %p81
        %p273 = pneg %p105
        %p274 = pneg %p102
        %p275 = pneg %p126
        %p276 = pneg %p123
        %p277 = scmp.lt.s32.totalorder %s21, 1
        %s278 = scalar_select %p277, %s21, 1
        %s279 = scalar_lea.vmem %s5, %s278
        %p280 = pneg %p152
        %p281 = pneg %p149
        %p282 = scmp.lt.s32.totalorder %s21, 1
        %s283 = scalar_select %p282, %s21, 1
        %s284 = scalar_lea.vmem %s6, %s283
        %p285 = pneg %p178
        %p286 = pneg %p175
        %p287 = pneg %p204
        %p288 = pneg %p201
        %s289 = sand.u32 %s191, 1
        %s290 = scalar_lea.sflag [#allocation4], %s289
        %s291 = sand.u32 %s191, 1
        %s292 = smul.addr %s291, 256
        %s293 = scalar_lea.vmem [#allocation3], %s292
        %p294 = scmp.lt.s32.totalorder %s21, 1
        %s295 = scalar_select %p294, %s21, 1
        %s296 = smul.addr %s295, 32
        %s297 = smul.addr %s296, 8
        %s298 = scalar_lea.vmem %s0, %s297
        %p299 = scmp.lt.s32.totalorder %s21, 1
        %s300 = scalar_select %p299, %s21, 1
        %s301 = scalar_lea.vmem %s5, %s300
        %p302 = scmp.lt.s32.totalorder %s21, 1
        %s303 = scalar_select %p302, %s21, 1
        %s304 = scalar_lea.vmem %s6, %s303
        %vm305 = vcmask 31744
        %306 = vst.msk [vmem:[#allocation2] sm:$0xff] %vm305, 0.0
        %307 = vst.msk [vmem:[#allocation2 + $0x8] sm:$0xff] %vm305, 0.0
        %vm308 = vcmask 25600
        %309 = vst.msk [vmem:[#allocation2 + $0x10] sm:$0x3] %vm308, 0.0
        %s310 = scalar_lea.vmem [#allocation2], 408
        %311 = vst.msk [vmem:[%s310] sm:$0xff] %vm305, 0.0
        %312 = vst.msk [vmem:[%s310 + $0x8] sm:$0xff] %vm305, 0.0
        %313 = vst.msk [vmem:[%s310 + $0x10] sm:$0x3] %vm308, 0.0
        %s314 = scalar_lea.vmem [#allocation2], 24
        %vm315 = vcmask 24576
        %316 = vst.msk [vmem:[%s314] sm:$0x1] %vm315, 0.0
        %317 = vst.msk [vmem:[%s314 + $0x18] sm:$0x1] %vm315, 0.0
        %318 = vst.msk [vmem:[%s314 + $0x30] sm:$0x1] %vm315, 0.0
        %319 = vst.msk [vmem:[%s314 + $0x48] sm:$0x1] %vm315, 0.0
        %320 = vst.msk [vmem:[%s314 + $0x60] sm:$0x1] %vm315, 0.0
        %321 = vst.msk [vmem:[%s314 + $0x78] sm:$0x1] %vm315, 0.0
        %322 = vst.msk [vmem:[%s314 + $0x90] sm:$0x1] %vm315, 0.0
        %323 = vst.msk [vmem:[%s314 + $0xa8] sm:$0x1] %vm315, 0.0
        %324 = vst.msk [vmem:[%s314 + $0xc0] sm:$0x1] %vm315, 0.0
        %325 = vst.msk [vmem:[%s314 + $0xd8] sm:$0x1] %vm315, 0.0
        %326 = vst.msk [vmem:[%s314 + $0xf0] sm:$0x1] %vm315, 0.0
        %327 = vst.msk [vmem:[%s314 + $0x108] sm:$0x1] %vm315, 0.0
        %328 = vst.msk [vmem:[%s314 + $0x120] sm:$0x1] %vm315, 0.0
        %329 = vst.msk [vmem:[%s314 + $0x138] sm:$0x1] %vm315, 0.0
        %330 = vst.msk [vmem:[%s314 + $0x150] sm:$0x1] %vm315, 0.0
        %331 = vst.msk [vmem:[%s314 + $0x168] sm:$0x1] %vm315, 0.0
        %332 = vst.msk [vmem:[%s314 + $0x11] sm:$0x1] %vm315, 0.0
        %333 = vst.msk [vmem:[%s314 + $0x29] sm:$0x1] %vm315, 0.0
        %334 = vst.msk [vmem:[%s314 + $0x41] sm:$0x1] %vm315, 0.0
        %335 = vst.msk [vmem:[%s314 + $0x59] sm:$0x1] %vm315, 0.0
        %336 = vst.msk [vmem:[%s314 + $0x71] sm:$0x1] %vm315, 0.0
        %337 = vst.msk [vmem:[%s314 + $0x89] sm:$0x1] %vm315, 0.0
        %338 = vst.msk [vmem:[%s314 + $0xa1] sm:$0x1] %vm315, 0.0
        %339 = vst.msk [vmem:[%s314 + $0xb9] sm:$0x1] %vm315, 0.0
        %340 = vst.msk [vmem:[%s314 + $0xd1] sm:$0x1] %vm315, 0.0
        %341 = vst.msk [vmem:[%s314 + $0xe9] sm:$0x1] %vm315, 0.0
        %342 = vst.msk [vmem:[%s314 + $0x101] sm:$0x1] %vm315, 0.0
        %343 = vst.msk [vmem:[%s314 + $0x119] sm:$0x1] %vm315, 0.0
        %344 = vst.msk [vmem:[%s314 + $0x131] sm:$0x1] %vm315, 0.0
        %345 = vst.msk [vmem:[%s314 + $0x149] sm:$0x1] %vm315, 0.0
        %346 = vst.msk [vmem:[%s314 + $0x161] sm:$0x1] %vm315, 0.0
        %347 = vst.msk [vmem:[%s314 + $0x179] sm:$0x1] %vm315, 0.0
        %v348 = vld [vmem:[%s298] sm:$0xff]
        %v349 = vld [vmem:[%s298 + $0x8] sm:$0xff]
        %v350 = vld [vmem:[%s298 + $0x10] sm:$0xff]
        %v351 = vld [vmem:[%s298 + $0x18] sm:$0xff]
        %v352 = vld [vmem:[%s298 + $0x20] sm:$0xff]
        %v353 = vld [vmem:[%s298 + $0x28] sm:$0xff]
        %v354 = vld [vmem:[%s298 + $0x30] sm:$0xff]
        %v355 = vld [vmem:[%s298 + $0x38] sm:$0xff]
        %v356 = vld [vmem:[%s298 + $0x40] sm:$0xff]
        %v357 = vld [vmem:[%s298 + $0x48] sm:$0xff]
        %v358 = vld [vmem:[%s298 + $0x50] sm:$0xff]
        %v359 = vld [vmem:[%s298 + $0x58] sm:$0xff]
        %v360 = vld [vmem:[%s298 + $0x60] sm:$0xff]
        %v361 = vld [vmem:[%s298 + $0x68] sm:$0xff]
        %v362 = vld [vmem:[%s298 + $0x70] sm:$0xff]
        %v363 = vld [vmem:[%s298 + $0x78] sm:$0xff]
        %v364 = vld [vmem:[%s298 + $0x80] sm:$0xff]
        %v365 = vld [vmem:[%s298 + $0x88] sm:$0xff]
        %v366 = vld [vmem:[%s298 + $0x90] sm:$0xff]
        %v367 = vld [vmem:[%s298 + $0x98] sm:$0xff]
        %v368 = vld [vmem:[%s298 + $0xa0] sm:$0xff]
        %v369 = vld [vmem:[%s298 + $0xa8] sm:$0xff]
        %v370 = vld [vmem:[%s298 + $0xb0] sm:$0xff]
        %v371 = vld [vmem:[%s298 + $0xb8] sm:$0xff]
        %v372 = vld [vmem:[%s298 + $0xc0] sm:$0xff]
        %v373 = vld [vmem:[%s298 + $0xc8] sm:$0xff]
        %v374 = vld [vmem:[%s298 + $0xd0] sm:$0xff]
        %v375 = vld [vmem:[%s298 + $0xd8] sm:$0xff]
        %v376 = vld [vmem:[%s298 + $0xe0] sm:$0xff]
        %v377 = vld [vmem:[%s298 + $0xe8] sm:$0xff]
        %v378 = vld [vmem:[%s298 + $0xf0] sm:$0xff]
        %v379 = vld [vmem:[%s298 + $0xf8] sm:$0xff]
        %380 = vst.msk [vmem:[%s314 + $0x1] sm:$0xff] %vm305, %v348
        %381 = vst.msk [vmem:[%s314 + $0x9] sm:$0xff] %vm305, %v349
        %382 = vst.msk [vmem:[%s314 + $0x19] sm:$0xff] %vm305, %v350
        %383 = vst.msk [vmem:[%s314 + $0x21] sm:$0xff] %vm305, %v351
        %384 = vst.msk [vmem:[%s314 + $0x31] sm:$0xff] %vm305, %v352
        %385 = vst.msk [vmem:[%s314 + $0x39] sm:$0xff] %vm305, %v353
        %386 = vst.msk [vmem:[%s314 + $0x49] sm:$0xff] %vm305, %v354
        %387 = vst.msk [vmem:[%s314 + $0x51] sm:$0xff] %vm305, %v355
        %388 = vst.msk [vmem:[%s314 + $0x61] sm:$0xff] %vm305, %v356
        %389 = vst.msk [vmem:[%s314 + $0x69] sm:$0xff] %vm305, %v357
        %390 = vst.msk [vmem:[%s314 + $0x79] sm:$0xff] %vm305, %v358
        %391 = vst.msk [vmem:[%s314 + $0x81] sm:$0xff] %vm305, %v359
        %392 = vst.msk [vmem:[%s314 + $0x91] sm:$0xff] %vm305, %v360
        %393 = vst.msk [vmem:[%s314 + $0x99] sm:$0xff] %vm305, %v361
        %394 = vst.msk [vmem:[%s314 + $0xa9] sm:$0xff] %vm305, %v362
        %395 = vst.msk [vmem:[%s314 + $0xb1] sm:$0xff] %vm305, %v363
        %396 = vst.msk [vmem:[%s314 + $0xc1] sm:$0xff] %vm305, %v364
        %397 = vst.msk [vmem:[%s314 + $0xc9] sm:$0xff] %vm305, %v365
        %398 = vst.msk [vmem:[%s314 + $0xd9] sm:$0xff] %vm305, %v366
        %399 = vst.msk [vmem:[%s314 + $0xe1] sm:$0xff] %vm305, %v367
        %400 = vst.msk [vmem:[%s314 + $0xf1] sm:$0xff] %vm305, %v368
        %401 = vst.msk [vmem:[%s314 + $0xf9] sm:$0xff] %vm305, %v369
        %402 = vst.msk [vmem:[%s314 + $0x109] sm:$0xff] %vm305, %v370
        %403 = vst.msk [vmem:[%s314 + $0x111] sm:$0xff] %vm305, %v371
        %404 = vst.msk [vmem:[%s314 + $0x121] sm:$0xff] %vm305, %v372
        %405 = vst.msk [vmem:[%s314 + $0x129] sm:$0xff] %vm305, %v373
        %406 = vst.msk [vmem:[%s314 + $0x139] sm:$0xff] %vm305, %v374
        %407 = vst.msk [vmem:[%s314 + $0x141] sm:$0xff] %vm305, %v375
        %408 = vst.msk [vmem:[%s314 + $0x151] sm:$0xff] %vm305, %v376
        %409 = vst.msk [vmem:[%s314 + $0x159] sm:$0xff] %vm305, %v377
        %410 = vst.msk [vmem:[%s314 + $0x169] sm:$0xff] %vm305, %v378
        %411 = vst.msk [vmem:[%s314 + $0x171] sm:$0xff] %vm305, %v379
        %v412 = vld [vmem:[#allocation2] sm:$0xff]
        %v413 = vld [vmem:[#allocation2 + $0x8] sm:$0xff]
        %v414 = vld [vmem:[#allocation2 + $0x18] sm:$0xff]
        %v415 = vld [vmem:[#allocation2 + $0x20] sm:$0xff]
        %v416 = vld [vmem:[#allocation2 + $0x30] sm:$0xff]
        %v417 = vld [vmem:[#allocation2 + $0x38] sm:$0xff]
        %v418 = vld [vmem:[#allocation2 + $0x48] sm:$0xff]
        %v419 = vld [vmem:[#allocation2 + $0x50] sm:$0xff]
        %v420 = vld [vmem:[#allocation2 + $0x60] sm:$0xff]
        %v421 = vld [vmem:[#allocation2 + $0x68] sm:$0xff]
        %v422 = vld [vmem:[#allocation2 + $0x78] sm:$0xff]
        %v423 = vld [vmem:[#allocation2 + $0x80] sm:$0xff]
        %v424 = vld [vmem:[#allocation2 + $0x90] sm:$0xff]
        %v425 = vld [vmem:[#allocation2 + $0x98] sm:$0xff]
        %v426 = vld [vmem:[#allocation2 + $0xa8] sm:$0xff]
        %v427 = vld [vmem:[#allocation2 + $0xb0] sm:$0xff]
        %v428 = vld [vmem:[#allocation2 + $0xc0] sm:$0xff]
        %v429 = vld [vmem:[#allocation2 + $0xc8] sm:$0xff]
        %v430 = vld [vmem:[#allocation2 + $0xd8] sm:$0xff]
        %v431 = vld [vmem:[#allocation2 + $0xe0] sm:$0xff]
        %v432 = vld [vmem:[#allocation2 + $0xf0] sm:$0xff]
        %v433 = vld [vmem:[#allocation2 + $0xf8] sm:$0xff]
        %v434 = vld [vmem:[#allocation2 + $0x108] sm:$0xff]
        %v435 = vld [vmem:[#allocation2 + $0x110] sm:$0xff]
        %v436 = vld [vmem:[#allocation2 + $0x120] sm:$0xff]
        %v437 = vld [vmem:[#allocation2 + $0x128] sm:$0xff]
        %v438 = vld [vmem:[#allocation2 + $0x138] sm:$0xff]
        %v439 = vld [vmem:[#allocation2 + $0x140] sm:$0xff]
        %v440 = vld [vmem:[#allocation2 + $0x150] sm:$0xff]
        %v441 = vld [vmem:[#allocation2 + $0x158] sm:$0xff]
        %v442 = vld [vmem:[#allocation2 + $0x168] sm:$0xff]
        %v443 = vld [vmem:[#allocation2 + $0x170] sm:$0xff]
        %v444 = vld [vmem:[#allocation2 + $0x1] sm:$0xff]
        %v445 = vld [vmem:[#allocation2 + $0x9] sm:$0xff]
        %v446 = vld [vmem:[#allocation2 + $0x19] sm:$0xff]
        %v447 = vld [vmem:[#allocation2 + $0x21] sm:$0xff]
        %v448 = vld [vmem:[#allocation2 + $0x31] sm:$0xff]
        %v449 = vld [vmem:[#allocation2 + $0x39] sm:$0xff]
        %v450 = vld [vmem:[#allocation2 + $0x49] sm:$0xff]
        %v451 = vld [vmem:[#allocation2 + $0x51] sm:$0xff]
        %v452 = vld [vmem:[#allocation2 + $0x61] sm:$0xff]
        %v453 = vld [vmem:[#allocation2 + $0x69] sm:$0xff]
        %v454 = vld [vmem:[#allocation2 + $0x79] sm:$0xff]
        %v455 = vld [vmem:[#allocation2 + $0x81] sm:$0xff]
        %v456 = vld [vmem:[#allocation2 + $0x91] sm:$0xff]
        %v457 = vld [vmem:[#allocation2 + $0x99] sm:$0xff]
        %v458 = vld [vmem:[#allocation2 + $0xa9] sm:$0xff]
        %v459 = vld [vmem:[#allocation2 + $0xb1] sm:$0xff]
        %v460 = vld [vmem:[#allocation2 + $0xc1] sm:$0xff]
        %v461 = vld [vmem:[#allocation2 + $0xc9] sm:$0xff]
        %v462 = vld [vmem:[#allocation2 + $0xd9] sm:$0xff]
        %v463 = vld [vmem:[#allocation2 + $0xe1] sm:$0xff]
        %v464 = vld [vmem:[#allocation2 + $0xf1] sm:$0xff]
        %v465 = vld [vmem:[#allocation2 + $0xf9] sm:$0xff]
        %v466 = vld [vmem:[#allocation2 + $0x109] sm:$0xff]
        %v467 = vld [vmem:[#allocation2 + $0x111] sm:$0xff]
        %v468 = vld [vmem:[#allocation2 + $0x121] sm:$0xff]
        %v469 = vld [vmem:[#allocation2 + $0x129] sm:$0xff]
        %v470 = vld [vmem:[#allocation2 + $0x139] sm:$0xff]
        %v471 = vld [vmem:[#allocation2 + $0x141] sm:$0xff]
        %v472 = vld [vmem:[#allocation2 + $0x151] sm:$0xff]
        %v473 = vld [vmem:[#allocation2 + $0x159] sm:$0xff]
        %v474 = vld [vmem:[#allocation2 + $0x169] sm:$0xff]
        %v475 = vld [vmem:[#allocation2 + $0x171] sm:$0xff]
        %v476 = vld [vmem:[#allocation2 + $0x2] sm:$0xff]
        %v477 = vld [vmem:[#allocation2 + $0xa] sm:$0xff]
        %v478 = vld [vmem:[#allocation2 + $0x1a] sm:$0xff]
        %v479 = vld [vmem:[#allocation2 + $0x22] sm:$0xff]
        %v480 = vld [vmem:[#allocation2 + $0x32] sm:$0xff]
        %v481 = vld [vmem:[#allocation2 + $0x3a] sm:$0xff]
        %v482 = vld [vmem:[#allocation2 + $0x4a] sm:$0xff]
        %v483 = vld [vmem:[#allocation2 + $0x52] sm:$0xff]
        %v484 = vld [vmem:[#allocation2 + $0x62] sm:$0xff]
        %v485 = vld [vmem:[#allocation2 + $0x6a] sm:$0xff]
        %v486 = vld [vmem:[#allocation2 + $0x7a] sm:$0xff]
        %v487 = vld [vmem:[#allocation2 + $0x82] sm:$0xff]
        %v488 = vld [vmem:[#allocation2 + $0x92] sm:$0xff]
        %v489 = vld [vmem:[#allocation2 + $0x9a] sm:$0xff]
        %v490 = vld [vmem:[#allocation2 + $0xaa] sm:$0xff]
        %v491 = vld [vmem:[#allocation2 + $0xb2] sm:$0xff]
        %v492 = vld [vmem:[#allocation2 + $0xc2] sm:$0xff]
        %v493 = vld [vmem:[#allocation2 + $0xca] sm:$0xff]
        %v494 = vld [vmem:[#allocation2 + $0xda] sm:$0xff]
        %v495 = vld [vmem:[#allocation2 + $0xe2] sm:$0xff]
        %v496 = vld [vmem:[#allocation2 + $0xf2] sm:$0xff]
        %v497 = vld [vmem:[#allocation2 + $0xfa] sm:$0xff]
        %v498 = vld [vmem:[#allocation2 + $0x10a] sm:$0xff]
        %v499 = vld [vmem:[#allocation2 + $0x112] sm:$0xff]
        %v500 = vld [vmem:[#allocation2 + $0x122] sm:$0xff]
        %v501 = vld [vmem:[#allocation2 + $0x12a] sm:$0xff]
        %v502 = vld [vmem:[#allocation2 + $0x13a] sm:$0xff]
        %v503 = vld [vmem:[#allocation2 + $0x142] sm:$0xff]
        %v504 = vld [vmem:[#allocation2 + $0x152] sm:$0xff]
        %v505 = vld [vmem:[#allocation2 + $0x15a] sm:$0xff]
        %v506 = vld [vmem:[#allocation2 + $0x16a] sm:$0xff]
        %v507 = vld [vmem:[#allocation2 + $0x172] sm:$0xff]
        %v508 = vld [vmem:[%s314] sm:$0xff]
        %v509 = vld [vmem:[%s314 + $0x8] sm:$0xff]
        %v510 = vld [vmem:[%s314 + $0x18] sm:$0xff]
        %v511 = vld [vmem:[%s314 + $0x20] sm:$0xff]
        %v512 = vld [vmem:[%s314 + $0x30] sm:$0xff]
        %v513 = vld [vmem:[%s314 + $0x38] sm:$0xff]
        %v514 = vld [vmem:[%s314 + $0x48] sm:$0xff]
        %v515 = vld [vmem:[%s314 + $0x50] sm:$0xff]
        %v516 = vld [vmem:[%s314 + $0x60] sm:$0xff]
        %v517 = vld [vmem:[%s314 + $0x68] sm:$0xff]
        %v518 = vld [vmem:[%s314 + $0x78] sm:$0xff]
        %v519 = vld [vmem:[%s314 + $0x80] sm:$0xff]
        %v520 = vld [vmem:[%s314 + $0x90] sm:$0xff]
        %v521 = vld [vmem:[%s314 + $0x98] sm:$0xff]
        %v522 = vld [vmem:[%s314 + $0xa8] sm:$0xff]
        %v523 = vld [vmem:[%s314 + $0xb0] sm:$0xff]
        %v524 = vld [vmem:[%s314 + $0xc0] sm:$0xff]
        %v525 = vld [vmem:[%s314 + $0xc8] sm:$0xff]
        %v526 = vld [vmem:[%s314 + $0xd8] sm:$0xff]
        %v527 = vld [vmem:[%s314 + $0xe0] sm:$0xff]
        %v528 = vld [vmem:[%s314 + $0xf0] sm:$0xff]
        %v529 = vld [vmem:[%s314 + $0xf8] sm:$0xff]
        %v530 = vld [vmem:[%s314 + $0x108] sm:$0xff]
        %v531 = vld [vmem:[%s314 + $0x110] sm:$0xff]
        %v532 = vld [vmem:[%s314 + $0x120] sm:$0xff]
        %v533 = vld [vmem:[%s314 + $0x128] sm:$0xff]
        %v534 = vld [vmem:[%s314 + $0x138] sm:$0xff]
        %v535 = vld [vmem:[%s314 + $0x140] sm:$0xff]
        %v536 = vld [vmem:[%s314 + $0x150] sm:$0xff]
        %v537 = vld [vmem:[%s314 + $0x158] sm:$0xff]
        %v538 = vld [vmem:[%s314 + $0x168] sm:$0xff]
        %v539 = vld [vmem:[%s314 + $0x170] sm:$0xff]
        %v540 = vld [vmem:[%s314 + $0x1] sm:$0xff]
        %v541 = vld [vmem:[%s314 + $0x9] sm:$0xff]
        %v542 = vld [vmem:[%s314 + $0x19] sm:$0xff]
        %v543 = vld [vmem:[%s314 + $0x21] sm:$0xff]
        %v544 = vld [vmem:[%s314 + $0x31] sm:$0xff]
        %v545 = vld [vmem:[%s314 + $0x39] sm:$0xff]
        %v546 = vld [vmem:[%s314 + $0x49] sm:$0xff]
        %v547 = vld [vmem:[%s314 + $0x51] sm:$0xff]
        %v548 = vld [vmem:[%s314 + $0x61] sm:$0xff]
        %v549 = vld [vmem:[%s314 + $0x69] sm:$0xff]
        %v550 = vld [vmem:[%s314 + $0x79] sm:$0xff]
        %v551 = vld [vmem:[%s314 + $0x81] sm:$0xff]
        %v552 = vld [vmem:[%s314 + $0x91] sm:$0xff]
        %v553 = vld [vmem:[%s314 + $0x99] sm:$0xff]
        %v554 = vld [vmem:[%s314 + $0xa9] sm:$0xff]
        %v555 = vld [vmem:[%s314 + $0xb1] sm:$0xff]
        %v556 = vld [vmem:[%s314 + $0xc1] sm:$0xff]
        %v557 = vld [vmem:[%s314 + $0xc9] sm:$0xff]
        %v558 = vld [vmem:[%s314 + $0xd9] sm:$0xff]
        %v559 = vld [vmem:[%s314 + $0xe1] sm:$0xff]
        %v560 = vld [vmem:[%s314 + $0xf1] sm:$0xff]
        %v561 = vld [vmem:[%s314 + $0xf9] sm:$0xff]
        %v562 = vld [vmem:[%s314 + $0x109] sm:$0xff]
        %v563 = vld [vmem:[%s314 + $0x111] sm:$0xff]
        %v564 = vld [vmem:[%s314 + $0x121] sm:$0xff]
        %v565 = vld [vmem:[%s314 + $0x129] sm:$0xff]
        %v566 = vld [vmem:[%s314 + $0x139] sm:$0xff]
        %v567 = vld [vmem:[%s314 + $0x141] sm:$0xff]
        %v568 = vld [vmem:[%s314 + $0x151] sm:$0xff]
        %v569 = vld [vmem:[%s314 + $0x159] sm:$0xff]
        %v570 = vld [vmem:[%s314 + $0x169] sm:$0xff]
        %v571 = vld [vmem:[%s314 + $0x171] sm:$0xff]
        %v572 = vld [vmem:[%s314 + $0x2] sm:$0xff]
        %v573 = vld [vmem:[%s314 + $0xa] sm:$0xff]
        %v574 = vld [vmem:[%s314 + $0x1a] sm:$0xff]
        %v575 = vld [vmem:[%s314 + $0x22] sm:$0xff]
        %v576 = vld [vmem:[%s314 + $0x32] sm:$0xff]
        %v577 = vld [vmem:[%s314 + $0x3a] sm:$0xff]
        %v578 = vld [vmem:[%s314 + $0x4a] sm:$0xff]
        %v579 = vld [vmem:[%s314 + $0x52] sm:$0xff]
        %v580 = vld [vmem:[%s314 + $0x62] sm:$0xff]
        %v581 = vld [vmem:[%s314 + $0x6a] sm:$0xff]
        %v582 = vld [vmem:[%s314 + $0x7a] sm:$0xff]
        %v583 = vld [vmem:[%s314 + $0x82] sm:$0xff]
        %v584 = vld [vmem:[%s314 + $0x92] sm:$0xff]
        %v585 = vld [vmem:[%s314 + $0x9a] sm:$0xff]
        %v586 = vld [vmem:[%s314 + $0xaa] sm:$0xff]
        %v587 = vld [vmem:[%s314 + $0xb2] sm:$0xff]
        %v588 = vld [vmem:[%s314 + $0xc2] sm:$0xff]
        %v589 = vld [vmem:[%s314 + $0xca] sm:$0xff]
        %v590 = vld [vmem:[%s314 + $0xda] sm:$0xff]
        %v591 = vld [vmem:[%s314 + $0xe2] sm:$0xff]
        %v592 = vld [vmem:[%s314 + $0xf2] sm:$0xff]
        %v593 = vld [vmem:[%s314 + $0xfa] sm:$0xff]
        %v594 = vld [vmem:[%s314 + $0x10a] sm:$0xff]
        %v595 = vld [vmem:[%s314 + $0x112] sm:$0xff]
        %v596 = vld [vmem:[%s314 + $0x122] sm:$0xff]
        %v597 = vld [vmem:[%s314 + $0x12a] sm:$0xff]
        %v598 = vld [vmem:[%s314 + $0x13a] sm:$0xff]
        %v599 = vld [vmem:[%s314 + $0x142] sm:$0xff]
        %v600 = vld [vmem:[%s314 + $0x152] sm:$0xff]
        %v601 = vld [vmem:[%s314 + $0x15a] sm:$0xff]
        %v602 = vld [vmem:[%s314 + $0x16a] sm:$0xff]
        %v603 = vld [vmem:[%s314 + $0x172] sm:$0xff]
        %s604 = scalar_lea.vmem [#allocation2], 48
        %v605 = vld [vmem:[%s604] sm:$0xff]
        %v606 = vld [vmem:[%s604 + $0x8] sm:$0xff]
        %v607 = vld [vmem:[%s604 + $0x18] sm:$0xff]
        %v608 = vld [vmem:[%s604 + $0x20] sm:$0xff]
        %v609 = vld [vmem:[%s604 + $0x30] sm:$0xff]
        %v610 = vld [vmem:[%s604 + $0x38] sm:$0xff]
        %v611 = vld [vmem:[%s604 + $0x48] sm:$0xff]
        %v612 = vld [vmem:[%s604 + $0x50] sm:$0xff]
        %v613 = vld [vmem:[%s604 + $0x60] sm:$0xff]
        %v614 = vld [vmem:[%s604 + $0x68] sm:$0xff]
        %v615 = vld [vmem:[%s604 + $0x78] sm:$0xff]
        %v616 = vld [vmem:[%s604 + $0x80] sm:$0xff]
        %v617 = vld [vmem:[%s604 + $0x90] sm:$0xff]
        %v618 = vld [vmem:[%s604 + $0x98] sm:$0xff]
        %v619 = vld [vmem:[%s604 + $0xa8] sm:$0xff]
        %v620 = vld [vmem:[%s604 + $0xb0] sm:$0xff]
        %v621 = vld [vmem:[%s604 + $0xc0] sm:$0xff]
        %v622 = vld [vmem:[%s604 + $0xc8] sm:$0xff]
        %v623 = vld [vmem:[%s604 + $0xd8] sm:$0xff]
        %v624 = vld [vmem:[%s604 + $0xe0] sm:$0xff]
        %v625 = vld [vmem:[%s604 + $0xf0] sm:$0xff]
        %v626 = vld [vmem:[%s604 + $0xf8] sm:$0xff]
        %v627 = vld [vmem:[%s604 + $0x108] sm:$0xff]
        %v628 = vld [vmem:[%s604 + $0x110] sm:$0xff]
        %v629 = vld [vmem:[%s604 + $0x120] sm:$0xff]
        %v630 = vld [vmem:[%s604 + $0x128] sm:$0xff]
        %v631 = vld [vmem:[%s604 + $0x138] sm:$0xff]
        %v632 = vld [vmem:[%s604 + $0x140] sm:$0xff]
        %v633 = vld [vmem:[%s604 + $0x150] sm:$0xff]
        %v634 = vld [vmem:[%s604 + $0x158] sm:$0xff]
        %v635 = vld [vmem:[%s604 + $0x168] sm:$0xff]
        %v636 = vld [vmem:[%s604 + $0x170] sm:$0xff]
        %v637 = vld [vmem:[%s604 + $0x1] sm:$0xff]
        %v638 = vld [vmem:[%s604 + $0x9] sm:$0xff]
        %v639 = vld [vmem:[%s604 + $0x19] sm:$0xff]
        %v640 = vld [vmem:[%s604 + $0x21] sm:$0xff]
        %v641 = vld [vmem:[%s604 + $0x31] sm:$0xff]
        %v642 = vld [vmem:[%s604 + $0x39] sm:$0xff]
        %v643 = vld [vmem:[%s604 + $0x49] sm:$0xff]
        %v644 = vld [vmem:[%s604 + $0x51] sm:$0xff]
        %v645 = vld [vmem:[%s604 + $0x61] sm:$0xff]
        %v646 = vld [vmem:[%s604 + $0x69] sm:$0xff]
        %v647 = vld [vmem:[%s604 + $0x79] sm:$0xff]
        %v648 = vld [vmem:[%s604 + $0x81] sm:$0xff]
        %v649 = vld [vmem:[%s604 + $0x91] sm:$0xff]
        %v650 = vld [vmem:[%s604 + $0x99] sm:$0xff]
        %v651 = vld [vmem:[%s604 + $0xa9] sm:$0xff]
        %v652 = vld [vmem:[%s604 + $0xb1] sm:$0xff]
        %v653 = vld [vmem:[%s604 + $0xc1] sm:$0xff]
        %v654 = vld [vmem:[%s604 + $0xc9] sm:$0xff]
        %v655 = vld [vmem:[%s604 + $0xd9] sm:$0xff]
        %v656 = vld [vmem:[%s604 + $0xe1] sm:$0xff]
        %v657 = vld [vmem:[%s604 + $0xf1] sm:$0xff]
        %v658 = vld [vmem:[%s604 + $0xf9] sm:$0xff]
        %v659 = vld [vmem:[%s604 + $0x109] sm:$0xff]
        %v660 = vld [vmem:[%s604 + $0x111] sm:$0xff]
        %v661 = vld [vmem:[%s604 + $0x121] sm:$0xff]
        %v662 = vld [vmem:[%s604 + $0x129] sm:$0xff]
        %v663 = vld [vmem:[%s604 + $0x139] sm:$0xff]
        %v664 = vld [vmem:[%s604 + $0x141] sm:$0xff]
        %v665 = vld [vmem:[%s604 + $0x151] sm:$0xff]
        %v666 = vld [vmem:[%s604 + $0x159] sm:$0xff]
        %v667 = vld [vmem:[%s604 + $0x169] sm:$0xff]
        %v668 = vld [vmem:[%s604 + $0x171] sm:$0xff]
        %v669 = vld [vmem:[%s604 + $0x2] sm:$0xff]
        %v670 = vld [vmem:[%s604 + $0xa] sm:$0xff]
        %v671 = vld [vmem:[%s604 + $0x1a] sm:$0xff]
        %v672 = vld [vmem:[%s604 + $0x22] sm:$0xff]
        %v673 = vld [vmem:[%s604 + $0x32] sm:$0xff]
        %v674 = vld [vmem:[%s604 + $0x3a] sm:$0xff]
        %v675 = vld [vmem:[%s604 + $0x4a] sm:$0xff]
        %v676 = vld [vmem:[%s604 + $0x52] sm:$0xff]
        %v677 = vld [vmem:[%s604 + $0x62] sm:$0xff]
        %v678 = vld [vmem:[%s604 + $0x6a] sm:$0xff]
        %v679 = vld [vmem:[%s604 + $0x7a] sm:$0xff]
        %v680 = vld [vmem:[%s604 + $0x82] sm:$0xff]
        %v681 = vld [vmem:[%s604 + $0x92] sm:$0xff]
        %v682 = vld [vmem:[%s604 + $0x9a] sm:$0xff]
        %v683 = vld [vmem:[%s604 + $0xaa] sm:$0xff]
        %v684 = vld [vmem:[%s604 + $0xb2] sm:$0xff]
        %v685 = vld [vmem:[%s604 + $0xc2] sm:$0xff]
        %v686 = vld [vmem:[%s604 + $0xca] sm:$0xff]
        %v687 = vld [vmem:[%s604 + $0xda] sm:$0xff]
        %v688 = vld [vmem:[%s604 + $0xe2] sm:$0xff]
        %v689 = vld [vmem:[%s604 + $0xf2] sm:$0xff]
        %v690 = vld [vmem:[%s604 + $0xfa] sm:$0xff]
        %v691 = vld [vmem:[%s604 + $0x10a] sm:$0xff]
        %v692 = vld [vmem:[%s604 + $0x112] sm:$0xff]
        %v693 = vld [vmem:[%s604 + $0x122] sm:$0xff]
        %v694 = vld [vmem:[%s604 + $0x12a] sm:$0xff]
        %v695 = vld [vmem:[%s604 + $0x13a] sm:$0xff]
        %v696 = vld [vmem:[%s604 + $0x142] sm:$0xff]
        %v697 = vld [vmem:[%s604 + $0x152] sm:$0xff]
        %v698 = vld [vmem:[%s604 + $0x15a] sm:$0xff]
        %v699 = vld [vmem:[%s604 + $0x16a] sm:$0xff]
        %v700 = vld [vmem:[%s604 + $0x172] sm:$0xff]
        %733 = vrot.lane.b32.xlu0 %v444, 4
        %v734 = vpop.permute.xlu0 %733
        %735 = vrot.lane.b32.xlu0 %v445, 4
        %v736 = vpop.permute.xlu0 %735
        %737 = vrot.lane.b32.xlu0 %v446, 4
        %v738 = vpop.permute.xlu0 %737
        %739 = vrot.lane.b32.xlu0 %v447, 4
        %v740 = vpop.permute.xlu0 %739
        %741 = vrot.lane.b32.xlu0 %v448, 4
        %v742 = vpop.permute.xlu0 %741
        %743 = vrot.lane.b32.xlu0 %v449, 4
        %v744 = vpop.permute.xlu0 %743
        %745 = vrot.lane.b32.xlu0 %v450, 4
        %v746 = vpop.permute.xlu0 %745
        %747 = vrot.lane.b32.xlu0 %v451, 4
        %v748 = vpop.permute.xlu0 %747
        %749 = vrot.lane.b32.xlu0 %v452, 4
        %v750 = vpop.permute.xlu0 %749
        %751 = vrot.lane.b32.xlu0 %v453, 4
        %v752 = vpop.permute.xlu0 %751
        %753 = vrot.lane.b32.xlu0 %v454, 4
        %v754 = vpop.permute.xlu0 %753
        %755 = vrot.lane.b32.xlu0 %v455, 4
        %v756 = vpop.permute.xlu0 %755
        %757 = vrot.lane.b32.xlu0 %v456, 4
        %v758 = vpop.permute.xlu0 %757
        %759 = vrot.lane.b32.xlu0 %v457, 4
        %v760 = vpop.permute.xlu0 %759
        %761 = vrot.lane.b32.xlu0 %v458, 4
        %v762 = vpop.permute.xlu0 %761
        %763 = vrot.lane.b32.xlu0 %v459, 4
        %v764 = vpop.permute.xlu0 %763
        %765 = vrot.lane.b32.xlu0 %v460, 4
        %v766 = vpop.permute.xlu0 %765
        %767 = vrot.lane.b32.xlu0 %v461, 4
        %v768 = vpop.permute.xlu0 %767
        %769 = vrot.lane.b32.xlu0 %v462, 4
        %v770 = vpop.permute.xlu0 %769
        %771 = vrot.lane.b32.xlu0 %v463, 4
        %v772 = vpop.permute.xlu0 %771
        %773 = vrot.lane.b32.xlu0 %v464, 4
        %v774 = vpop.permute.xlu0 %773
        %775 = vrot.lane.b32.xlu0 %v465, 4
        %v776 = vpop.permute.xlu0 %775
        %777 = vrot.lane.b32.xlu0 %v466, 4
        %v778 = vpop.permute.xlu0 %777
        %779 = vrot.lane.b32.xlu0 %v467, 4
        %v780 = vpop.permute.xlu0 %779
        %781 = vrot.lane.b32.xlu0 %v468, 4
        %v782 = vpop.permute.xlu0 %781
        %783 = vrot.lane.b32.xlu0 %v469, 4
        %v784 = vpop.permute.xlu0 %783
        %785 = vrot.lane.b32.xlu0 %v470, 4
        %v786 = vpop.permute.xlu0 %785
        %787 = vrot.lane.b32.xlu0 %v471, 4
        %v788 = vpop.permute.xlu0 %787
        %789 = vrot.lane.b32.xlu0 %v472, 4
        %v790 = vpop.permute.xlu0 %789
        %791 = vrot.lane.b32.xlu0 %v473, 4
        %v792 = vpop.permute.xlu0 %791
        %793 = vrot.lane.b32.xlu0 %v474, 4
        %v794 = vpop.permute.xlu0 %793
        %795 = vrot.lane.b32.xlu0 %v475, 4
        %v796 = vpop.permute.xlu0 %795
        %861 = vrot.lane.b32.xlu0 %v476, 8
        %v862 = vpop.permute.xlu0 %861
        %863 = vrot.lane.b32.xlu0 %v477, 8
        %v864 = vpop.permute.xlu0 %863
        %865 = vrot.lane.b32.xlu0 %v478, 8
        %v866 = vpop.permute.xlu0 %865
        %867 = vrot.lane.b32.xlu0 %v479, 8
        %v868 = vpop.permute.xlu0 %867
        %869 = vrot.lane.b32.xlu0 %v480, 8
        %v870 = vpop.permute.xlu0 %869
        %871 = vrot.lane.b32.xlu0 %v481, 8
        %v872 = vpop.permute.xlu0 %871
        %873 = vrot.lane.b32.xlu0 %v482, 8
        %v874 = vpop.permute.xlu0 %873
        %875 = vrot.lane.b32.xlu0 %v483, 8
        %v876 = vpop.permute.xlu0 %875
        %877 = vrot.lane.b32.xlu0 %v484, 8
        %v878 = vpop.permute.xlu0 %877
        %879 = vrot.lane.b32.xlu0 %v485, 8
        %v880 = vpop.permute.xlu0 %879
        %881 = vrot.lane.b32.xlu0 %v486, 8
        %v882 = vpop.permute.xlu0 %881
        %883 = vrot.lane.b32.xlu0 %v487, 8
        %v884 = vpop.permute.xlu0 %883
        %885 = vrot.lane.b32.xlu0 %v488, 8
        %v886 = vpop.permute.xlu0 %885
        %887 = vrot.lane.b32.xlu0 %v489, 8
        %v888 = vpop.permute.xlu0 %887
        %889 = vrot.lane.b32.xlu0 %v490, 8
        %v890 = vpop.permute.xlu0 %889
        %891 = vrot.lane.b32.xlu0 %v491, 8
        %v892 = vpop.permute.xlu0 %891
        %893 = vrot.lane.b32.xlu0 %v492, 8
        %v894 = vpop.permute.xlu0 %893
        %895 = vrot.lane.b32.xlu0 %v493, 8
        %v896 = vpop.permute.xlu0 %895
        %897 = vrot.lane.b32.xlu0 %v494, 8
        %v898 = vpop.permute.xlu0 %897
        %899 = vrot.lane.b32.xlu0 %v495, 8
        %v900 = vpop.permute.xlu0 %899
        %901 = vrot.lane.b32.xlu0 %v496, 8
        %v902 = vpop.permute.xlu0 %901
        %903 = vrot.lane.b32.xlu0 %v497, 8
        %v904 = vpop.permute.xlu0 %903
        %905 = vrot.lane.b32.xlu0 %v498, 8
        %v906 = vpop.permute.xlu0 %905
        %907 = vrot.lane.b32.xlu0 %v499, 8
        %v908 = vpop.permute.xlu0 %907
        %909 = vrot.lane.b32.xlu0 %v500, 8
        %v910 = vpop.permute.xlu0 %909
        %911 = vrot.lane.b32.xlu0 %v501, 8
        %v912 = vpop.permute.xlu0 %911
        %913 = vrot.lane.b32.xlu0 %v502, 8
        %v914 = vpop.permute.xlu0 %913
        %915 = vrot.lane.b32.xlu0 %v503, 8
        %v916 = vpop.permute.xlu0 %915
        %917 = vrot.lane.b32.xlu0 %v504, 8
        %v918 = vpop.permute.xlu0 %917
        %919 = vrot.lane.b32.xlu0 %v505, 8
        %v920 = vpop.permute.xlu0 %919
        %921 = vrot.lane.b32.xlu0 %v506, 8
        %v922 = vpop.permute.xlu0 %921
        %923 = vrot.lane.b32.xlu0 %v507, 8
        %v924 = vpop.permute.xlu0 %923
        %989 = vrot.lane.b32.xlu0 %v508, 12
        %v990 = vpop.permute.xlu0 %989
        %991 = vrot.lane.b32.xlu0 %v509, 12
        %v992 = vpop.permute.xlu0 %991
        %993 = vrot.lane.b32.xlu0 %v510, 12
        %v994 = vpop.permute.xlu0 %993
        %995 = vrot.lane.b32.xlu0 %v511, 12
        %v996 = vpop.permute.xlu0 %995
        %997 = vrot.lane.b32.xlu0 %v512, 12
        %v998 = vpop.permute.xlu0 %997
        %999 = vrot.lane.b32.xlu0 %v513, 12
        %v1000 = vpop.permute.xlu0 %999
        %1001 = vrot.lane.b32.xlu0 %v514, 12
        %v1002 = vpop.permute.xlu0 %1001
        %1003 = vrot.lane.b32.xlu0 %v515, 12
        %v1004 = vpop.permute.xlu0 %1003
        %1005 = vrot.lane.b32.xlu0 %v516, 12
        %v1006 = vpop.permute.xlu0 %1005
        %1007 = vrot.lane.b32.xlu0 %v517, 12
        %v1008 = vpop.permute.xlu0 %1007
        %1009 = vrot.lane.b32.xlu0 %v518, 12
        %v1010 = vpop.permute.xlu0 %1009
        %1011 = vrot.lane.b32.xlu0 %v519, 12
        %v1012 = vpop.permute.xlu0 %1011
        %1013 = vrot.lane.b32.xlu0 %v520, 12
        %v1014 = vpop.permute.xlu0 %1013
        %1015 = vrot.lane.b32.xlu0 %v521, 12
        %v1016 = vpop.permute.xlu0 %1015
        %1017 = vrot.lane.b32.xlu0 %v522, 12
        %v1018 = vpop.permute.xlu0 %1017
        %1019 = vrot.lane.b32.xlu0 %v523, 12
        %v1020 = vpop.permute.xlu0 %1019
        %1021 = vrot.lane.b32.xlu0 %v524, 12
        %v1022 = vpop.permute.xlu0 %1021
        %1023 = vrot.lane.b32.xlu0 %v525, 12
        %v1024 = vpop.permute.xlu0 %1023
        %1025 = vrot.lane.b32.xlu0 %v526, 12
        %v1026 = vpop.permute.xlu0 %1025
        %1027 = vrot.lane.b32.xlu0 %v527, 12
        %v1028 = vpop.permute.xlu0 %1027
        %1029 = vrot.lane.b32.xlu0 %v528, 12
        %v1030 = vpop.permute.xlu0 %1029
        %1031 = vrot.lane.b32.xlu0 %v529, 12
        %v1032 = vpop.permute.xlu0 %1031
        %1033 = vrot.lane.b32.xlu0 %v530, 12
        %v1034 = vpop.permute.xlu0 %1033
        %1035 = vrot.lane.b32.xlu0 %v531, 12
        %v1036 = vpop.permute.xlu0 %1035
        %1037 = vrot.lane.b32.xlu0 %v532, 12
        %v1038 = vpop.permute.xlu0 %1037
        %1039 = vrot.lane.b32.xlu0 %v533, 12
        %v1040 = vpop.permute.xlu0 %1039
        %1041 = vrot.lane.b32.xlu0 %v534, 12
        %v1042 = vpop.permute.xlu0 %1041
        %1043 = vrot.lane.b32.xlu0 %v535, 12
        %v1044 = vpop.permute.xlu0 %1043
        %1045 = vrot.lane.b32.xlu0 %v536, 12
        %v1046 = vpop.permute.xlu0 %1045
        %1047 = vrot.lane.b32.xlu0 %v537, 12
        %v1048 = vpop.permute.xlu0 %1047
        %1049 = vrot.lane.b32.xlu0 %v538, 12
        %v1050 = vpop.permute.xlu0 %1049
        %1051 = vrot.lane.b32.xlu0 %v539, 12
        %v1052 = vpop.permute.xlu0 %1051
        %1117 = vrot.lane.b32.xlu0 %v540, 16
        %v1118 = vpop.permute.xlu0 %1117
        %1119 = vrot.lane.b32.xlu0 %v541, 16
        %v1120 = vpop.permute.xlu0 %1119
        %1121 = vrot.lane.b32.xlu0 %v542, 16
        %v1122 = vpop.permute.xlu0 %1121
        %1123 = vrot.lane.b32.xlu0 %v543, 16
        %v1124 = vpop.permute.xlu0 %1123
        %1125 = vrot.lane.b32.xlu0 %v544, 16
        %v1126 = vpop.permute.xlu0 %1125
        %1127 = vrot.lane.b32.xlu0 %v545, 16
        %v1128 = vpop.permute.xlu0 %1127
        %1129 = vrot.lane.b32.xlu0 %v546, 16
        %v1130 = vpop.permute.xlu0 %1129
        %1131 = vrot.lane.b32.xlu0 %v547, 16
        %v1132 = vpop.permute.xlu0 %1131
        %1133 = vrot.lane.b32.xlu0 %v548, 16
        %v1134 = vpop.permute.xlu0 %1133
        %1135 = vrot.lane.b32.xlu0 %v549, 16
        %v1136 = vpop.permute.xlu0 %1135
        %1137 = vrot.lane.b32.xlu0 %v550, 16
        %v1138 = vpop.permute.xlu0 %1137
        %1139 = vrot.lane.b32.xlu0 %v551, 16
        %v1140 = vpop.permute.xlu0 %1139
        %1141 = vrot.lane.b32.xlu0 %v552, 16
        %v1142 = vpop.permute.xlu0 %1141
        %1143 = vrot.lane.b32.xlu0 %v553, 16
        %v1144 = vpop.permute.xlu0 %1143
        %1145 = vrot.lane.b32.xlu0 %v554, 16
        %v1146 = vpop.permute.xlu0 %1145
        %1147 = vrot.lane.b32.xlu0 %v555, 16
        %v1148 = vpop.permute.xlu0 %1147
        %1149 = vrot.lane.b32.xlu0 %v556, 16
        %v1150 = vpop.permute.xlu0 %1149
        %1151 = vrot.lane.b32.xlu0 %v557, 16
        %v1152 = vpop.permute.xlu0 %1151
        %1153 = vrot.lane.b32.xlu0 %v558, 16
        %v1154 = vpop.permute.xlu0 %1153
        %1155 = vrot.lane.b32.xlu0 %v559, 16
        %v1156 = vpop.permute.xlu0 %1155
        %1157 = vrot.lane.b32.xlu0 %v560, 16
        %v1158 = vpop.permute.xlu0 %1157
        %1159 = vrot.lane.b32.xlu0 %v561, 16
        %v1160 = vpop.permute.xlu0 %1159
        %1161 = vrot.lane.b32.xlu0 %v562, 16
        %v1162 = vpop.permute.xlu0 %1161
        %1163 = vrot.lane.b32.xlu0 %v563, 16
        %v1164 = vpop.permute.xlu0 %1163
        %1165 = vrot.lane.b32.xlu0 %v564, 16
        %v1166 = vpop.permute.xlu0 %1165
        %1167 = vrot.lane.b32.xlu0 %v565, 16
        %v1168 = vpop.permute.xlu0 %1167
        %1169 = vrot.lane.b32.xlu0 %v566, 16
        %v1170 = vpop.permute.xlu0 %1169
        %1171 = vrot.lane.b32.xlu0 %v567, 16
        %v1172 = vpop.permute.xlu0 %1171
        %1173 = vrot.lane.b32.xlu0 %v568, 16
        %v1174 = vpop.permute.xlu0 %1173
        %1175 = vrot.lane.b32.xlu0 %v569, 16
        %v1176 = vpop.permute.xlu0 %1175
        %1177 = vrot.lane.b32.xlu0 %v570, 16
        %v1178 = vpop.permute.xlu0 %1177
        %1179 = vrot.lane.b32.xlu0 %v571, 16
        %v1180 = vpop.permute.xlu0 %1179
        %1245 = vrot.lane.b32.xlu0 %v572, 20
        %v1246 = vpop.permute.xlu0 %1245
        %1247 = vrot.lane.b32.xlu0 %v573, 20
        %v1248 = vpop.permute.xlu0 %1247
        %1249 = vrot.lane.b32.xlu0 %v574, 20
        %v1250 = vpop.permute.xlu0 %1249
        %1251 = vrot.lane.b32.xlu0 %v575, 20
        %v1252 = vpop.permute.xlu0 %1251
        %1253 = vrot.lane.b32.xlu0 %v576, 20
        %v1254 = vpop.permute.xlu0 %1253
        %1255 = vrot.lane.b32.xlu0 %v577, 20
        %v1256 = vpop.permute.xlu0 %1255
        %1257 = vrot.lane.b32.xlu0 %v578, 20
        %v1258 = vpop.permute.xlu0 %1257
        %1259 = vrot.lane.b32.xlu0 %v579, 20
        %v1260 = vpop.permute.xlu0 %1259
        %1261 = vrot.lane.b32.xlu0 %v580, 20
        %v1262 = vpop.permute.xlu0 %1261
        %1263 = vrot.lane.b32.xlu0 %v581, 20
        %v1264 = vpop.permute.xlu0 %1263
        %1265 = vrot.lane.b32.xlu0 %v582, 20
        %v1266 = vpop.permute.xlu0 %1265
        %1267 = vrot.lane.b32.xlu0 %v583, 20
        %v1268 = vpop.permute.xlu0 %1267
        %1269 = vrot.lane.b32.xlu0 %v584, 20
        %v1270 = vpop.permute.xlu0 %1269
        %1271 = vrot.lane.b32.xlu0 %v585, 20
        %v1272 = vpop.permute.xlu0 %1271
        %1273 = vrot.lane.b32.xlu0 %v586, 20
        %v1274 = vpop.permute.xlu0 %1273
        %1275 = vrot.lane.b32.xlu0 %v587, 20
        %v1276 = vpop.permute.xlu0 %1275
        %1277 = vrot.lane.b32.xlu0 %v588, 20
        %v1278 = vpop.permute.xlu0 %1277
        %1279 = vrot.lane.b32.xlu0 %v589, 20
        %v1280 = vpop.permute.xlu0 %1279
        %1281 = vrot.lane.b32.xlu0 %v590, 20
        %v1282 = vpop.permute.xlu0 %1281
        %1283 = vrot.lane.b32.xlu0 %v591, 20
        %v1284 = vpop.permute.xlu0 %1283
        %1285 = vrot.lane.b32.xlu0 %v592, 20
        %v1286 = vpop.permute.xlu0 %1285
        %1287 = vrot.lane.b32.xlu0 %v593, 20
        %v1288 = vpop.permute.xlu0 %1287
        %1289 = vrot.lane.b32.xlu0 %v594, 20
        %v1290 = vpop.permute.xlu0 %1289
        %1291 = vrot.lane.b32.xlu0 %v595, 20
        %v1292 = vpop.permute.xlu0 %1291
        %1293 = vrot.lane.b32.xlu0 %v596, 20
        %v1294 = vpop.permute.xlu0 %1293
        %1295 = vrot.lane.b32.xlu0 %v597, 20
        %v1296 = vpop.permute.xlu0 %1295
        %1297 = vrot.lane.b32.xlu0 %v598, 20
        %v1298 = vpop.permute.xlu0 %1297
        %1299 = vrot.lane.b32.xlu0 %v599, 20
        %v1300 = vpop.permute.xlu0 %1299
        %1301 = vrot.lane.b32.xlu0 %v600, 20
        %v1302 = vpop.permute.xlu0 %1301
        %1303 = vrot.lane.b32.xlu0 %v601, 20
        %v1304 = vpop.permute.xlu0 %1303
        %1305 = vrot.lane.b32.xlu0 %v602, 20
        %v1306 = vpop.permute.xlu0 %1305
        %1307 = vrot.lane.b32.xlu0 %v603, 20
        %v1308 = vpop.permute.xlu0 %1307
        %1373 = vrot.lane.b32.xlu0 %v605, 24
        %v1374 = vpop.permute.xlu0 %1373
        %1375 = vrot.lane.b32.xlu0 %v606, 24
        %v1376 = vpop.permute.xlu0 %1375
        %1377 = vrot.lane.b32.xlu0 %v607, 24
        %v1378 = vpop.permute.xlu0 %1377
        %1379 = vrot.lane.b32.xlu0 %v608, 24
        %v1380 = vpop.permute.xlu0 %1379
        %1381 = vrot.lane.b32.xlu0 %v609, 24
        %v1382 = vpop.permute.xlu0 %1381
        %1383 = vrot.lane.b32.xlu0 %v610, 24
        %v1384 = vpop.permute.xlu0 %1383
        %1385 = vrot.lane.b32.xlu0 %v611, 24
        %v1386 = vpop.permute.xlu0 %1385
        %1387 = vrot.lane.b32.xlu0 %v612, 24
        %v1388 = vpop.permute.xlu0 %1387
        %1389 = vrot.lane.b32.xlu0 %v613, 24
        %v1390 = vpop.permute.xlu0 %1389
        %1391 = vrot.lane.b32.xlu0 %v614, 24
        %v1392 = vpop.permute.xlu0 %1391
        %1393 = vrot.lane.b32.xlu0 %v615, 24
        %v1394 = vpop.permute.xlu0 %1393
        %1395 = vrot.lane.b32.xlu0 %v616, 24
        %v1396 = vpop.permute.xlu0 %1395
        %1397 = vrot.lane.b32.xlu0 %v617, 24
        %v1398 = vpop.permute.xlu0 %1397
        %1399 = vrot.lane.b32.xlu0 %v618, 24
        %v1400 = vpop.permute.xlu0 %1399
        %1401 = vrot.lane.b32.xlu0 %v619, 24
        %v1402 = vpop.permute.xlu0 %1401
        %1403 = vrot.lane.b32.xlu0 %v620, 24
        %v1404 = vpop.permute.xlu0 %1403
        %1405 = vrot.lane.b32.xlu0 %v621, 24
        %v1406 = vpop.permute.xlu0 %1405
        %1407 = vrot.lane.b32.xlu0 %v622, 24
        %v1408 = vpop.permute.xlu0 %1407
        %1409 = vrot.lane.b32.xlu0 %v623, 24
        %v1410 = vpop.permute.xlu0 %1409
        %1411 = vrot.lane.b32.xlu0 %v624, 24
        %v1412 = vpop.permute.xlu0 %1411
        %1413 = vrot.lane.b32.xlu0 %v625, 24
        %v1414 = vpop.permute.xlu0 %1413
        %1415 = vrot.lane.b32.xlu0 %v626, 24
        %v1416 = vpop.permute.xlu0 %1415
        %1417 = vrot.lane.b32.xlu0 %v627, 24
        %v1418 = vpop.permute.xlu0 %1417
        %1419 = vrot.lane.b32.xlu0 %v628, 24
        %v1420 = vpop.permute.xlu0 %1419
        %1421 = vrot.lane.b32.xlu0 %v629, 24
        %v1422 = vpop.permute.xlu0 %1421
        %1423 = vrot.lane.b32.xlu0 %v630, 24
        %v1424 = vpop.permute.xlu0 %1423
        %1425 = vrot.lane.b32.xlu0 %v631, 24
        %v1426 = vpop.permute.xlu0 %1425
        %1427 = vrot.lane.b32.xlu0 %v632, 24
        %v1428 = vpop.permute.xlu0 %1427
        %1429 = vrot.lane.b32.xlu0 %v633, 24
        %v1430 = vpop.permute.xlu0 %1429
        %1431 = vrot.lane.b32.xlu0 %v634, 24
        %v1432 = vpop.permute.xlu0 %1431
        %1433 = vrot.lane.b32.xlu0 %v635, 24
        %v1434 = vpop.permute.xlu0 %1433
        %1435 = vrot.lane.b32.xlu0 %v636, 24
        %v1436 = vpop.permute.xlu0 %1435
        %1501 = vrot.lane.b32.xlu0 %v637, 28
        %v1502 = vpop.permute.xlu0 %1501
        %1503 = vrot.lane.b32.xlu0 %v638, 28
        %v1504 = vpop.permute.xlu0 %1503
        %1505 = vrot.lane.b32.xlu0 %v639, 28
        %v1506 = vpop.permute.xlu0 %1505
        %1507 = vrot.lane.b32.xlu0 %v640, 28
        %v1508 = vpop.permute.xlu0 %1507
        %1509 = vrot.lane.b32.xlu0 %v641, 28
        %v1510 = vpop.permute.xlu0 %1509
        %1511 = vrot.lane.b32.xlu0 %v642, 28
        %v1512 = vpop.permute.xlu0 %1511
        %1513 = vrot.lane.b32.xlu0 %v643, 28
        %v1514 = vpop.permute.xlu0 %1513
        %1515 = vrot.lane.b32.xlu0 %v644, 28
        %v1516 = vpop.permute.xlu0 %1515
        %1517 = vrot.lane.b32.xlu0 %v645, 28
        %v1518 = vpop.permute.xlu0 %1517
        %1519 = vrot.lane.b32.xlu0 %v646, 28
        %v1520 = vpop.permute.xlu0 %1519
        %1521 = vrot.lane.b32.xlu0 %v647, 28
        %v1522 = vpop.permute.xlu0 %1521
        %1523 = vrot.lane.b32.xlu0 %v648, 28
        %v1524 = vpop.permute.xlu0 %1523
        %1525 = vrot.lane.b32.xlu0 %v649, 28
        %v1526 = vpop.permute.xlu0 %1525
        %1527 = vrot.lane.b32.xlu0 %v650, 28
        %v1528 = vpop.permute.xlu0 %1527
        %1529 = vrot.lane.b32.xlu0 %v651, 28
        %v1530 = vpop.permute.xlu0 %1529
        %1531 = vrot.lane.b32.xlu0 %v652, 28
        %v1532 = vpop.permute.xlu0 %1531
        %1533 = vrot.lane.b32.xlu0 %v653, 28
        %v1534 = vpop.permute.xlu0 %1533
        %1535 = vrot.lane.b32.xlu0 %v654, 28
        %v1536 = vpop.permute.xlu0 %1535
        %1537 = vrot.lane.b32.xlu0 %v655, 28
        %v1538 = vpop.permute.xlu0 %1537
        %1539 = vrot.lane.b32.xlu0 %v656, 28
        %v1540 = vpop.permute.xlu0 %1539
        %1541 = vrot.lane.b32.xlu0 %v657, 28
        %v1542 = vpop.permute.xlu0 %1541
        %1543 = vrot.lane.b32.xlu0 %v658, 28
        %v1544 = vpop.permute.xlu0 %1543
        %1545 = vrot.lane.b32.xlu0 %v659, 28
        %v1546 = vpop.permute.xlu0 %1545
        %1547 = vrot.lane.b32.xlu0 %v660, 28
        %v1548 = vpop.permute.xlu0 %1547
        %1549 = vrot.lane.b32.xlu0 %v661, 28
        %v1550 = vpop.permute.xlu0 %1549
        %1551 = vrot.lane.b32.xlu0 %v662, 28
        %v1552 = vpop.permute.xlu0 %1551
        %1553 = vrot.lane.b32.xlu0 %v663, 28
        %v1554 = vpop.permute.xlu0 %1553
        %1555 = vrot.lane.b32.xlu0 %v664, 28
        %v1556 = vpop.permute.xlu0 %1555
        %1557 = vrot.lane.b32.xlu0 %v665, 28
        %v1558 = vpop.permute.xlu0 %1557
        %1559 = vrot.lane.b32.xlu0 %v666, 28
        %v1560 = vpop.permute.xlu0 %1559
        %1561 = vrot.lane.b32.xlu0 %v667, 28
        %v1562 = vpop.permute.xlu0 %1561
        %1563 = vrot.lane.b32.xlu0 %v668, 28
        %v1564 = vpop.permute.xlu0 %1563
        %1629 = vrot.lane.b32.xlu0 %v669, 32
        %v1630 = vpop.permute.xlu0 %1629
        %1631 = vrot.lane.b32.xlu0 %v670, 32
        %v1632 = vpop.permute.xlu0 %1631
        %1633 = vrot.lane.b32.xlu0 %v671, 32
        %v1634 = vpop.permute.xlu0 %1633
        %1635 = vrot.lane.b32.xlu0 %v672, 32
        %v1636 = vpop.permute.xlu0 %1635
        %1637 = vrot.lane.b32.xlu0 %v673, 32
        %v1638 = vpop.permute.xlu0 %1637
        %1639 = vrot.lane.b32.xlu0 %v674, 32
        %v1640 = vpop.permute.xlu0 %1639
        %1641 = vrot.lane.b32.xlu0 %v675, 32
        %v1642 = vpop.permute.xlu0 %1641
        %1643 = vrot.lane.b32.xlu0 %v676, 32
        %v1644 = vpop.permute.xlu0 %1643
        %1645 = vrot.lane.b32.xlu0 %v677, 32
        %v1646 = vpop.permute.xlu0 %1645
        %1647 = vrot.lane.b32.xlu0 %v678, 32
        %v1648 = vpop.permute.xlu0 %1647
        %1649 = vrot.lane.b32.xlu0 %v679, 32
        %v1650 = vpop.permute.xlu0 %1649
        %1651 = vrot.lane.b32.xlu0 %v680, 32
        %v1652 = vpop.permute.xlu0 %1651
        %1653 = vrot.lane.b32.xlu0 %v681, 32
        %v1654 = vpop.permute.xlu0 %1653
        %1655 = vrot.lane.b32.xlu0 %v682, 32
        %v1656 = vpop.permute.xlu0 %1655
        %1657 = vrot.lane.b32.xlu0 %v683, 32
        %v1658 = vpop.permute.xlu0 %1657
        %1659 = vrot.lane.b32.xlu0 %v684, 32
        %v1660 = vpop.permute.xlu0 %1659
        %1661 = vrot.lane.b32.xlu0 %v685, 32
        %v1662 = vpop.permute.xlu0 %1661
        %1663 = vrot.lane.b32.xlu0 %v686, 32
        %v1664 = vpop.permute.xlu0 %1663
        %1665 = vrot.lane.b32.xlu0 %v687, 32
        %v1666 = vpop.permute.xlu0 %1665
        %1667 = vrot.lane.b32.xlu0 %v688, 32
        %v1668 = vpop.permute.xlu0 %1667
        %1669 = vrot.lane.b32.xlu0 %v689, 32
        %v1670 = vpop.permute.xlu0 %1669
        %1671 = vrot.lane.b32.xlu0 %v690, 32
        %v1672 = vpop.permute.xlu0 %1671
        %1673 = vrot.lane.b32.xlu0 %v691, 32
        %v1674 = vpop.permute.xlu0 %1673
        %1675 = vrot.lane.b32.xlu0 %v692, 32
        %v1676 = vpop.permute.xlu0 %1675
        %1677 = vrot.lane.b32.xlu0 %v693, 32
        %v1678 = vpop.permute.xlu0 %1677
        %1679 = vrot.lane.b32.xlu0 %v694, 32
        %v1680 = vpop.permute.xlu0 %1679
        %1681 = vrot.lane.b32.xlu0 %v695, 32
        %v1682 = vpop.permute.xlu0 %1681
        %1683 = vrot.lane.b32.xlu0 %v696, 32
        %v1684 = vpop.permute.xlu0 %1683
        %1685 = vrot.lane.b32.xlu0 %v697, 32
        %v1686 = vpop.permute.xlu0 %1685
        %1687 = vrot.lane.b32.xlu0 %v698, 32
        %v1688 = vpop.permute.xlu0 %1687
        %1689 = vrot.lane.b32.xlu0 %v699, 32
        %v1690 = vpop.permute.xlu0 %1689
        %1691 = vrot.lane.b32.xlu0 %v700, 32
        %v1692 = vpop.permute.xlu0 %1691
        %v1725 = vsel %vm305, %v412, %v734
        %v1726 = vsel %vm305, %v413, %v736
        %v1727 = vsel %vm305, %v414, %v738
        %v1728 = vsel %vm305, %v415, %v740
        %v1729 = vsel %vm305, %v416, %v742
        %v1730 = vsel %vm305, %v417, %v744
        %v1731 = vsel %vm305, %v418, %v746
        %v1732 = vsel %vm305, %v419, %v748
        %v1733 = vsel %vm305, %v420, %v750
        %v1734 = vsel %vm305, %v421, %v752
        %v1735 = vsel %vm305, %v422, %v754
        %v1736 = vsel %vm305, %v423, %v756
        %v1737 = vsel %vm305, %v424, %v758
        %v1738 = vsel %vm305, %v425, %v760
        %v1739 = vsel %vm305, %v426, %v762
        %v1740 = vsel %vm305, %v427, %v764
        %v1741 = vsel %vm305, %v428, %v766
        %v1742 = vsel %vm305, %v429, %v768
        %v1743 = vsel %vm305, %v430, %v770
        %v1744 = vsel %vm305, %v431, %v772
        %v1745 = vsel %vm305, %v432, %v774
        %v1746 = vsel %vm305, %v433, %v776
        %v1747 = vsel %vm305, %v434, %v778
        %v1748 = vsel %vm305, %v435, %v780
        %v1749 = vsel %vm305, %v436, %v782
        %v1750 = vsel %vm305, %v437, %v784
        %v1751 = vsel %vm305, %v438, %v786
        %v1752 = vsel %vm305, %v439, %v788
        %v1753 = vsel %vm305, %v440, %v790
        %v1754 = vsel %vm305, %v441, %v792
        %v1755 = vsel %vm305, %v442, %v794
        %v1756 = vsel %vm305, %v443, %v796
        %vm1757 = vcmask 64512
        %v1758 = vsel %vm1757, %v1725, %v862
        %v1759 = vsel %vm1757, %v1726, %v864
        %v1760 = vsel %vm1757, %v1727, %v866
        %v1761 = vsel %vm1757, %v1728, %v868
        %v1762 = vsel %vm1757, %v1729, %v870
        %v1763 = vsel %vm1757, %v1730, %v872
        %v1764 = vsel %vm1757, %v1731, %v874
        %v1765 = vsel %vm1757, %v1732, %v876
        %v1766 = vsel %vm1757, %v1733, %v878
        %v1767 = vsel %vm1757, %v1734, %v880
        %v1768 = vsel %vm1757, %v1735, %v882
        %v1769 = vsel %vm1757, %v1736, %v884
        %v1770 = vsel %vm1757, %v1737, %v886
        %v1771 = vsel %vm1757, %v1738, %v888
        %v1772 = vsel %vm1757, %v1739, %v890
        %v1773 = vsel %vm1757, %v1740, %v892
        %v1774 = vsel %vm1757, %v1741, %v894
        %v1775 = vsel %vm1757, %v1742, %v896
        %v1776 = vsel %vm1757, %v1743, %v898
        %v1777 = vsel %vm1757, %v1744, %v900
        %v1778 = vsel %vm1757, %v1745, %v902
        %v1779 = vsel %vm1757, %v1746, %v904
        %v1780 = vsel %vm1757, %v1747, %v906
        %v1781 = vsel %vm1757, %v1748, %v908
        %v1782 = vsel %vm1757, %v1749, %v910
        %v1783 = vsel %vm1757, %v1750, %v912
        %v1784 = vsel %vm1757, %v1751, %v914
        %v1785 = vsel %vm1757, %v1752, %v916
        %v1786 = vsel %vm1757, %v1753, %v918
        %v1787 = vsel %vm1757, %v1754, %v920
        %v1788 = vsel %vm1757, %v1755, %v922
        %v1789 = vsel %vm1757, %v1756, %v924
        %vm1790 = vcmask 97280
        %v1791 = vsel %vm1790, %v1758, %v990
        %v1792 = vsel %vm1790, %v1759, %v992
        %v1793 = vsel %vm1790, %v1760, %v994
        %v1794 = vsel %vm1790, %v1761, %v996
        %v1795 = vsel %vm1790, %v1762, %v998
        %v1796 = vsel %vm1790, %v1763, %v1000
        %v1797 = vsel %vm1790, %v1764, %v1002
        %v1798 = vsel %vm1790, %v1765, %v1004
        %v1799 = vsel %vm1790, %v1766, %v1006
        %v1800 = vsel %vm1790, %v1767, %v1008
        %v1801 = vsel %vm1790, %v1768, %v1010
        %v1802 = vsel %vm1790, %v1769, %v1012
        %v1803 = vsel %vm1790, %v1770, %v1014
        %v1804 = vsel %vm1790, %v1771, %v1016
        %v1805 = vsel %vm1790, %v1772, %v1018
        %v1806 = vsel %vm1790, %v1773, %v1020
        %v1807 = vsel %vm1790, %v1774, %v1022
        %v1808 = vsel %vm1790, %v1775, %v1024
        %v1809 = vsel %vm1790, %v1776, %v1026
        %v1810 = vsel %vm1790, %v1777, %v1028
        %v1811 = vsel %vm1790, %v1778, %v1030
        %v1812 = vsel %vm1790, %v1779, %v1032
        %v1813 = vsel %vm1790, %v1780, %v1034
        %v1814 = vsel %vm1790, %v1781, %v1036
        %v1815 = vsel %vm1790, %v1782, %v1038
        %v1816 = vsel %vm1790, %v1783, %v1040
        %v1817 = vsel %vm1790, %v1784, %v1042
        %v1818 = vsel %vm1790, %v1785, %v1044
        %v1819 = vsel %vm1790, %v1786, %v1046
        %v1820 = vsel %vm1790, %v1787, %v1048
        %v1821 = vsel %vm1790, %v1788, %v1050
        %v1822 = vsel %vm1790, %v1789, %v1052
        %vm1823 = vcmask 130048
        %v1824 = vsel %vm1823, %v1791, %v1118
        %v1825 = vsel %vm1823, %v1792, %v1120
        %v1826 = vsel %vm1823, %v1793, %v1122
        %v1827 = vsel %vm1823, %v1794, %v1124
        %v1828 = vsel %vm1823, %v1795, %v1126
        %v1829 = vsel %vm1823, %v1796, %v1128
        %v1830 = vsel %vm1823, %v1797, %v1130
        %v1831 = vsel %vm1823, %v1798, %v1132
        %v1832 = vsel %vm1823, %v1799, %v1134
        %v1833 = vsel %vm1823, %v1800, %v1136
        %v1834 = vsel %vm1823, %v1801, %v1138
        %v1835 = vsel %vm1823, %v1802, %v1140
        %v1836 = vsel %vm1823, %v1803, %v1142
        %v1837 = vsel %vm1823, %v1804, %v1144
        %v1838 = vsel %vm1823, %v1805, %v1146
        %v1839 = vsel %vm1823, %v1806, %v1148
        %v1840 = vsel %vm1823, %v1807, %v1150
        %v1841 = vsel %vm1823, %v1808, %v1152
        %v1842 = vsel %vm1823, %v1809, %v1154
        %v1843 = vsel %vm1823, %v1810, %v1156
        %v1844 = vsel %vm1823, %v1811, %v1158
        %v1845 = vsel %vm1823, %v1812, %v1160
        %v1846 = vsel %vm1823, %v1813, %v1162
        %v1847 = vsel %vm1823, %v1814, %v1164
        %v1848 = vsel %vm1823, %v1815, %v1166
        %v1849 = vsel %vm1823, %v1816, %v1168
        %v1850 = vsel %vm1823, %v1817, %v1170
        %v1851 = vsel %vm1823, %v1818, %v1172
        %v1852 = vsel %vm1823, %v1819, %v1174
        %v1853 = vsel %vm1823, %v1820, %v1176
        %v1854 = vsel %vm1823, %v1821, %v1178
        %v1855 = vsel %vm1823, %v1822, %v1180
        %vm1856 = vcmask 162816
        %v1857 = vsel %vm1856, %v1824, %v1246
        %v1858 = vsel %vm1856, %v1825, %v1248
        %v1859 = vsel %vm1856, %v1826, %v1250
        %v1860 = vsel %vm1856, %v1827, %v1252
        %v1861 = vsel %vm1856, %v1828, %v1254
        %v1862 = vsel %vm1856, %v1829, %v1256
        %v1863 = vsel %vm1856, %v1830, %v1258
        %v1864 = vsel %vm1856, %v1831, %v1260
        %v1865 = vsel %vm1856, %v1832, %v1262
        %v1866 = vsel %vm1856, %v1833, %v1264
        %v1867 = vsel %vm1856, %v1834, %v1266
        %v1868 = vsel %vm1856, %v1835, %v1268
        %v1869 = vsel %vm1856, %v1836, %v1270
        %v1870 = vsel %vm1856, %v1837, %v1272
        %v1871 = vsel %vm1856, %v1838, %v1274
        %v1872 = vsel %vm1856, %v1839, %v1276
        %v1873 = vsel %vm1856, %v1840, %v1278
        %v1874 = vsel %vm1856, %v1841, %v1280
        %v1875 = vsel %vm1856, %v1842, %v1282
        %v1876 = vsel %vm1856, %v1843, %v1284
        %v1877 = vsel %vm1856, %v1844, %v1286
        %v1878 = vsel %vm1856, %v1845, %v1288
        %v1879 = vsel %vm1856, %v1846, %v1290
        %v1880 = vsel %vm1856, %v1847, %v1292
        %v1881 = vsel %vm1856, %v1848, %v1294
        %v1882 = vsel %vm1856, %v1849, %v1296
        %v1883 = vsel %vm1856, %v1850, %v1298
        %v1884 = vsel %vm1856, %v1851, %v1300
        %v1885 = vsel %vm1856, %v1852, %v1302
        %v1886 = vsel %vm1856, %v1853, %v1304
        %v1887 = vsel %vm1856, %v1854, %v1306
        %v1888 = vsel %vm1856, %v1855, %v1308
        %vm1889 = vcmask 195584
        %v1890 = vsel %vm1889, %v1857, %v1374
        %v1891 = vsel %vm1889, %v1858, %v1376
        %v1892 = vsel %vm1889, %v1859, %v1378
        %v1893 = vsel %vm1889, %v1860, %v1380
        %v1894 = vsel %vm1889, %v1861, %v1382
        %v1895 = vsel %vm1889, %v1862, %v1384
        %v1896 = vsel %vm1889, %v1863, %v1386
        %v1897 = vsel %vm1889, %v1864, %v1388
        %v1898 = vsel %vm1889, %v1865, %v1390
        %v1899 = vsel %vm1889, %v1866, %v1392
        %v1900 = vsel %vm1889, %v1867, %v1394
        %v1901 = vsel %vm1889, %v1868, %v1396
        %v1902 = vsel %vm1889, %v1869, %v1398
        %v1903 = vsel %vm1889, %v1870, %v1400
        %v1904 = vsel %vm1889, %v1871, %v1402
        %v1905 = vsel %vm1889, %v1872, %v1404
        %v1906 = vsel %vm1889, %v1873, %v1406
        %v1907 = vsel %vm1889, %v1874, %v1408
        %v1908 = vsel %vm1889, %v1875, %v1410
        %v1909 = vsel %vm1889, %v1876, %v1412
        %v1910 = vsel %vm1889, %v1877, %v1414
        %v1911 = vsel %vm1889, %v1878, %v1416
        %v1912 = vsel %vm1889, %v1879, %v1418
        %v1913 = vsel %vm1889, %v1880, %v1420
        %v1914 = vsel %vm1889, %v1881, %v1422
        %v1915 = vsel %vm1889, %v1882, %v1424
        %v1916 = vsel %vm1889, %v1883, %v1426
        %v1917 = vsel %vm1889, %v1884, %v1428
        %v1918 = vsel %vm1889, %v1885, %v1430
        %v1919 = vsel %vm1889, %v1886, %v1432
        %v1920 = vsel %vm1889, %v1887, %v1434
        %v1921 = vsel %vm1889, %v1888, %v1436
        %vm1922 = vcmask 228352
        %v1923 = vsel %vm1922, %v1890, %v1502
        %v1924 = vsel %vm1922, %v1891, %v1504
        %v1925 = vsel %vm1922, %v1892, %v1506
        %v1926 = vsel %vm1922, %v1893, %v1508
        %v1927 = vsel %vm1922, %v1894, %v1510
        %v1928 = vsel %vm1922, %v1895, %v1512
        %v1929 = vsel %vm1922, %v1896, %v1514
        %v1930 = vsel %vm1922, %v1897, %v1516
        %v1931 = vsel %vm1922, %v1898, %v1518
        %v1932 = vsel %vm1922, %v1899, %v1520
        %v1933 = vsel %vm1922, %v1900, %v1522
        %v1934 = vsel %vm1922, %v1901, %v1524
        %v1935 = vsel %vm1922, %v1902, %v1526
        %v1936 = vsel %vm1922, %v1903, %v1528
        %v1937 = vsel %vm1922, %v1904, %v1530
        %v1938 = vsel %vm1922, %v1905, %v1532
        %v1939 = vsel %vm1922, %v1906, %v1534
        %v1940 = vsel %vm1922, %v1907, %v1536
        %v1941 = vsel %vm1922, %v1908, %v1538
        %v1942 = vsel %vm1922, %v1909, %v1540
        %v1943 = vsel %vm1922, %v1910, %v1542
        %v1944 = vsel %vm1922, %v1911, %v1544
        %v1945 = vsel %vm1922, %v1912, %v1546
        %v1946 = vsel %vm1922, %v1913, %v1548
        %v1947 = vsel %vm1922, %v1914, %v1550
        %v1948 = vsel %vm1922, %v1915, %v1552
        %v1949 = vsel %vm1922, %v1916, %v1554
        %v1950 = vsel %vm1922, %v1917, %v1556
        %v1951 = vsel %vm1922, %v1918, %v1558
        %v1952 = vsel %vm1922, %v1919, %v1560
        %v1953 = vsel %vm1922, %v1920, %v1562
        %v1954 = vsel %vm1922, %v1921, %v1564
        %vm1955 = vcmask 261120
        %v1956 = vsel %vm1955, %v1923, %v1630
        %v1957 = vsel %vm1955, %v1924, %v1632
        %v1958 = vsel %vm1955, %v1925, %v1634
        %v1959 = vsel %vm1955, %v1926, %v1636
        %v1960 = vsel %vm1955, %v1927, %v1638
        %v1961 = vsel %vm1955, %v1928, %v1640
        %v1962 = vsel %vm1955, %v1929, %v1642
        %v1963 = vsel %vm1955, %v1930, %v1644
        %v1964 = vsel %vm1955, %v1931, %v1646
        %v1965 = vsel %vm1955, %v1932, %v1648
        %v1966 = vsel %vm1955, %v1933, %v1650
        %v1967 = vsel %vm1955, %v1934, %v1652
        %v1968 = vsel %vm1955, %v1935, %v1654
        %v1969 = vsel %vm1955, %v1936, %v1656
        %v1970 = vsel %vm1955, %v1937, %v1658
        %v1971 = vsel %vm1955, %v1938, %v1660
        %v1972 = vsel %vm1955, %v1939, %v1662
        %v1973 = vsel %vm1955, %v1940, %v1664
        %v1974 = vsel %vm1955, %v1941, %v1666
        %v1975 = vsel %vm1955, %v1942, %v1668
        %v1976 = vsel %vm1955, %v1943, %v1670
        %v1977 = vsel %vm1955, %v1944, %v1672
        %v1978 = vsel %vm1955, %v1945, %v1674
        %v1979 = vsel %vm1955, %v1946, %v1676
        %v1980 = vsel %vm1955, %v1947, %v1678
        %v1981 = vsel %vm1955, %v1948, %v1680
        %v1982 = vsel %vm1955, %v1949, %v1682
        %v1983 = vsel %vm1955, %v1950, %v1684
        %v1984 = vsel %vm1955, %v1951, %v1686
        %v1985 = vsel %vm1955, %v1952, %v1688
        %v1986 = vsel %vm1955, %v1953, %v1690
        %v1987 = vsel %vm1955, %v1954, %v1692
        %v1988 = vld [vmem:[%s1] sm:$0xff]
        %v1989 = vld [vmem:[%s1 + $0x8] sm:$0xff]
        %v1990 = vld [vmem:[%s1 + $0x10] sm:$0xff]
        %v1991 = vld [vmem:[%s1 + $0x18] sm:$0xff]
        %v1992 = vld [vmem:[%s1 + $0x20] sm:$0xf]
        %vm1993 = vcmask 293888
        %v1995 = vsel %vm1993, %v1956, 0
        %v1998 = vsel %vm1993, %v1957, 0
        %v2001 = vsel %vm1993, %v1958, 0
        %v2004 = vsel %vm1993, %v1959, 0
        %v2007 = vsel %vm1993, %v1960, 0
        %v2010 = vsel %vm1993, %v1961, 0
        %v2013 = vsel %vm1993, %v1962, 0
        %v2016 = vsel %vm1993, %v1963, 0
        %v2019 = vsel %vm1993, %v1964, 0
        %v2022 = vsel %vm1993, %v1965, 0
        %v2025 = vsel %vm1993, %v1966, 0
        %v2028 = vsel %vm1993, %v1967, 0
        %v2031 = vsel %vm1993, %v1968, 0
        %v2034 = vsel %vm1993, %v1969, 0
        %v2037 = vsel %vm1993, %v1970, 0
        %v2040 = vsel %vm1993, %v1971, 0
        %v2043 = vsel %vm1993, %v1972, 0
        %v2046 = vsel %vm1993, %v1973, 0
        %v2049 = vsel %vm1993, %v1974, 0
        %v2052 = vsel %vm1993, %v1975, 0
        %v2055 = vsel %vm1993, %v1976, 0
        %v2058 = vsel %vm1993, %v1977, 0
        %v2061 = vsel %vm1993, %v1978, 0
        %v2064 = vsel %vm1993, %v1979, 0
        %v2067 = vsel %vm1993, %v1980, 0
        %v2070 = vsel %vm1993, %v1981, 0
        %v2073 = vsel %vm1993, %v1982, 0
        %v2076 = vsel %vm1993, %v1983, 0
        %v2079 = vsel %vm1993, %v1984, 0
        %v2082 = vsel %vm1993, %v1985, 0
        %v2085 = vsel %vm1993, %v1986, 0
        %v2088 = vsel %vm1993, %v1987, 0
        %vm2090 = vcmask 1043456
        %v2092 = vsel %vm2090, %v1992, 0
        %2094 = vmatprep.subr.mxu0 0.0
        %2095 = vmatpush1.msra.mxu0 %v1988
        %2096 = vmatprep.subr.mxu0 0.0
        %2097 = vmatpush1.msra.mxu0 %v1989
        %2098 = vmatprep.subr.mxu0 0.0
        %2099 = vmatpush1.msra.mxu0 %v1990
        %2100 = vmatprep.subr.mxu0 0.0
        %2101 = vmatpush1.msra.mxu0 %v1991
        %2102 = vmatprep.subr.mxu0 0.0
        %2103 = vmatpush1.msra.mxu0 %v2092
        %2104 = vmatprep.subr.mxu0 0.0
        %2105 = vmatpush1.msra.mxu0 0.0
        %2106 = vmatprep.subr.mxu0 0.0
        %2107 = vmatpush1.msra.mxu0 0.0
        %2108 = vmatprep.subr.mxu0 0.0
        %2109 = vmatpush1.msra.mxu0 0.0
        %2110 = vmatprep.subr.mxu0 0.0
        %2111 = vmatpush1.msra.mxu0 0.0
        %2112 = vmatprep.subr.mxu0 0.0
        %2113 = vmatpush1.msra.mxu0 0.0
        %2114 = vmatprep.subr.mxu0 0.0
        %2115 = vmatpush1.msra.mxu0 0.0
        %2116 = vmatprep.subr.mxu0 0.0
        %2117 = vmatpush1.msra.mxu0 0.0
        %2118 = vmatprep.subr.mxu0 0.0
        %2119 = vmatpush1.msra.mxu0 0.0
        %2120 = vmatprep.subr.mxu0 0.0
        %2121 = vmatpush1.msra.mxu0 0.0
        %2122 = vmatprep.subr.mxu0 0.0
        %2123 = vmatpush1.msra.mxu0 0.0
        %2124 = vmatprep.subr.mxu0 0.0
        %2125 = vmatpush1.msra.mxu0 0.0
        %2126 = vmatprep.subr.mxu0 0.0
        %2127 = vmatpush1.msra.mxu0 0.0
        %2128 = vmatprep.subr.mxu0 0.0
        %2129 = vmatpush1.msra.mxu0 0.0
        %2130 = vmatprep.subr.mxu0 0.0
        %2131 = vmatpush1.msra.mxu0 0.0
        %2132 = vmatprep.subr.mxu0 0.0
        %2133 = vmatpush1.msra.mxu0 0.0
        %2134 = vmatprep.subr.mxu0 0.0
        %2135 = vmatpush1.msra.mxu0 0.0
        %2136 = vmatprep.subr.mxu0 0.0
        %2137 = vmatpush1.msra.mxu0 0.0
        %2138 = vmatprep.subr.mxu0 0.0
        %2139 = vmatpush1.msra.mxu0 0.0
        %2140 = vmatprep.subr.mxu0 0.0
        %2141 = vmatpush1.msra.mxu0 0.0
        %2142 = vmatprep.subr.mxu0 0.0
        %2143 = vmatpush1.msra.mxu0 0.0
        %2144 = vmatprep.subr.mxu0 0.0
        %2145 = vmatpush1.msra.mxu0 0.0
        %2146 = vmatprep.subr.mxu0 0.0
        %2147 = vmatpush1.msra.mxu0 0.0
        %2148 = vmatprep.subr.mxu0 0.0
        %2149 = vmatpush1.msra.mxu0 0.0
        %2150 = vmatprep.subr.mxu0 0.0
        %2151 = vmatpush1.msra.mxu0 0.0
        %2152 = vmatprep.subr.mxu0 0.0
        %2153 = vmatpush1.msra.mxu0 0.0
        %2154 = vmatprep.subr.mxu0 0.0
        %2155 = vmatpush1.msra.mxu0 0.0
        %2156 = vmatprep.subr.mxu0 0.0
        %2157 = vmatpush1.msra.mxu0 0.0
        %2158 = vmatprep.mubr.f32.mxu0 0.0
        %2159 = vmatmul.mubr.f32.gmra.mrb[0].mxu0 %v1995
        %v2160 = vpop.f32.mrb[0].mxu0
        %v2161 = vadd.f32 0.0, %v2160
        %v2162 = vpop.f32.mrb[0].mxu0
        %2163 = vmatprep.mubr.f32.mxu0 0.0
        %2164 = vmatmul.mubr.f32.gmra.mrb[0].mxu0 %v1998
        %v2165 = vpop.f32.mrb[0].mxu0
        %v2166 = vadd.f32 0.0, %v2165
        %v2167 = vpop.f32.mrb[0].mxu0
        %2168 = vmatprep.mubr.f32.mxu0 0.0
        %2169 = vmatmul.mubr.f32.gmra.mrb[0].mxu0 %v2001
        %v2170 = vpop.f32.mrb[0].mxu0
        %v2171 = vadd.f32 0.0, %v2170
        %v2172 = vpop.f32.mrb[0].mxu0
        %2173 = vmatprep.mubr.f32.mxu0 0.0
        %2174 = vmatmul.mubr.f32.gmra.mrb[0].mxu0 %v2004
        %v2175 = vpop.f32.mrb[0].mxu0
        %v2176 = vadd.f32 0.0, %v2175
        %v2177 = vpop.f32.mrb[0].mxu0
        %2178 = vmatprep.mubr.f32.mxu0 0.0
        %2179 = vmatmul.mubr.f32.gmra.mrb[0].mxu0 %v2007
        %v2180 = vpop.f32.mrb[0].mxu0
        %v2181 = vadd.f32 0.0, %v2180
        %v2182 = vpop.f32.mrb[0].mxu0
        %2183 = vmatprep.mubr.f32.mxu0 0.0
        %2184 = vmatmul.mubr.f32.gmra.mrb[0].mxu0 %v2010
        %v2185 = vpop.f32.mrb[0].mxu0
        %v2186 = vadd.f32 0.0, %v2185
        %v2187 = vpop.f32.mrb[0].mxu0
        %2188 = vmatprep.mubr.f32.mxu0 0.0
        %2189 = vmatmul.mubr.f32.gmra.mrb[0].mxu0 %v2013
        %v2190 = vpop.f32.mrb[0].mxu0
        %v2191 = vadd.f32 0.0, %v2190
        %v2192 = vpop.f32.mrb[0].mxu0
        %2193 = vmatprep.mubr.f32.mxu0 0.0
        %2194 = vmatmul.mubr.f32.gmra.mrb[0].mxu0 %v2016
        %v2195 = vpop.f32.mrb[0].mxu0
        %v2196 = vadd.f32 0.0, %v2195
        %v2197 = vpop.f32.mrb[0].mxu0
        %2198 = vmatprep.mubr.f32.mxu0 0.0
        %2199 = vmatmul.mubr.f32.gmra.mrb[0].mxu0 %v2019
        %v2200 = vpop.f32.mrb[0].mxu0
        %v2201 = vadd.f32 0.0, %v2200
        %v2202 = vpop.f32.mrb[0].mxu0
        %2203 = vmatprep.mubr.f32.mxu0 0.0
        %2204 = vmatmul.mubr.f32.gmra.mrb[0].mxu0 %v2022
        %v2205 = vpop.f32.mrb[0].mxu0
        %v2206 = vadd.f32 0.0, %v2205
        %v2207 = vpop.f32.mrb[0].mxu0
        %2208 = vmatprep.mubr.f32.mxu0 0.0
        %2209 = vmatmul.mubr.f32.gmra.mrb[0].mxu0 %v2025
        %v2210 = vpop.f32.mrb[0].mxu0
        %v2211 = vadd.f32 0.0, %v2210
        %v2212 = vpop.f32.mrb[0].mxu0
        %2213 = vmatprep.mubr.f32.mxu0 0.0
        %2214 = vmatmul.mubr.f32.gmra.mrb[0].mxu0 %v2028
        %v2215 = vpop.f32.mrb[0].mxu0
        %v2216 = vadd.f32 0.0, %v2215
        %v2217 = vpop.f32.mrb[0].mxu0
        %2218 = vmatprep.mubr.f32.mxu0 0.0
        %2219 = vmatmul.mubr.f32.gmra.mrb[0].mxu0 %v2031
        %v2220 = vpop.f32.mrb[0].mxu0
        %v2221 = vadd.f32 0.0, %v2220
        %v2222 = vpop.f32.mrb[0].mxu0
        %2223 = vmatprep.mubr.f32.mxu0 0.0
        %2224 = vmatmul.mubr.f32.gmra.mrb[0].mxu0 %v2034
        %v2225 = vpop.f32.mrb[0].mxu0
        %v2226 = vadd.f32 0.0, %v2225
        %v2227 = vpop.f32.mrb[0].mxu0
        %2228 = vmatprep.mubr.f32.mxu0 0.0
        %2229 = vmatmul.mubr.f32.gmra.mrb[0].mxu0 %v2037
        %v2230 = vpop.f32.mrb[0].mxu0
        %v2231 = vadd.f32 0.0, %v2230
        %v2232 = vpop.f32.mrb[0].mxu0
        %2233 = vmatprep.mubr.f32.mxu0 0.0
        %2234 = vmatmul.mubr.f32.gmra.mrb[0].mxu0 %v2040
        %v2235 = vpop.f32.mrb[0].mxu0
        %v2236 = vadd.f32 0.0, %v2235
        %v2237 = vpop.f32.mrb[0].mxu0
        %2238 = vmatprep.mubr.f32.mxu0 0.0
        %2239 = vmatmul.mubr.f32.gmra.mrb[0].mxu0 %v2043
        %v2240 = vpop.f32.mrb[0].mxu0
        %v2241 = vadd.f32 0.0, %v2240
        %v2242 = vpop.f32.mrb[0].mxu0
        %2243 = vmatprep.mubr.f32.mxu0 0.0
        %2244 = vmatmul.mubr.f32.gmra.mrb[0].mxu0 %v2046
        %v2245 = vpop.f32.mrb[0].mxu0
        %v2246 = vadd.f32 0.0, %v2245
        %v2247 = vpop.f32.mrb[0].mxu0
        %2248 = vmatprep.mubr.f32.mxu0 0.0
        %2249 = vmatmul.mubr.f32.gmra.mrb[0].mxu0 %v2049
        %v2250 = vpop.f32.mrb[0].mxu0
        %v2251 = vadd.f32 0.0, %v2250
        %v2252 = vpop.f32.mrb[0].mxu0
        %2253 = vmatprep.mubr.f32.mxu0 0.0
        %2254 = vmatmul.mubr.f32.gmra.mrb[0].mxu0 %v2052
        %v2255 = vpop.f32.mrb[0].mxu0
        %v2256 = vadd.f32 0.0, %v2255
        %v2257 = vpop.f32.mrb[0].mxu0
        %2258 = vmatprep.mubr.f32.mxu0 0.0
        %2259 = vmatmul.mubr.f32.gmra.mrb[0].mxu0 %v2055
        %v2260 = vpop.f32.mrb[0].mxu0
        %v2261 = vadd.f32 0.0, %v2260
        %v2262 = vpop.f32.mrb[0].mxu0
        %2263 = vmatprep.mubr.f32.mxu0 0.0
        %2264 = vmatmul.mubr.f32.gmra.mrb[0].mxu0 %v2058
        %v2265 = vpop.f32.mrb[0].mxu0
        %v2266 = vadd.f32 0.0, %v2265
        %v2267 = vpop.f32.mrb[0].mxu0
        %2268 = vmatprep.mubr.f32.mxu0 0.0
        %2269 = vmatmul.mubr.f32.gmra.mrb[0].mxu0 %v2061
        %v2270 = vpop.f32.mrb[0].mxu0
        %v2271 = vadd.f32 0.0, %v2270
        %v2272 = vpop.f32.mrb[0].mxu0
        %2273 = vmatprep.mubr.f32.mxu0 0.0
        %2274 = vmatmul.mubr.f32.gmra.mrb[0].mxu0 %v2064
        %v2275 = vpop.f32.mrb[0].mxu0
        %v2276 = vadd.f32 0.0, %v2275
        %v2277 = vpop.f32.mrb[0].mxu0
        %2278 = vmatprep.mubr.f32.mxu0 0.0
        %2279 = vmatmul.mubr.f32.gmra.mrb[0].mxu0 %v2067
        %v2280 = vpop.f32.mrb[0].mxu0
        %v2281 = vadd.f32 0.0, %v2280
        %v2282 = vpop.f32.mrb[0].mxu0
        %2283 = vmatprep.mubr.f32.mxu0 0.0
        %2284 = vmatmul.mubr.f32.gmra.mrb[0].mxu0 %v2070
        %v2285 = vpop.f32.mrb[0].mxu0
        %v2286 = vadd.f32 0.0, %v2285
        %v2287 = vpop.f32.mrb[0].mxu0
        %2288 = vmatprep.mubr.f32.mxu0 0.0
        %2289 = vmatmul.mubr.f32.gmra.mrb[0].mxu0 %v2073
        %v2290 = vpop.f32.mrb[0].mxu0
        %v2291 = vadd.f32 0.0, %v2290
        %v2292 = vpop.f32.mrb[0].mxu0
        %2293 = vmatprep.mubr.f32.mxu0 0.0
        %2294 = vmatmul.mubr.f32.gmra.mrb[0].mxu0 %v2076
        %v2295 = vpop.f32.mrb[0].mxu0
        %v2296 = vadd.f32 0.0, %v2295
        %v2297 = vpop.f32.mrb[0].mxu0
        %2298 = vmatprep.mubr.f32.mxu0 0.0
        %2299 = vmatmul.mubr.f32.gmra.mrb[0].mxu0 %v2079
        %v2300 = vpop.f32.mrb[0].mxu0
        %v2301 = vadd.f32 0.0, %v2300
        %v2302 = vpop.f32.mrb[0].mxu0
        %2303 = vmatprep.mubr.f32.mxu0 0.0
        %2304 = vmatmul.mubr.f32.gmra.mrb[0].mxu0 %v2082
        %v2305 = vpop.f32.mrb[0].mxu0
        %v2306 = vadd.f32 0.0, %v2305
        %v2307 = vpop.f32.mrb[0].mxu0
        %2308 = vmatprep.mubr.f32.mxu0 0.0
        %2309 = vmatmul.mubr.f32.gmra.mrb[0].mxu0 %v2085
        %v2310 = vpop.f32.mrb[0].mxu0
        %v2311 = vadd.f32 0.0, %v2310
        %v2312 = vpop.f32.mrb[0].mxu0
        %2313 = vmatprep.mubr.f32.mxu0 0.0
        %2314 = vmatmul.mubr.f32.gmra.mrb[0].mxu0 %v2088
        %v2315 = vpop.f32.mrb[0].mxu0
        %v2316 = vadd.f32 0.0, %v2315
        %v2317 = vpop.f32.mrb[0].mxu0
        %2318 = vdwg.mxu0
        %v2319 = vld [vmem:[%s2] sm:$0x1]
        %v2320 = vsel %vm1823, %v2161, 0.0
        %v2321 = vsel %vm1823, %v2166, 0.0
        %v2322 = vadd.f32 %v2320, %v2321
        %v2323 = vsel %vm1823, %v2171, 0.0
        %v2324 = vadd.f32 %v2322, %v2323
        %v2325 = vsel %vm1823, %v2176, 0.0
        %v2326 = vadd.f32 %v2324, %v2325
        %v2327 = vsel %vm1823, %v2181, 0.0
        %v2328 = vadd.f32 %v2326, %v2327
        %v2329 = vsel %vm1823, %v2186, 0.0
        %v2330 = vadd.f32 %v2328, %v2329
        %v2331 = vsel %vm1823, %v2191, 0.0
        %v2332 = vadd.f32 %v2330, %v2331
        %v2333 = vsel %vm1823, %v2196, 0.0
        %v2334 = vadd.f32 %v2332, %v2333
        %v2335 = vsel %vm1823, %v2201, 0.0
        %v2336 = vadd.f32 %v2334, %v2335
        %v2337 = vsel %vm1823, %v2206, 0.0
        %v2338 = vadd.f32 %v2336, %v2337
        %v2339 = vsel %vm1823, %v2211, 0.0
        %v2340 = vadd.f32 %v2338, %v2339
        %v2341 = vsel %vm1823, %v2216, 0.0
        %v2342 = vadd.f32 %v2340, %v2341
        %v2343 = vsel %vm1823, %v2221, 0.0
        %v2344 = vadd.f32 %v2342, %v2343
        %v2345 = vsel %vm1823, %v2226, 0.0
        %v2346 = vadd.f32 %v2344, %v2345
        %v2347 = vsel %vm1823, %v2231, 0.0
        %v2348 = vadd.f32 %v2346, %v2347
        %v2349 = vsel %vm1823, %v2236, 0.0
        %v2350 = vadd.f32 %v2348, %v2349
        %v2351 = vsel %vm1823, %v2241, 0.0
        %v2352 = vadd.f32 %v2350, %v2351
        %v2353 = vsel %vm1823, %v2246, 0.0
        %v2354 = vadd.f32 %v2352, %v2353
        %v2355 = vsel %vm1823, %v2251, 0.0
        %v2356 = vadd.f32 %v2354, %v2355
        %v2357 = vsel %vm1823, %v2256, 0.0
        %v2358 = vadd.f32 %v2356, %v2357
        %v2359 = vsel %vm1823, %v2261, 0.0
        %v2360 = vadd.f32 %v2358, %v2359
        %v2361 = vsel %vm1823, %v2266, 0.0
        %v2362 = vadd.f32 %v2360, %v2361
        %v2363 = vsel %vm1823, %v2271, 0.0
        %v2364 = vadd.f32 %v2362, %v2363
        %v2365 = vsel %vm1823, %v2276, 0.0
        %v2366 = vadd.f32 %v2364, %v2365
        %v2367 = vsel %vm1823, %v2281, 0.0
        %v2368 = vadd.f32 %v2366, %v2367
        %v2369 = vsel %vm1823, %v2286, 0.0
        %v2370 = vadd.f32 %v2368, %v2369
        %v2371 = vsel %vm1823, %v2291, 0.0
        %v2372 = vadd.f32 %v2370, %v2371
        %v2373 = vsel %vm1823, %v2296, 0.0
        %v2374 = vadd.f32 %v2372, %v2373
        %v2375 = vsel %vm1823, %v2301, 0.0
        %v2376 = vadd.f32 %v2374, %v2375
        %v2377 = vsel %vm1823, %v2306, 0.0
        %v2378 = vadd.f32 %v2376, %v2377
        %v2379 = vsel %vm1823, %v2311, 0.0
        %v2380 = vadd.f32 %v2378, %v2379
        %v2381 = vsel %vm1823, %v2316, 0.0
        %v2382 = vadd.f32 %v2380, %v2381
        %v2383 = vrot.slane %v2382, 4
        %v2384 = vadd.f32 %v2382, %v2383
        %v2385 = vrot.slane %v2384, 2
        %v2386 = vadd.f32 %v2384, %v2385
        %v2387 = vrot.slane %v2386, 1
        %v2388 = vadd.f32 %v2386, %v2387
        %v2389 = vmul.f32 %v2319, 256.0
        %v2390 = vadd.f32 %v2388, %v2389
        %vm2391 = vcmask 8192
        %v2392 = vsel %vm2391, %v2390, 0.0
        %2393 = vadd.xlane.f32.xlu0 %v2392
        %v2394 = vpop.xlane.xlu0 %2393
        %2396 = vrot.lane.b32.xlu0 %v2390, 126
        %v2397 = vpop.permute.xlu0 %2396
        %v2399 = vsel %vm2391, %v2397, 0.0
        %2400 = vadd.xlane.f32.xlu0 %v2399
        %v2401 = vpop.xlane.xlu0 %2400
        %2402 = vrot.lane.b32.xlu0 %v2390, 124
        %v2403 = vpop.permute.xlu0 %2402
        %v2405 = vsel %vm2391, %v2403, 0.0
        %2406 = vadd.xlane.f32.xlu0 %v2405
        %v2407 = vpop.xlane.xlu0 %2406
        %2408 = vrot.lane.b32.xlu0 %v2390, 122
        %v2409 = vpop.permute.xlu0 %2408
        %v2411 = vsel %vm2391, %v2409, 0.0
        %2412 = vadd.xlane.f32.xlu0 %v2411
        %v2413 = vpop.xlane.xlu0 %2412
        %2414 = vrot.lane.b32.xlu0 %v2390, 120
        %v2415 = vpop.permute.xlu0 %2414
        %v2417 = vsel %vm2391, %v2415, 0.0
        %2418 = vadd.xlane.f32.xlu0 %v2417
        %v2419 = vpop.xlane.xlu0 %2418
        %2420 = vrot.lane.b32.xlu0 %v2390, 118
        %v2421 = vpop.permute.xlu0 %2420
        %v2423 = vsel %vm2391, %v2421, 0.0
        %2424 = vadd.xlane.f32.xlu0 %v2423
        %v2425 = vpop.xlane.xlu0 %2424
        %2426 = vrot.lane.b32.xlu0 %v2390, 116
        %v2427 = vpop.permute.xlu0 %2426
        %v2429 = vsel %vm2391, %v2427, 0.0
        %2430 = vadd.xlane.f32.xlu0 %v2429
        %v2431 = vpop.xlane.xlu0 %2430
        %2432 = vrot.lane.b32.xlu0 %v2390, 114
        %v2433 = vpop.permute.xlu0 %2432
        %v2435 = vsel %vm2391, %v2433, 0.0
        %2436 = vadd.xlane.f32.xlu0 %v2435
        %v2437 = vpop.xlane.xlu0 %2436
        %vm2438 = vcmask 15360
        %v2439 = vsel %vm2438, %v2394, %v2401
        %v2440 = vsel %vm305, %v2439, %v2407
        %vm2441 = vcmask 48128
        %v2442 = vsel %vm2441, %v2440, %v2413
        %v2443 = vsel %vm1757, %v2442, %v2419
        %vm2444 = vcmask 80896
        %v2445 = vsel %vm2444, %v2443, %v2425
        %v2446 = vsel %vm1790, %v2445, %v2431
        %vm2447 = vcmask 113664
        %v2448 = vsel %vm2447, %v2446, %v2437
        %v2449 = vmul.f32 %v2448, 0.001953125
        %v2450 = vsub.f32 %v2319, %v2449
        %v2452 = vlaneseq
        %v2453 = vshrl.u32 %v2452, 7
        %v2454 = vsub.s32 0, %v2453
        %v2455 = vrot.slane %v2450, %v2454
        %v2457 = vadd.f32 %v2161, %v2455
        %v2458 = vadd.f32 %v2166, %v2455
        %v2459 = vadd.f32 %v2171, %v2455
        %v2460 = vadd.f32 %v2176, %v2455
        %v2461 = vadd.f32 %v2181, %v2455
        %v2462 = vadd.f32 %v2186, %v2455
        %v2463 = vadd.f32 %v2191, %v2455
        %v2464 = vadd.f32 %v2196, %v2455
        %v2465 = vadd.f32 %v2201, %v2455
        %v2466 = vadd.f32 %v2206, %v2455
        %v2467 = vadd.f32 %v2211, %v2455
        %v2468 = vadd.f32 %v2216, %v2455
        %v2469 = vadd.f32 %v2221, %v2455
        %v2470 = vadd.f32 %v2226, %v2455
        %v2471 = vadd.f32 %v2231, %v2455
        %v2472 = vadd.f32 %v2236, %v2455
        %v2473 = vadd.f32 %v2241, %v2455
        %v2474 = vadd.f32 %v2246, %v2455
        %v2475 = vadd.f32 %v2251, %v2455
        %v2476 = vadd.f32 %v2256, %v2455
        %v2477 = vadd.f32 %v2261, %v2455
        %v2478 = vadd.f32 %v2266, %v2455
        %v2479 = vadd.f32 %v2271, %v2455
        %v2480 = vadd.f32 %v2276, %v2455
        %v2481 = vadd.f32 %v2281, %v2455
        %v2482 = vadd.f32 %v2286, %v2455
        %v2483 = vadd.f32 %v2291, %v2455
        %v2484 = vadd.f32 %v2296, %v2455
        %v2485 = vadd.f32 %v2301, %v2455
        %v2486 = vadd.f32 %v2306, %v2455
        %v2487 = vadd.f32 %v2311, %v2455
        %v2488 = vadd.f32 %v2316, %v2455
        %v2489 = vmul.f32 %v2457, %v2457
        %v2490 = vmul.f32 %v2458, %v2458
        %v2491 = vmul.f32 %v2459, %v2459
        %v2492 = vmul.f32 %v2460, %v2460
        %v2493 = vmul.f32 %v2461, %v2461
        %v2494 = vmul.f32 %v2462, %v2462
        %v2495 = vmul.f32 %v2463, %v2463
        %v2496 = vmul.f32 %v2464, %v2464
        %v2497 = vmul.f32 %v2465, %v2465
        %v2498 = vmul.f32 %v2466, %v2466
        %v2499 = vmul.f32 %v2467, %v2467
        %v2500 = vmul.f32 %v2468, %v2468
        %v2501 = vmul.f32 %v2469, %v2469
        %v2502 = vmul.f32 %v2470, %v2470
        %v2503 = vmul.f32 %v2471, %v2471
        %v2504 = vmul.f32 %v2472, %v2472
        %v2505 = vmul.f32 %v2473, %v2473
        %v2506 = vmul.f32 %v2474, %v2474
        %v2507 = vmul.f32 %v2475, %v2475
        %v2508 = vmul.f32 %v2476, %v2476
        %v2509 = vmul.f32 %v2477, %v2477
        %v2510 = vmul.f32 %v2478, %v2478
        %v2511 = vmul.f32 %v2479, %v2479
        %v2512 = vmul.f32 %v2480, %v2480
        %v2513 = vmul.f32 %v2481, %v2481
        %v2514 = vmul.f32 %v2482, %v2482
        %v2515 = vmul.f32 %v2483, %v2483
        %v2516 = vmul.f32 %v2484, %v2484
        %v2517 = vmul.f32 %v2485, %v2485
        %v2518 = vmul.f32 %v2486, %v2486
        %v2519 = vmul.f32 %v2487, %v2487
        %v2520 = vmul.f32 %v2488, %v2488
        %v2521 = vsel %vm1823, %v2489, 0.0
        %v2522 = vsel %vm1823, %v2490, 0.0
        %v2523 = vadd.f32 %v2521, %v2522
        %v2524 = vsel %vm1823, %v2491, 0.0
        %v2525 = vadd.f32 %v2523, %v2524
        %v2526 = vsel %vm1823, %v2492, 0.0
        %v2527 = vadd.f32 %v2525, %v2526
        %v2528 = vsel %vm1823, %v2493, 0.0
        %v2529 = vadd.f32 %v2527, %v2528
        %v2530 = vsel %vm1823, %v2494, 0.0
        %v2531 = vadd.f32 %v2529, %v2530
        %v2532 = vsel %vm1823, %v2495, 0.0
        %v2533 = vadd.f32 %v2531, %v2532
        %v2534 = vsel %vm1823, %v2496, 0.0
        %v2535 = vadd.f32 %v2533, %v2534
        %v2536 = vsel %vm1823, %v2497, 0.0
        %v2537 = vadd.f32 %v2535, %v2536
        %v2538 = vsel %vm1823, %v2498, 0.0
        %v2539 = vadd.f32 %v2537, %v2538
        %v2540 = vsel %vm1823, %v2499, 0.0
        %v2541 = vadd.f32 %v2539, %v2540
        %v2542 = vsel %vm1823, %v2500, 0.0
        %v2543 = vadd.f32 %v2541, %v2542
        %v2544 = vsel %vm1823, %v2501, 0.0
        %v2545 = vadd.f32 %v2543, %v2544
        %v2546 = vsel %vm1823, %v2502, 0.0
        %v2547 = vadd.f32 %v2545, %v2546
        %v2548 = vsel %vm1823, %v2503, 0.0
        %v2549 = vadd.f32 %v2547, %v2548
        %v2550 = vsel %vm1823, %v2504, 0.0
        %v2551 = vadd.f32 %v2549, %v2550
        %v2552 = vsel %vm1823, %v2505, 0.0
        %v2553 = vadd.f32 %v2551, %v2552
        %v2554 = vsel %vm1823, %v2506, 0.0
        %v2555 = vadd.f32 %v2553, %v2554
        %v2556 = vsel %vm1823, %v2507, 0.0
        %v2557 = vadd.f32 %v2555, %v2556
        %v2558 = vsel %vm1823, %v2508, 0.0
        %v2559 = vadd.f32 %v2557, %v2558
        %v2560 = vsel %vm1823, %v2509, 0.0
        %v2561 = vadd.f32 %v2559, %v2560
        %v2562 = vsel %vm1823, %v2510, 0.0
        %v2563 = vadd.f32 %v2561, %v2562
        %v2564 = vsel %vm1823, %v2511, 0.0
        %v2565 = vadd.f32 %v2563, %v2564
        %v2566 = vsel %vm1823, %v2512, 0.0
        %v2567 = vadd.f32 %v2565, %v2566
        %v2568 = vsel %vm1823, %v2513, 0.0
        %v2569 = vadd.f32 %v2567, %v2568
        %v2570 = vsel %vm1823, %v2514, 0.0
        %v2571 = vadd.f32 %v2569, %v2570
        %v2572 = vsel %vm1823, %v2515, 0.0
        %v2573 = vadd.f32 %v2571, %v2572
        %v2574 = vsel %vm1823, %v2516, 0.0
        %v2575 = vadd.f32 %v2573, %v2574
        %v2576 = vsel %vm1823, %v2517, 0.0
        %v2577 = vadd.f32 %v2575, %v2576
        %v2578 = vsel %vm1823, %v2518, 0.0
        %v2579 = vadd.f32 %v2577, %v2578
        %v2580 = vsel %vm1823, %v2519, 0.0
        %v2581 = vadd.f32 %v2579, %v2580
        %v2582 = vsel %vm1823, %v2520, 0.0
        %v2583 = vadd.f32 %v2581, %v2582
        %v2584 = vrot.slane %v2583, 4
        %v2585 = vadd.f32 %v2583, %v2584
        %v2586 = vrot.slane %v2585, 2
        %v2587 = vadd.f32 %v2585, %v2586
        %v2588 = vrot.slane %v2587, 1
        %v2589 = vadd.f32 %v2587, %v2588
        %v2590 = vsel %vm2438, %v2589, 0.0
        %2591 = vadd.xlane.f32.xlu0 %v2590
        %v2592 = vpop.xlane.xlu0 %2591
        %2594 = vrot.lane.b32.xlu0 %v2589, 126
        %v2595 = vpop.permute.xlu0 %2594
        %v2597 = vsel %vm2438, %v2595, 0.0
        %2598 = vadd.xlane.f32.xlu0 %v2597
        %v2599 = vpop.xlane.xlu0 %2598
        %2600 = vrot.lane.b32.xlu0 %v2589, 124
        %v2601 = vpop.permute.xlu0 %2600
        %v2603 = vsel %vm2438, %v2601, 0.0
        %2604 = vadd.xlane.f32.xlu0 %v2603
        %v2605 = vpop.xlane.xlu0 %2604
        %2606 = vrot.lane.b32.xlu0 %v2589, 122
        %v2607 = vpop.permute.xlu0 %2606
        %v2609 = vsel %vm2438, %v2607, 0.0
        %2610 = vadd.xlane.f32.xlu0 %v2609
        %v2611 = vpop.xlane.xlu0 %2610
        %2612 = vrot.lane.b32.xlu0 %v2589, 120
        %v2613 = vpop.permute.xlu0 %2612
        %v2615 = vsel %vm2438, %v2613, 0.0
        %2616 = vadd.xlane.f32.xlu0 %v2615
        %v2617 = vpop.xlane.xlu0 %2616
        %2618 = vrot.lane.b32.xlu0 %v2589, 118
        %v2619 = vpop.permute.xlu0 %2618
        %v2621 = vsel %vm2438, %v2619, 0.0
        %2622 = vadd.xlane.f32.xlu0 %v2621
        %v2623 = vpop.xlane.xlu0 %2622
        %2624 = vrot.lane.b32.xlu0 %v2589, 116
        %v2625 = vpop.permute.xlu0 %2624
        %v2627 = vsel %vm2438, %v2625, 0.0
        %2628 = vadd.xlane.f32.xlu0 %v2627
        %v2629 = vpop.xlane.xlu0 %2628
        %2630 = vrot.lane.b32.xlu0 %v2589, 114
        %v2631 = vpop.permute.xlu0 %2630
        %v2633 = vsel %vm2438, %v2631, 0.0
        %2634 = vadd.xlane.f32.xlu0 %v2633
        %v2635 = vpop.xlane.xlu0 %2634
        %v2636 = vsel %vm2438, %v2592, %v2599
        %v2637 = vsel %vm305, %v2636, %v2605
        %v2638 = vsel %vm2441, %v2637, %v2611
        %v2639 = vsel %vm1757, %v2638, %v2617
        %v2640 = vsel %vm2444, %v2639, %v2623
        %v2641 = vsel %vm1790, %v2640, %v2629
        %v2642 = vsel %vm2447, %v2641, %v2635
        %v2643 = vmul.f32 %v2642, 0.001953125
        %v2644 = vld [vmem:[%s3] sm:$0x1]
        %v2645 = vadd.f32 %v2643, 1e-05
        %v2646 = vrsqrt.pop %v2645
        %v2647 = vmul.f32 %v2644, %v2646
        %v2648 = vld [vmem:[%s4] sm:$0x1]
        %v2649 = vld [vmem:[%s301] sm:$0x1]
        %v2650 = vmul.f32 %v2647, %v2649
        %v2651 = vmul.f32 %v2648, %v2649
        %v2652 = vld [vmem:[%s304] sm:$0x1]
        %v2653 = vadd.f32 %v2651, %v2652
        %v2655 = vlaneseq
        %v2656 = vshrl.u32 %v2655, 7
        %v2657 = vsub.s32 0, %v2656
        %v2658 = vrot.slane %v2650, %v2657
        %v2660 = vmul.f32 %v2457, %v2658
        %v2661 = vmul.f32 %v2458, %v2658
        %v2662 = vmul.f32 %v2459, %v2658
        %v2663 = vmul.f32 %v2460, %v2658
        %v2664 = vmul.f32 %v2461, %v2658
        %v2665 = vmul.f32 %v2462, %v2658
        %v2666 = vmul.f32 %v2463, %v2658
        %v2667 = vmul.f32 %v2464, %v2658
        %v2668 = vmul.f32 %v2465, %v2658
        %v2669 = vmul.f32 %v2466, %v2658
        %v2670 = vmul.f32 %v2467, %v2658
        %v2671 = vmul.f32 %v2468, %v2658
        %v2672 = vmul.f32 %v2469, %v2658
        %v2673 = vmul.f32 %v2470, %v2658
        %v2674 = vmul.f32 %v2471, %v2658
        %v2675 = vmul.f32 %v2472, %v2658
        %v2676 = vmul.f32 %v2473, %v2658
        %v2677 = vmul.f32 %v2474, %v2658
        %v2678 = vmul.f32 %v2475, %v2658
        %v2679 = vmul.f32 %v2476, %v2658
        %v2680 = vmul.f32 %v2477, %v2658
        %v2681 = vmul.f32 %v2478, %v2658
        %v2682 = vmul.f32 %v2479, %v2658
        %v2683 = vmul.f32 %v2480, %v2658
        %v2684 = vmul.f32 %v2481, %v2658
        %v2685 = vmul.f32 %v2482, %v2658
        %v2686 = vmul.f32 %v2483, %v2658
        %v2687 = vmul.f32 %v2484, %v2658
        %v2688 = vmul.f32 %v2485, %v2658
        %v2689 = vmul.f32 %v2486, %v2658
        %v2690 = vmul.f32 %v2487, %v2658
        %v2691 = vmul.f32 %v2488, %v2658
        %v2693 = vlaneseq
        %v2694 = vshrl.u32 %v2693, 7
        %v2695 = vsub.s32 0, %v2694
        %v2696 = vrot.slane %v2653, %v2695
        %v2698 = vadd.f32 %v2660, %v2696
        %v2699 = vadd.f32 %v2661, %v2696
        %v2700 = vadd.f32 %v2662, %v2696
        %v2701 = vadd.f32 %v2663, %v2696
        %v2702 = vadd.f32 %v2664, %v2696
        %v2703 = vadd.f32 %v2665, %v2696
        %v2704 = vadd.f32 %v2666, %v2696
        %v2705 = vadd.f32 %v2667, %v2696
        %v2706 = vadd.f32 %v2668, %v2696
        %v2707 = vadd.f32 %v2669, %v2696
        %v2708 = vadd.f32 %v2670, %v2696
        %v2709 = vadd.f32 %v2671, %v2696
        %v2710 = vadd.f32 %v2672, %v2696
        %v2711 = vadd.f32 %v2673, %v2696
        %v2712 = vadd.f32 %v2674, %v2696
        %v2713 = vadd.f32 %v2675, %v2696
        %v2714 = vadd.f32 %v2676, %v2696
        %v2715 = vadd.f32 %v2677, %v2696
        %v2716 = vadd.f32 %v2678, %v2696
        %v2717 = vadd.f32 %v2679, %v2696
        %v2718 = vadd.f32 %v2680, %v2696
        %v2719 = vadd.f32 %v2681, %v2696
        %v2720 = vadd.f32 %v2682, %v2696
        %v2721 = vadd.f32 %v2683, %v2696
        %v2722 = vadd.f32 %v2684, %v2696
        %v2723 = vadd.f32 %v2685, %v2696
        %v2724 = vadd.f32 %v2686, %v2696
        %v2725 = vadd.f32 %v2687, %v2696
        %v2726 = vadd.f32 %v2688, %v2696
        %v2727 = vadd.f32 %v2689, %v2696
        %v2728 = vadd.f32 %v2690, %v2696
        %v2729 = vadd.f32 %v2691, %v2696
        %v2730 = vxor.u32 %v2698, 2147483648
        %v2731 = vxor.u32 %v2699, 2147483648
        %v2732 = vxor.u32 %v2700, 2147483648
        %v2733 = vxor.u32 %v2701, 2147483648
        %v2734 = vxor.u32 %v2702, 2147483648
        %v2735 = vxor.u32 %v2703, 2147483648
        %v2736 = vxor.u32 %v2704, 2147483648
        %v2737 = vxor.u32 %v2705, 2147483648
        %v2738 = vxor.u32 %v2706, 2147483648
        %v2739 = vxor.u32 %v2707, 2147483648
        %v2740 = vxor.u32 %v2708, 2147483648
        %v2741 = vxor.u32 %v2709, 2147483648
        %v2742 = vxor.u32 %v2710, 2147483648
        %v2743 = vxor.u32 %v2711, 2147483648
        %v2744 = vxor.u32 %v2712, 2147483648
        %v2745 = vxor.u32 %v2713, 2147483648
        %v2746 = vxor.u32 %v2714, 2147483648
        %v2747 = vxor.u32 %v2715, 2147483648
        %v2748 = vxor.u32 %v2716, 2147483648
        %v2749 = vxor.u32 %v2717, 2147483648
        %v2750 = vxor.u32 %v2718, 2147483648
        %v2751 = vxor.u32 %v2719, 2147483648
        %v2752 = vxor.u32 %v2720, 2147483648
        %v2753 = vxor.u32 %v2721, 2147483648
        %v2754 = vxor.u32 %v2722, 2147483648
        %v2755 = vxor.u32 %v2723, 2147483648
        %v2756 = vxor.u32 %v2724, 2147483648
        %v2757 = vxor.u32 %v2725, 2147483648
        %v2758 = vxor.u32 %v2726, 2147483648
        %v2759 = vxor.u32 %v2727, 2147483648
        %v2760 = vxor.u32 %v2728, 2147483648
        %v2761 = vxor.u32 %v2729, 2147483648
        %v2762 = vmul.f32 %v2730, 1.442695
        %v2763 = vpow.pop %v2762
        %v2764 = vmul.f32 %v2731, 1.442695
        %v2765 = vpow.pop %v2764
        %v2766 = vmul.f32 %v2732, 1.442695
        %v2767 = vpow.pop %v2766
        %v2768 = vmul.f32 %v2733, 1.442695
        %v2769 = vpow.pop %v2768
        %v2770 = vmul.f32 %v2734, 1.442695
        %v2771 = vpow.pop %v2770
        %v2772 = vmul.f32 %v2735, 1.442695
        %v2773 = vpow.pop %v2772
        %v2774 = vmul.f32 %v2736, 1.442695
        %v2775 = vpow.pop %v2774
        %v2776 = vmul.f32 %v2737, 1.442695
        %v2777 = vpow.pop %v2776
        %v2778 = vmul.f32 %v2738, 1.442695
        %v2779 = vpow.pop %v2778
        %v2780 = vmul.f32 %v2739, 1.442695
        %v2781 = vpow.pop %v2780
        %v2782 = vmul.f32 %v2740, 1.442695
        %v2783 = vpow.pop %v2782
        %v2784 = vmul.f32 %v2741, 1.442695
        %v2785 = vpow.pop %v2784
        %v2786 = vmul.f32 %v2742, 1.442695
        %v2787 = vpow.pop %v2786
        %v2788 = vmul.f32 %v2743, 1.442695
        %v2789 = vpow.pop %v2788
        %v2790 = vmul.f32 %v2744, 1.442695
        %v2791 = vpow.pop %v2790
        %v2792 = vmul.f32 %v2745, 1.442695
        %v2793 = vpow.pop %v2792
        %v2794 = vmul.f32 %v2746, 1.442695
        %v2795 = vpow.pop %v2794
        %v2796 = vmul.f32 %v2747, 1.442695
        %v2797 = vpow.pop %v2796
        %v2798 = vmul.f32 %v2748, 1.442695
        %v2799 = vpow.pop %v2798
        %v2800 = vmul.f32 %v2749, 1.442695
        %v2801 = vpow.pop %v2800
        %v2802 = vmul.f32 %v2750, 1.442695
        %v2803 = vpow.pop %v2802
        %v2804 = vmul.f32 %v2751, 1.442695
        %v2805 = vpow.pop %v2804
        %v2806 = vmul.f32 %v2752, 1.442695
        %v2807 = vpow.pop %v2806
        %v2808 = vmul.f32 %v2753, 1.442695
        %v2809 = vpow.pop %v2808
        %v2810 = vmul.f32 %v2754, 1.442695
        %v2811 = vpow.pop %v2810
        %v2812 = vmul.f32 %v2755, 1.442695
        %v2813 = vpow.pop %v2812
        %v2814 = vmul.f32 %v2756, 1.442695
        %v2815 = vpow.pop %v2814
        %v2816 = vmul.f32 %v2757, 1.442695
        %v2817 = vpow.pop %v2816
        %v2818 = vmul.f32 %v2758, 1.442695
        %v2819 = vpow.pop %v2818
        %v2820 = vmul.f32 %v2759, 1.442695
        %v2821 = vpow.pop %v2820
        %v2822 = vmul.f32 %v2760, 1.442695
        %v2823 = vpow.pop %v2822
        %v2824 = vmul.f32 %v2761, 1.442695
        %v2825 = vpow.pop %v2824
        %v2826 = vadd.f32 %v2763, 1.0
        %v2827 = vadd.f32 %v2765, 1.0
        %v2828 = vadd.f32 %v2767, 1.0
        %v2829 = vadd.f32 %v2769, 1.0
        %v2830 = vadd.f32 %v2771, 1.0
        %v2831 = vadd.f32 %v2773, 1.0
        %v2832 = vadd.f32 %v2775, 1.0
        %v2833 = vadd.f32 %v2777, 1.0
        %v2834 = vadd.f32 %v2779, 1.0
        %v2835 = vadd.f32 %v2781, 1.0
        %v2836 = vadd.f32 %v2783, 1.0
        %v2837 = vadd.f32 %v2785, 1.0
        %v2838 = vadd.f32 %v2787, 1.0
        %v2839 = vadd.f32 %v2789, 1.0
        %v2840 = vadd.f32 %v2791, 1.0
        %v2841 = vadd.f32 %v2793, 1.0
        %v2842 = vadd.f32 %v2795, 1.0
        %v2843 = vadd.f32 %v2797, 1.0
        %v2844 = vadd.f32 %v2799, 1.0
        %v2845 = vadd.f32 %v2801, 1.0
        %v2846 = vadd.f32 %v2803, 1.0
        %v2847 = vadd.f32 %v2805, 1.0
        %v2848 = vadd.f32 %v2807, 1.0
        %v2849 = vadd.f32 %v2809, 1.0
        %v2850 = vadd.f32 %v2811, 1.0
        %v2851 = vadd.f32 %v2813, 1.0
        %v2852 = vadd.f32 %v2815, 1.0
        %v2853 = vadd.f32 %v2817, 1.0
        %v2854 = vadd.f32 %v2819, 1.0
        %v2855 = vadd.f32 %v2821, 1.0
        %v2856 = vadd.f32 %v2823, 1.0
        %v2857 = vadd.f32 %v2825, 1.0
        %v2858 = vrcp.pop %v2826
        %v2859 = vmul.f32 1.0, %v2858
        %v2860 = vrcp.pop %v2827
        %v2861 = vmul.f32 1.0, %v2860
        %v2862 = vrcp.pop %v2828
        %v2863 = vmul.f32 1.0, %v2862
        %v2864 = vrcp.pop %v2829
        %v2865 = vmul.f32 1.0, %v2864
        %v2866 = vrcp.pop %v2830
        %v2867 = vmul.f32 1.0, %v2866
        %v2868 = vrcp.pop %v2831
        %v2869 = vmul.f32 1.0, %v2868
        %v2870 = vrcp.pop %v2832
        %v2871 = vmul.f32 1.0, %v2870
        %v2872 = vrcp.pop %v2833
        %v2873 = vmul.f32 1.0, %v2872
        %v2874 = vrcp.pop %v2834
        %v2875 = vmul.f32 1.0, %v2874
        %v2876 = vrcp.pop %v2835
        %v2877 = vmul.f32 1.0, %v2876
        %v2878 = vrcp.pop %v2836
        %v2879 = vmul.f32 1.0, %v2878
        %v2880 = vrcp.pop %v2837
        %v2881 = vmul.f32 1.0, %v2880
        %v2882 = vrcp.pop %v2838
        %v2883 = vmul.f32 1.0, %v2882
        %v2884 = vrcp.pop %v2839
        %v2885 = vmul.f32 1.0, %v2884
        %v2886 = vrcp.pop %v2840
        %v2887 = vmul.f32 1.0, %v2886
        %v2888 = vrcp.pop %v2841
        %v2889 = vmul.f32 1.0, %v2888
        %v2890 = vrcp.pop %v2842
        %v2891 = vmul.f32 1.0, %v2890
        %v2892 = vrcp.pop %v2843
        %v2893 = vmul.f32 1.0, %v2892
        %v2894 = vrcp.pop %v2844
        %v2895 = vmul.f32 1.0, %v2894
        %v2896 = vrcp.pop %v2845
        %v2897 = vmul.f32 1.0, %v2896
        %v2898 = vrcp.pop %v2846
        %v2899 = vmul.f32 1.0, %v2898
        %v2900 = vrcp.pop %v2847
        %v2901 = vmul.f32 1.0, %v2900
        %v2902 = vrcp.pop %v2848
        %v2903 = vmul.f32 1.0, %v2902
        %v2904 = vrcp.pop %v2849
        %v2905 = vmul.f32 1.0, %v2904
        %v2906 = vrcp.pop %v2850
        %v2907 = vmul.f32 1.0, %v2906
        %v2908 = vrcp.pop %v2851
        %v2909 = vmul.f32 1.0, %v2908
        %v2910 = vrcp.pop %v2852
        %v2911 = vmul.f32 1.0, %v2910
        %v2912 = vrcp.pop %v2853
        %v2913 = vmul.f32 1.0, %v2912
        %v2914 = vrcp.pop %v2854
        %v2915 = vmul.f32 1.0, %v2914
        %v2916 = vrcp.pop %v2855
        %v2917 = vmul.f32 1.0, %v2916
        %v2918 = vrcp.pop %v2856
        %v2919 = vmul.f32 1.0, %v2918
        %v2920 = vrcp.pop %v2857
        %v2921 = vmul.f32 1.0, %v2920
        %v2922 = vmul.f32 %v2698, %v2859
        %v2923 = vmul.f32 %v2699, %v2861
        %v2924 = vmul.f32 %v2700, %v2863
        %v2925 = vmul.f32 %v2701, %v2865
        %v2926 = vmul.f32 %v2702, %v2867
        %v2927 = vmul.f32 %v2703, %v2869
        %v2928 = vmul.f32 %v2704, %v2871
        %v2929 = vmul.f32 %v2705, %v2873
        %v2930 = vmul.f32 %v2706, %v2875
        %v2931 = vmul.f32 %v2707, %v2877
        %v2932 = vmul.f32 %v2708, %v2879
        %v2933 = vmul.f32 %v2709, %v2881
        %v2934 = vmul.f32 %v2710, %v2883
        %v2935 = vmul.f32 %v2711, %v2885
        %v2936 = vmul.f32 %v2712, %v2887
        %v2937 = vmul.f32 %v2713, %v2889
        %v2938 = vmul.f32 %v2714, %v2891
        %v2939 = vmul.f32 %v2715, %v2893
        %v2940 = vmul.f32 %v2716, %v2895
        %v2941 = vmul.f32 %v2717, %v2897
        %v2942 = vmul.f32 %v2718, %v2899
        %v2943 = vmul.f32 %v2719, %v2901
        %v2944 = vmul.f32 %v2720, %v2903
        %v2945 = vmul.f32 %v2721, %v2905
        %v2946 = vmul.f32 %v2722, %v2907
        %v2947 = vmul.f32 %v2723, %v2909
        %v2948 = vmul.f32 %v2724, %v2911
        %v2949 = vmul.f32 %v2725, %v2913
        %v2950 = vmul.f32 %v2726, %v2915
        %v2951 = vmul.f32 %v2727, %v2917
        %v2952 = vmul.f32 %v2728, %v2919
        %v2953 = vmul.f32 %v2729, %v2921
        %2954 = vst.msk [vmem:[%s293] sm:$0xff] %vm1823, %v2922
        %2955 = vst.msk [vmem:[%s293 + $0x8] sm:$0xff] %vm1823, %v2923
        %2956 = vst.msk [vmem:[%s293 + $0x10] sm:$0xff] %vm1823, %v2924
        %2957 = vst.msk [vmem:[%s293 + $0x18] sm:$0xff] %vm1823, %v2925
        %2958 = vst.msk [vmem:[%s293 + $0x20] sm:$0xff] %vm1823, %v2926
        %2959 = vst.msk [vmem:[%s293 + $0x28] sm:$0xff] %vm1823, %v2927
        %2960 = vst.msk [vmem:[%s293 + $0x30] sm:$0xff] %vm1823, %v2928
        %2961 = vst.msk [vmem:[%s293 + $0x38] sm:$0xff] %vm1823, %v2929
        %2962 = vst.msk [vmem:[%s293 + $0x40] sm:$0xff] %vm1823, %v2930
        %2963 = vst.msk [vmem:[%s293 + $0x48] sm:$0xff] %vm1823, %v2931
        %2964 = vst.msk [vmem:[%s293 + $0x50] sm:$0xff] %vm1823, %v2932
        %2965 = vst.msk [vmem:[%s293 + $0x58] sm:$0xff] %vm1823, %v2933
        %2966 = vst.msk [vmem:[%s293 + $0x60] sm:$0xff] %vm1823, %v2934
        %2967 = vst.msk [vmem:[%s293 + $0x68] sm:$0xff] %vm1823, %v2935
        %2968 = vst.msk [vmem:[%s293 + $0x70] sm:$0xff] %vm1823, %v2936
        %2969 = vst.msk [vmem:[%s293 + $0x78] sm:$0xff] %vm1823, %v2937
        %2970 = vst.msk [vmem:[%s293 + $0x80] sm:$0xff] %vm1823, %v2938
        %2971 = vst.msk [vmem:[%s293 + $0x88] sm:$0xff] %vm1823, %v2939
        %2972 = vst.msk [vmem:[%s293 + $0x90] sm:$0xff] %vm1823, %v2940
        %2973 = vst.msk [vmem:[%s293 + $0x98] sm:$0xff] %vm1823, %v2941
        %2974 = vst.msk [vmem:[%s293 + $0xa0] sm:$0xff] %vm1823, %v2942
        %2975 = vst.msk [vmem:[%s293 + $0xa8] sm:$0xff] %vm1823, %v2943
        %2976 = vst.msk [vmem:[%s293 + $0xb0] sm:$0xff] %vm1823, %v2944
        %2977 = vst.msk [vmem:[%s293 + $0xb8] sm:$0xff] %vm1823, %v2945
        %2978 = vst.msk [vmem:[%s293 + $0xc0] sm:$0xff] %vm1823, %v2946
        %2979 = vst.msk [vmem:[%s293 + $0xc8] sm:$0xff] %vm1823, %v2947
        %2980 = vst.msk [vmem:[%s293 + $0xd0] sm:$0xff] %vm1823, %v2948
        %2981 = vst.msk [vmem:[%s293 + $0xd8] sm:$0xff] %vm1823, %v2949
        %2982 = vst.msk [vmem:[%s293 + $0xe0] sm:$0xff] %vm1823, %v2950
        %2983 = vst.msk [vmem:[%s293 + $0xe8] sm:$0xff] %vm1823, %v2951
        %2984 = vst.msk [vmem:[%s293 + $0xf0] sm:$0xff] %vm1823, %v2952
        %2985 = vst.msk [vmem:[%s293 + $0xf8] sm:$0xff] %vm1823, %v2953
        %s2986 = sand.u32 %s191, 1
        %s2987 = scalar_lea.sflag [#allocation4], %s2986
        %s2988 = sand.u32 %s191, 1
        %s2989 = smul.addr %s2988, 256
        %s2990 = scalar_lea.vmem [#allocation3], %s2989
        // Predicated region
        $region49: #{tpu_custom_call.1} parent=47 // pred_check
          %p2991 = pneg %p201
        $region50: #{tpu_custom_call.1} parent=47 // pred_check_branch
          %2993 = sbr.rel (%p2991) target = $region52
        $region51: #{tpu_custom_call.1} parent=47 // pred_region
          %s2995 = ssub.s32 4096, 4096
          %2996 = vsyncadd %s2987, %s2995
          %s2997 = smul.addr %s21, 32
          %s2998 = smul.addr %s2997, 128
          %s2999 = scalar_lea.hbm %s7, %s2998
          %s3000 = sshll.u32 %s2990, 4
          %s3001 = int_to_ptr.vmem [resolvable:$true] %s3000
          %3006 = dma.vmem_to_hbm [thread:$0]  %s3001, 4096, %s2999, %s2987, 128, 128, 8
        $region52: #{tpu_custom_call.1} parent=47 // pred_fallthru
          _
      $region48: #{tpu_custom_call.1} parent=5 // pred_fallthru
        _
      %p3007 = scmp.le.s32.totalorder 2, %s16
      // Predicated region
      $region53: #{tpu_custom_call.1} parent=5 // pred_check
        %p3008 = pneg %p3007
      $region54: #{tpu_custom_call.1} parent=5 // pred_check_branch
        %3010 = sbr.rel (%p3008) target = $region56
      $region55: #{tpu_custom_call.1} parent=5 // pred_region
        %s3011 = ssub.s32 %s16, 2
        // Predicated region
        $region57: #{tpu_custom_call.1} parent=55 // pred_check
          %p3012 = pneg %p207
        $region58: #{tpu_custom_call.1} parent=55 // pred_check_branch
          %3014 = sbr.rel (%p3012) target = $region60
        $region59: #{tpu_custom_call.1} parent=55 // pred_region
          %s3015 = sand.u32 %s192, 1
          %s3016 = scalar_lea.sflag [#allocation4], %s3015
          %s3017 = sand.u32 %s192, 1
          %s3018 = smul.addr %s3017, 256
          %s3019 = scalar_lea.vmem [#allocation3], %s3018
          %3020 = dma.done %s3016, 4096
        $region60: #{tpu_custom_call.1} parent=55 // pred_fallthru
          _
      $region56: #{tpu_custom_call.1} parent=5 // pred_fallthru
        _
    $region6: #{tpu_custom_call.1} parent=1 // loop_footer
      %s20 = sadd.s32 1, %s16
    $region7: #{tpu_custom_call.1} parent=1 // loop_footer_branch
      %15 = sbr.rel target = $region3
    $region8: #{tpu_custom_call.1} parent=1 // loop_exit
      _
    %3021 = vsyncpa [#allocation4], 1
    %s3022 = scalar_lea.sflag [#allocation4], 1
    %3023 = vsyncpa %s3022, 1

</llo_original>
